<compile_context>
chip_gen: v7x
topology: tpu7x:2x2x1
jax: 0.10.0
libtpu: 0.0.40
codegen_flags: <defaults>
</compile_context>

<pallas_src>
import jax
import jax.numpy as jnp
from jax.experimental import pallas as pl
from jax.experimental.pallas import tpu as pltpu

# --- small, deterministic synthetic sizes (module defaults: num_emotions=28, hidden=768) ---
NUM_EMOTIONS = 28     # E
HIDDEN = 64           # H (shrunk from 768 for a small self-contained example)
ATT_HIDDEN = 256      # A: per-emotion attention MLP hidden (as in the module)
EAW_HIDDEN = 256      # W: emotion_attention_weights MLP hidden (as in the module)
BATCH = 2
SEQ = 8
VOCAB = 50
N_TYPES = 2
OUT_LANES = 128       # lane-dense output slab: [E emotions | E attention scores | zero pad]


def _emotion_kernel(
    sent_ref, pi_ref, avg_pol_ref, avg_int_ref,
    we1_ref, be1_ref, we2_ref, be2_ref,
    wa1h_ref, wa1pi_ref, ba1_ref, wa2_ref, ba2_ref,
    wfc_ref, bfc_ref,
    wv_ref, bv_ref, wo_ref, bo_ref,
    out_ref,
):
    f32 = jnp.float32
    E, A = NUM_EMOTIONS, ATT_HIDDEN

    sent = sent_ref[...]                          # (B, H) f32  sentence_output
    sent_bf = sent.astype(jnp.bfloat16)           # MXU operand (weights stored as bf16)
    pol = pi_ref[:, 0:1]                          # (B, 1)
    intn = pi_ref[:, 1:2]                         # (B, 1)
    B = sent.shape[0]

    # --- emotion_attention_weights: Linear(2,256) -> ReLU -> Linear(256,E) -> Softmax(dim=1) ---
    # K=2 contraction as two broadcast FMAs on the VPU; a 128/256-deep MXU would waste >98% depth.
    h = jnp.maximum(pol * we1_ref[0:1, :] + intn * we1_ref[1:2, :] + be1_ref[...], 0.0)   # (B, W)
    logits = jnp.dot(h, we2_ref[...], preferred_element_type=f32) + be2_ref[...]          # (B, E)
    logits = logits - jnp.max(logits, axis=1, keepdims=True)
    exp_l = jnp.exp(logits)
    eaw = exp_l / jnp.sum(exp_l, axis=1, keepdims=True)                                   # (B, E)

    # --- E per-emotion attention heads Linear(H+2,256) -> Tanh -> Linear(256,1), fused ---
    # First layer: one K=H bf16 MXU matmul on sentence_output plus a 2-row VPU correction for the
    # [polarity, intensity] columns (replaces the K=H+2 matmul on a host-side concat and avoids a
    # duplicate DMA of sentence_output).
    pre = jnp.dot(sent_bf, wa1h_ref[...], preferred_element_type=f32)                     # (B, E*A)
    pre = pre + pol * wa1pi_ref[0:1, :] + intn * wa1pi_ref[1:2, :] + ba1_ref[...]
    ah = jnp.tanh(pre)                                                                    # (B, E*A)

    # Second layer: per-head VPU multiply + lane reduction against wa2 (E, A) instead of a dense
    # (E*A, E) block-diagonal matmul that is 96% structural zeros (~0.8 MB of HBM DMA saved).
    head_lane = jax.lax.broadcasted_iota(jnp.int32, (1, E), 1)                            # (1, E)
    acc = jnp.zeros((B, E), f32)
    for e in range(E):                            # static unroll; slices are lane-tile aligned
        blk = ah[:, e * A:(e + 1) * A]                                                    # (B, A)
        le = jnp.sum(blk * wa2_ref[e:e + 1, :], axis=1, keepdims=True)                    # (B, 1)
        acc = acc + jnp.where(head_lane == e, le, 0.0)                                    # col e
    att_logits = acc + ba2_ref[...]                                                       # (B, E)

    # Each head ends in Softmax(dim=1) over a (B, 1) tensor: exactly 1.0 for finite logits, NaN
    # for +/-inf or NaN (matches torch.softmax on a singleton dim) -- a select, not exp/div.
    att_scores = jnp.where(jnp.abs(att_logits) < jnp.inf, 1.0, jnp.nan).astype(f32)       # (B, E)

    # weighted_outputs[i] = eaw[:, i:i+1] * score_i * sentence_output ;
    # sigmoid(fc_i(weighted_i)) == sigmoid(scale_i * (sent @ w_i) + b_i) with the per-sample
    # scalar factored out of the dot (identical up to fp reordering).
    scale = eaw * att_scores
    s_proj = jnp.dot(sent_bf, wfc_ref[...], preferred_element_type=f32)                   # (B, E)
    emotions = jax.nn.sigmoid(scale * s_proj + bfc_ref[...])                              # (B, E)

    # emotion_combine output is never used by the reference forward -> dropped (no DMA, no matmul).

    # inter_emotion_attention: MultiheadAttention(num_heads=1) over a length-1 sequence; softmax
    # of a single attention score is exactly 1, so output == out_proj(v_proj(x)).
    v = jnp.dot(emotions, wv_ref[...], preferred_element_type=f32) + bv_ref[...]          # (B, E)
    attn_out = jnp.dot(v, wo_ref[...], preferred_element_type=f32) + bo_ref[...]          # (B, E)
    out = attn_out + avg_pol_ref[...] + avg_int_ref[...]                                  # (B, E)

    # Single lane-dense writeback: [emotions | attention_scores | zero pad] -> (B, 128).
    pad = jnp.zeros((B, OUT_LANES - 2 * E), f32)
    out_ref[...] = jnp.concatenate([out, att_scores, pad], axis=-1)


def init_params(key):
    E, H, A, W = NUM_EMOTIONS, HIDDEN, ATT_HIDDEN, EAW_HIDDEN
    ks = jax.random.split(key, 16)

    def n(k, shape, scale=0.05):
        return (scale * jax.random.normal(k, shape)).astype(jnp.float32)

    p = {}
    # synthetic stand-in for the XLNet embedding tables
    p["tok_emb"] = n(ks[0], (VOCAB, H))
    p["type_emb"] = n(ks[1], (N_TYPES, H))
    # emotion_attention_weights: Linear(2,256) -> ReLU -> Linear(256,E) -> Softmax
    p["we1"] = n(ks[2], (2, W));      p["be1"] = n(ks[3], (1, W))
    p["we2"] = n(ks[4], (W, E));      p["be2"] = n(ks[5], (1, E))
    # per-emotion attention heads Linear(H+2,256)->Tanh->Linear(256,1), E heads fused.
    wa1 = n(ks[6], (H + 2, E * A))
    p["wa1h"] = wa1[:H].astype(jnp.bfloat16)   # (H, E*A) bf16 MXU operand: halves the dominant DMA
    p["wa1pi"] = wa1[H:]                       # (2, E*A) f32, applied as a VPU correction
    p["ba1"] = n(ks[7], (1, E * A))
    p["wa2"] = n(ks[8], (E, A))                # second-layer weights per head (no block-diag zeros)
    p["ba2"] = n(ks[9], (1, E))
    # 28 per-emotion fcs Linear(H, 1), stacked column-wise (bf16 MXU operand)
    p["wfc"] = n(ks[10], (H, E)).astype(jnp.bfloat16)
    p["bfc"] = n(ks[11], (1, E))
    # emotion_combine weights dropped: its output is dead in the reference forward.
    # inter_emotion_attention (seq_len == 1): only V projection and out_proj affect the output
    p["wv"] = n(ks[12], (E, E));      p["bv"] = n(ks[13], (1, E))
    p["wo"] = n(ks[14], (E, E));      p["bo"] = n(ks[15], (1, E))
    return p


def emotion_classifier_forward(params, input_ids, attention_mask, token_type_ids,
                               polarity, intensity, avg_emotion_polarity, avg_emotion_intensity):
    B, E = input_ids.shape[0], NUM_EMOTIONS

    # TODO(synk): the pretrained XLNet transformer stack has no clean in-script equivalent; it is
    # replaced by a deterministic token+segment embedding, masked, taking the position-0 hidden
    # state as `sentence_output` (same shape/role as outputs[0][:, 0]).
    emb = params["tok_emb"][input_ids] + params["type_emb"][token_type_ids]   # (B, S, H)
    emb = emb * attention_mask[..., None].astype(emb.dtype)
    sentence_output = emb[:, 0]                                               # (B, H)

    pol = polarity[:, None].astype(jnp.float32)                               # unsqueeze(1) -> (B,1)
    inten = intensity[:, None].astype(jnp.float32)                            # (B, 1)
    pi = jnp.concatenate([pol, inten], axis=1)                                # (B, 2)
    # NOTE: no host-side `combined` concat -- the kernel applies the [pol, int] rows of wa1 as a
    # 2-term VPU correction, so sentence_output is DMA'd exactly once and the matmul stays K=H.

    operands = (
        sentence_output, pi,
        avg_emotion_polarity.astype(jnp.float32), avg_emotion_intensity.astype(jnp.float32),
        params["we1"], params["be1"], params["we2"], params["be2"],
        params["wa1h"], params["wa1pi"], params["ba1"], params["wa2"], params["ba2"],
        params["wfc"], params["bfc"],
        params["wv"], params["bv"], params["wo"], params["bo"],
    )

    # NOTE(perf): at production batch sizes, accumulate B >= 128/256 per call (or add a leading
    # "parallel" batch grid axis) to amortize the weight DMA; at the real H=768 keep wa1h in bf16
    # and/or tile it over the head axis with an explicit vmem_limit_bytes (set below).
    slab = pl.pallas_call(
        _emotion_kernel,
        out_shape=jax.ShapeDtypeStruct((B, OUT_LANES), jnp.float32),
        in_specs=[pl.BlockSpec(memory_space=pltpu.MemorySpace.VMEM) for _ in operands],
        out_specs=pl.BlockSpec(memory_space=pltpu.MemorySpace.VMEM),
        compiler_params=pltpu.CompilerParams(vmem_limit_bytes=32 * 1024 * 1024),
    )(*operands)

    emotions = slab[:, :E]
    scores = slab[:, E:2 * E]
    # list of E tensors of shape (B, 1), mirroring the PyTorch `attention_scores` list
    # (identically 1.0 for all finite inputs).
    attention_scores = [scores[:, i:i + 1] for i in range(E)]
    return emotions, attention_scores


if __name__ == "__main__":
    key = jax.random.PRNGKey(0)
    kp, kd = jax.random.split(key)
    params = init_params(kp)
    d = jax.random.split(kd, 6)

    input_ids = jax.random.randint(d[0], (BATCH, SEQ), 0, VOCAB, dtype=jnp.int32)
    attention_mask = jnp.ones((BATCH, SEQ), jnp.float32)
    token_type_ids = jnp.zeros((BATCH, SEQ), jnp.int32)
    polarity = jax.random.uniform(d[1], (BATCH,), jnp.float32, -1.0, 1.0)
    intensity = jax.random.uniform(d[2], (BATCH,), jnp.float32, 0.0, 1.0)
    avg_emotion_polarity = jax.random.uniform(d[3], (BATCH, 1), jnp.float32, -1.0, 1.0)
    avg_emotion_intensity = jax.random.uniform(d[4], (BATCH, 1), jnp.float32, 0.0, 1.0)

    emotions, attention_scores = emotion_classifier_forward(
        params, input_ids, attention_mask, token_type_ids,
        polarity, intensity, avg_emotion_polarity, avg_emotion_intensity)
    jax.block_until_ready((emotions, attention_scores))

    assert emotions.shape == (BATCH, NUM_EMOTIONS)
    assert len(attention_scores) == NUM_EMOTIONS and attention_scores[0].shape == (BATCH, 1)
    assert bool(jnp.all(jnp.isfinite(emotions)))
    print("KERNEL_OK")
</pallas_src>

<mosaic_0001>
module attributes {stable_mosaic.version = 11 : i64} {
  func.func @_emotion_kernel(%arg0: memref<2x64xf32, #tpu.memory_space<vmem>>, %arg1: memref<2x2xf32, #tpu.memory_space<vmem>>, %arg2: memref<2x1xf32, #tpu.memory_space<vmem>>, %arg3: memref<2x1xf32, #tpu.memory_space<vmem>>, %arg4: memref<2x256xf32, #tpu.memory_space<vmem>>, %arg5: memref<1x256xf32, #tpu.memory_space<vmem>>, %arg6: memref<256x28xf32, #tpu.memory_space<vmem>>, %arg7: memref<1x28xf32, #tpu.memory_space<vmem>>, %arg8: memref<64x7168xbf16, #tpu.memory_space<vmem>>, %arg9: memref<2x7168xf32, #tpu.memory_space<vmem>>, %arg10: memref<1x7168xf32, #tpu.memory_space<vmem>>, %arg11: memref<28x256xf32, #tpu.memory_space<vmem>>, %arg12: memref<1x28xf32, #tpu.memory_space<vmem>>, %arg13: memref<64x28xbf16, #tpu.memory_space<vmem>>, %arg14: memref<1x28xf32, #tpu.memory_space<vmem>>, %arg15: memref<28x28xf32, #tpu.memory_space<vmem>>, %arg16: memref<1x28xf32, #tpu.memory_space<vmem>>, %arg17: memref<28x28xf32, #tpu.memory_space<vmem>>, %arg18: memref<1x28xf32, #tpu.memory_space<vmem>>, %arg19: memref<2x128xf32, #tpu.memory_space<vmem>>) attributes {dimension_semantics = [], scalar_prefetch = 0 : i64, scratch_operands = 0 : i64, tpu.core_type = #tpu.core_type<tc>} {
    %c0 = arith.constant 0 : index
    %c0_0 = arith.constant 0 : index
    %0 = vector.load %arg0[%c0, %c0_0] : memref<2x64xf32, #tpu.memory_space<vmem>>, vector<2x64xf32>
    %1 = arith.truncf %0 : vector<2x64xf32> to vector<2x64xbf16>
    %c0_1 = arith.constant 0 : index
    %c0_2 = arith.constant 0 : index
    %2 = vector.load %arg1[%c0_1, %c0_2] : memref<2x2xf32, #tpu.memory_space<vmem>>, vector<2x1xf32>
    %c0_3 = arith.constant 0 : index
    %c1 = arith.constant 1 : index
    %3 = vector.load %arg1[%c0_3, %c1] : memref<2x2xf32, #tpu.memory_space<vmem>>, vector<2x1xf32>
    %c0_4 = arith.constant 0 : index
    %c0_5 = arith.constant 0 : index
    %4 = vector.load %arg4[%c0_4, %c0_5] : memref<2x256xf32, #tpu.memory_space<vmem>>, vector<1x256xf32>
    %5 = vector.broadcast %2 : vector<2x1xf32> to vector<2x256xf32>
    %6 = vector.broadcast %4 : vector<1x256xf32> to vector<2x256xf32>
    %7 = arith.mulf %5, %6 : vector<2x256xf32>
    %c1_6 = arith.constant 1 : index
    %c0_7 = arith.constant 0 : index
    %8 = vector.load %arg4[%c1_6, %c0_7] : memref<2x256xf32, #tpu.memory_space<vmem>>, vector<1x256xf32>
    %9 = vector.broadcast %3 : vector<2x1xf32> to vector<2x256xf32>
    %10 = vector.broadcast %8 : vector<1x256xf32> to vector<2x256xf32>
    %11 = arith.mulf %9, %10 : vector<2x256xf32>
    %12 = arith.addf %7, %11 : vector<2x256xf32>
    %c0_8 = arith.constant 0 : index
    %c0_9 = arith.constant 0 : index
    %13 = vector.load %arg5[%c0_8, %c0_9] : memref<1x256xf32, #tpu.memory_space<vmem>>, vector<1x256xf32>
    %14 = vector.broadcast %13 : vector<1x256xf32> to vector<2x256xf32>
    %15 = arith.addf %12, %14 : vector<2x256xf32>
    %cst = arith.constant 0.000000e+00 : f32
    %16 = vector.broadcast %cst : f32 to vector<2x256xf32>
    %17 = arith.maximumf %15, %16 : vector<2x256xf32>
    %c0_10 = arith.constant 0 : index
    %c0_11 = arith.constant 0 : index
    %18 = vector.load %arg6[%c0_10, %c0_11] : memref<256x28xf32, #tpu.memory_space<vmem>>, vector<256x28xf32>
    %cst_12 = arith.constant dense<0.000000e+00> : vector<2x28xf32>
    %19 = tpu.matmul %17, %18, %cst_12 {dimension_numbers = #tpu.dot_dimension_numbers<[1], [0], [0], [1], [0, 0, 1, 1], [], []>} : vector<2x256xf32>, vector<256x28xf32>, vector<2x28xf32> -> vector<2x28xf32>
    %c0_13 = arith.constant 0 : index
    %c0_14 = arith.constant 0 : index
    %20 = vector.load %arg7[%c0_13, %c0_14] : memref<1x28xf32, #tpu.memory_space<vmem>>, vector<1x28xf32>
    %21 = vector.broadcast %20 : vector<1x28xf32> to vector<2x28xf32>
    %22 = arith.addf %19, %21 : vector<2x28xf32>
    %cst_15 = arith.constant dense<0xFF800000> : vector<2xf32>
    %23 = vector.multi_reduction <maximumf>, %22, %cst_15 [1] : vector<2x28xf32> to vector<2xf32>
    %24 = vector.shape_cast %23 : vector<2xf32> to vector<2x1xf32>
    %25 = vector.broadcast %24 : vector<2x1xf32> to vector<2x28xf32>
    %26 = arith.subf %22, %25 : vector<2x28xf32>
    %27 = math.exp %26 : vector<2x28xf32>
    %cst_16 = arith.constant dense<0.000000e+00> : vector<2xf32>
    %28 = vector.multi_reduction <add>, %27, %cst_16 [1] : vector<2x28xf32> to vector<2xf32>
    %29 = vector.shape_cast %28 : vector<2xf32> to vector<2x1xf32>
    %30 = vector.broadcast %29 : vector<2x1xf32> to vector<2x28xf32>
    %31 = arith.divf %27, %30 : vector<2x28xf32>
    %c0_17 = arith.constant 0 : index
    %c0_18 = arith.constant 0 : index
    %32 = vector.load %arg8[%c0_17, %c0_18] : memref<64x7168xbf16, #tpu.memory_space<vmem>>, vector<64x7168xbf16>
    %cst_19 = arith.constant dense<0.000000e+00> : vector<2x7168xf32>
    %33 = tpu.matmul %1, %32, %cst_19 {dimension_numbers = #tpu.dot_dimension_numbers<[1], [0], [0], [1], [0, 0, 1, 1], [], []>} : vector<2x64xbf16>, vector<64x7168xbf16>, vector<2x7168xf32> -> vector<2x7168xf32>
    %c0_20 = arith.constant 0 : index
    %c0_21 = arith.constant 0 : index
    %34 = vector.load %arg9[%c0_20, %c0_21] : memref<2x7168xf32, #tpu.memory_space<vmem>>, vector<1x7168xf32>
    %35 = vector.broadcast %2 : vector<2x1xf32> to vector<2x7168xf32>
    %36 = vector.broadcast %34 : vector<1x7168xf32> to vector<2x7168xf32>
    %37 = arith.mulf %35, %36 : vector<2x7168xf32>
    %38 = arith.addf %33, %37 : vector<2x7168xf32>
    %c1_22 = arith.constant 1 : index
    %c0_23 = arith.constant 0 : index
    %39 = vector.load %arg9[%c1_22, %c0_23] : memref<2x7168xf32, #tpu.memory_space<vmem>>, vector<1x7168xf32>
    %40 = vector.broadcast %3 : vector<2x1xf32> to vector<2x7168xf32>
    %41 = vector.broadcast %39 : vector<1x7168xf32> to vector<2x7168xf32>
    %42 = arith.mulf %40, %41 : vector<2x7168xf32>
    %43 = arith.addf %38, %42 : vector<2x7168xf32>
    %c0_24 = arith.constant 0 : index
    %c0_25 = arith.constant 0 : index
    %44 = vector.load %arg10[%c0_24, %c0_25] : memref<1x7168xf32, #tpu.memory_space<vmem>>, vector<1x7168xf32>
    %45 = vector.broadcast %44 : vector<1x7168xf32> to vector<2x7168xf32>
    %46 = arith.addf %43, %45 : vector<2x7168xf32>
    %47 = math.tanh %46 : vector<2x7168xf32>
    %48 = tpu.iota {dimensions = array<i32: 1>} : vector<1x28xi32>
    %cst_26 = arith.constant 0.000000e+00 : f32
    %49 = vector.broadcast %cst_26 : f32 to vector<2x28xf32>
    %50 = vector.extract_strided_slice %47 {offsets = [0, 0], sizes = [2, 256], strides = [1, 1]} : vector<2x7168xf32> to vector<2x256xf32>
    %c0_27 = arith.constant 0 : index
    %c0_28 = arith.constant 0 : index
    %51 = vector.load %arg11[%c0_27, %c0_28] : memref<28x256xf32, #tpu.memory_space<vmem>>, vector<1x256xf32>
    %52 = vector.broadcast %51 : vector<1x256xf32> to vector<2x256xf32>
    %53 = arith.mulf %50, %52 : vector<2x256xf32>
    %cst_29 = arith.constant dense<0.000000e+00> : vector<2xf32>
    %54 = vector.multi_reduction <add>, %53, %cst_29 [1] : vector<2x256xf32> to vector<2xf32>
    %55 = vector.shape_cast %54 : vector<2xf32> to vector<2x1xf32>
    %c0_i32 = arith.constant 0 : i32
    %56 = vector.broadcast %c0_i32 : i32 to vector<1x28xi32>
    %57 = arith.cmpi eq, %48, %56 : vector<1x28xi32>
    %cst_30 = arith.constant 0.000000e+00 : f32
    %58 = vector.shape_cast %57 : vector<1x28xi1> to vector<1x28xi1>
    %59 = vector.broadcast %58 : vector<1x28xi1> to vector<2x28xi1>
    %60 = vector.shape_cast %55 : vector<2x1xf32> to vector<2x1xf32>
    %61 = vector.broadcast %60 : vector<2x1xf32> to vector<2x28xf32>
    %62 = vector.broadcast %cst_30 : f32 to vector<2x28xf32>
    %63 = arith.select %59, %61, %62 : vector<2x28xi1>, vector<2x28xf32>
    %64 = arith.addf %49, %63 : vector<2x28xf32>
    %65 = vector.extract_strided_slice %47 {offsets = [0, 256], sizes = [2, 256], strides = [1, 1]} : vector<2x7168xf32> to vector<2x256xf32>
    %c1_31 = arith.constant 1 : index
    %c0_32 = arith.constant 0 : index
    %66 = vector.load %arg11[%c1_31, %c0_32] : memref<28x256xf32, #tpu.memory_space<vmem>>, vector<1x256xf32>
    %67 = vector.broadcast %66 : vector<1x256xf32> to vector<2x256xf32>
    %68 = arith.mulf %65, %67 : vector<2x256xf32>
    %cst_33 = arith.constant dense<0.000000e+00> : vector<2xf32>
    %69 = vector.multi_reduction <add>, %68, %cst_33 [1] : vector<2x256xf32> to vector<2xf32>
    %70 = vector.shape_cast %69 : vector<2xf32> to vector<2x1xf32>
    %c1_i32 = arith.constant 1 : i32
    %71 = vector.broadcast %c1_i32 : i32 to vector<1x28xi32>
    %72 = arith.cmpi eq, %48, %71 : vector<1x28xi32>
    %cst_34 = arith.constant 0.000000e+00 : f32
    %73 = vector.shape_cast %72 : vector<1x28xi1> to vector<1x28xi1>
    %74 = vector.broadcast %73 : vector<1x28xi1> to vector<2x28xi1>
    %75 = vector.shape_cast %70 : vector<2x1xf32> to vector<2x1xf32>
    %76 = vector.broadcast %75 : vector<2x1xf32> to vector<2x28xf32>
    %77 = vector.broadcast %cst_34 : f32 to vector<2x28xf32>
    %78 = arith.select %74, %76, %77 : vector<2x28xi1>, vector<2x28xf32>
    %79 = arith.addf %64, %78 : vector<2x28xf32>
    %80 = vector.extract_strided_slice %47 {offsets = [0, 512], sizes = [2, 256], strides = [1, 1]} : vector<2x7168xf32> to vector<2x256xf32>
    %c2 = arith.constant 2 : index
    %c0_35 = arith.constant 0 : index
    %81 = vector.load %arg11[%c2, %c0_35] : memref<28x256xf32, #tpu.memory_space<vmem>>, vector<1x256xf32>
    %82 = vector.broadcast %81 : vector<1x256xf32> to vector<2x256xf32>
    %83 = arith.mulf %80, %82 : vector<2x256xf32>
    %cst_36 = arith.constant dense<0.000000e+00> : vector<2xf32>
    %84 = vector.multi_reduction <add>, %83, %cst_36 [1] : vector<2x256xf32> to vector<2xf32>
    %85 = vector.shape_cast %84 : vector<2xf32> to vector<2x1xf32>
    %c2_i32 = arith.constant 2 : i32
    %86 = vector.broadcast %c2_i32 : i32 to vector<1x28xi32>
    %87 = arith.cmpi eq, %48, %86 : vector<1x28xi32>
    %cst_37 = arith.constant 0.000000e+00 : f32
    %88 = vector.shape_cast %87 : vector<1x28xi1> to vector<1x28xi1>
    %89 = vector.broadcast %88 : vector<1x28xi1> to vector<2x28xi1>
    %90 = vector.shape_cast %85 : vector<2x1xf32> to vector<2x1xf32>
    %91 = vector.broadcast %90 : vector<2x1xf32> to vector<2x28xf32>
    %92 = vector.broadcast %cst_37 : f32 to vector<2x28xf32>
    %93 = arith.select %89, %91, %92 : vector<2x28xi1>, vector<2x28xf32>
    %94 = arith.addf %79, %93 : vector<2x28xf32>
    %95 = vector.extract_strided_slice %47 {offsets = [0, 768], sizes = [2, 256], strides = [1, 1]} : vector<2x7168xf32> to vector<2x256xf32>
    %c3 = arith.constant 3 : index
    %c0_38 = arith.constant 0 : index
    %96 = vector.load %arg11[%c3, %c0_38] : memref<28x256xf32, #tpu.memory_space<vmem>>, vector<1x256xf32>
    %97 = vector.broadcast %96 : vector<1x256xf32> to vector<2x256xf32>
    %98 = arith.mulf %95, %97 : vector<2x256xf32>
    %cst_39 = arith.constant dense<0.000000e+00> : vector<2xf32>
    %99 = vector.multi_reduction <add>, %98, %cst_39 [1] : vector<2x256xf32> to vector<2xf32>
    %100 = vector.shape_cast %99 : vector<2xf32> to vector<2x1xf32>
    %c3_i32 = arith.constant 3 : i32
    %101 = vector.broadcast %c3_i32 : i32 to vector<1x28xi32>
    %102 = arith.cmpi eq, %48, %101 : vector<1x28xi32>
    %cst_40 = arith.constant 0.000000e+00 : f32
    %103 = vector.shape_cast %102 : vector<1x28xi1> to vector<1x28xi1>
    %104 = vector.broadcast %103 : vector<1x28xi1> to vector<2x28xi1>
    %105 = vector.shape_cast %100 : vector<2x1xf32> to vector<2x1xf32>
    %106 = vector.broadcast %105 : vector<2x1xf32> to vector<2x28xf32>
    %107 = vector.broadcast %cst_40 : f32 to vector<2x28xf32>
    %108 = arith.select %104, %106, %107 : vector<2x28xi1>, vector<2x28xf32>
    %109 = arith.addf %94, %108 : vector<2x28xf32>
    %110 = vector.extract_strided_slice %47 {offsets = [0, 1024], sizes = [2, 256], strides = [1, 1]} : vector<2x7168xf32> to vector<2x256xf32>
    %c4 = arith.constant 4 : index
    %c0_41 = arith.constant 0 : index
    %111 = vector.load %arg11[%c4, %c0_41] : memref<28x256xf32, #tpu.memory_space<vmem>>, vector<1x256xf32>
    %112 = vector.broadcast %111 : vector<1x256xf32> to vector<2x256xf32>
    %113 = arith.mulf %110, %112 : vector<2x256xf32>
    %cst_42 = arith.constant dense<0.000000e+00> : vector<2xf32>
    %114 = vector.multi_reduction <add>, %113, %cst_42 [1] : vector<2x256xf32> to vector<2xf32>
    %115 = vector.shape_cast %114 : vector<2xf32> to vector<2x1xf32>
    %c4_i32 = arith.constant 4 : i32
    %116 = vector.broadcast %c4_i32 : i32 to vector<1x28xi32>
    %117 = arith.cmpi eq, %48, %116 : vector<1x28xi32>
    %cst_43 = arith.constant 0.000000e+00 : f32
    %118 = vector.shape_cast %117 : vector<1x28xi1> to vector<1x28xi1>
    %119 = vector.broadcast %118 : vector<1x28xi1> to vector<2x28xi1>
    %120 = vector.shape_cast %115 : vector<2x1xf32> to vector<2x1xf32>
    %121 = vector.broadcast %120 : vector<2x1xf32> to vector<2x28xf32>
    %122 = vector.broadcast %cst_43 : f32 to vector<2x28xf32>
    %123 = arith.select %119, %121, %122 : vector<2x28xi1>, vector<2x28xf32>
    %124 = arith.addf %109, %123 : vector<2x28xf32>
    %125 = vector.extract_strided_slice %47 {offsets = [0, 1280], sizes = [2, 256], strides = [1, 1]} : vector<2x7168xf32> to vector<2x256xf32>
    %c5 = arith.constant 5 : index
    %c0_44 = arith.constant 0 : index
    %126 = vector.load %arg11[%c5, %c0_44] : memref<28x256xf32, #tpu.memory_space<vmem>>, vector<1x256xf32>
    %127 = vector.broadcast %126 : vector<1x256xf32> to vector<2x256xf32>
    %128 = arith.mulf %125, %127 : vector<2x256xf32>
    %cst_45 = arith.constant dense<0.000000e+00> : vector<2xf32>
    %129 = vector.multi_reduction <add>, %128, %cst_45 [1] : vector<2x256xf32> to vector<2xf32>
    %130 = vector.shape_cast %129 : vector<2xf32> to vector<2x1xf32>
    %c5_i32 = arith.constant 5 : i32
    %131 = vector.broadcast %c5_i32 : i32 to vector<1x28xi32>
    %132 = arith.cmpi eq, %48, %131 : vector<1x28xi32>
    %cst_46 = arith.constant 0.000000e+00 : f32
    %133 = vector.shape_cast %132 : vector<1x28xi1> to vector<1x28xi1>
    %134 = vector.broadcast %133 : vector<1x28xi1> to vector<2x28xi1>
    %135 = vector.shape_cast %130 : vector<2x1xf32> to vector<2x1xf32>
    %136 = vector.broadcast %135 : vector<2x1xf32> to vector<2x28xf32>
    %137 = vector.broadcast %cst_46 : f32 to vector<2x28xf32>
    %138 = arith.select %134, %136, %137 : vector<2x28xi1>, vector<2x28xf32>
    %139 = arith.addf %124, %138 : vector<2x28xf32>
    %140 = vector.extract_strided_slice %47 {offsets = [0, 1536], sizes = [2, 256], strides = [1, 1]} : vector<2x7168xf32> to vector<2x256xf32>
    %c6 = arith.constant 6 : index
    %c0_47 = arith.constant 0 : index
    %141 = vector.load %arg11[%c6, %c0_47] : memref<28x256xf32, #tpu.memory_space<vmem>>, vector<1x256xf32>
    %142 = vector.broadcast %141 : vector<1x256xf32> to vector<2x256xf32>
    %143 = arith.mulf %140, %142 : vector<2x256xf32>
    %cst_48 = arith.constant dense<0.000000e+00> : vector<2xf32>
    %144 = vector.multi_reduction <add>, %143, %cst_48 [1] : vector<2x256xf32> to vector<2xf32>
    %145 = vector.shape_cast %144 : vector<2xf32> to vector<2x1xf32>
    %c6_i32 = arith.constant 6 : i32
    %146 = vector.broadcast %c6_i32 : i32 to vector<1x28xi32>
    %147 = arith.cmpi eq, %48, %146 : vector<1x28xi32>
    %cst_49 = arith.constant 0.000000e+00 : f32
    %148 = vector.shape_cast %147 : vector<1x28xi1> to vector<1x28xi1>
    %149 = vector.broadcast %148 : vector<1x28xi1> to vector<2x28xi1>
    %150 = vector.shape_cast %145 : vector<2x1xf32> to vector<2x1xf32>
    %151 = vector.broadcast %150 : vector<2x1xf32> to vector<2x28xf32>
    %152 = vector.broadcast %cst_49 : f32 to vector<2x28xf32>
    %153 = arith.select %149, %151, %152 : vector<2x28xi1>, vector<2x28xf32>
    %154 = arith.addf %139, %153 : vector<2x28xf32>
    %155 = vector.extract_strided_slice %47 {offsets = [0, 1792], sizes = [2, 256], strides = [1, 1]} : vector<2x7168xf32> to vector<2x256xf32>
    %c7 = arith.constant 7 : index
    %c0_50 = arith.constant 0 : index
    %156 = vector.load %arg11[%c7, %c0_50] : memref<28x256xf32, #tpu.memory_space<vmem>>, vector<1x256xf32>
    %157 = vector.broadcast %156 : vector<1x256xf32> to vector<2x256xf32>
    %158 = arith.mulf %155, %157 : vector<2x256xf32>
    %cst_51 = arith.constant dense<0.000000e+00> : vector<2xf32>
    %159 = vector.multi_reduction <add>, %158, %cst_51 [1] : vector<2x256xf32> to vector<2xf32>
    %160 = vector.shape_cast %159 : vector<2xf32> to vector<2x1xf32>
    %c7_i32 = arith.constant 7 : i32
    %161 = vector.broadcast %c7_i32 : i32 to vector<1x28xi32>
    %162 = arith.cmpi eq, %48, %161 : vector<1x28xi32>
    %cst_52 = arith.constant 0.000000e+00 : f32
    %163 = vector.shape_cast %162 : vector<1x28xi1> to vector<1x28xi1>
    %164 = vector.broadcast %163 : vector<1x28xi1> to vector<2x28xi1>
    %165 = vector.shape_cast %160 : vector<2x1xf32> to vector<2x1xf32>
    %166 = vector.broadcast %165 : vector<2x1xf32> to vector<2x28xf32>
    %167 = vector.broadcast %cst_52 : f32 to vector<2x28xf32>
    %168 = arith.select %164, %166, %167 : vector<2x28xi1>, vector<2x28xf32>
    %169 = arith.addf %154, %168 : vector<2x28xf32>
    %170 = vector.extract_strided_slice %47 {offsets = [0, 2048], sizes = [2, 256], strides = [1, 1]} : vector<2x7168xf32> to vector<2x256xf32>
    %c8 = arith.constant 8 : index
    %c0_53 = arith.constant 0 : index
    %171 = vector.load %arg11[%c8, %c0_53] : memref<28x256xf32, #tpu.memory_space<vmem>>, vector<1x256xf32>
    %172 = vector.broadcast %171 : vector<1x256xf32> to vector<2x256xf32>
    %173 = arith.mulf %170, %172 : vector<2x256xf32>
    %cst_54 = arith.constant dense<0.000000e+00> : vector<2xf32>
    %174 = vector.multi_reduction <add>, %173, %cst_54 [1] : vector<2x256xf32> to vector<2xf32>
    %175 = vector.shape_cast %174 : vector<2xf32> to vector<2x1xf32>
    %c8_i32 = arith.constant 8 : i32
    %176 = vector.broadcast %c8_i32 : i32 to vector<1x28xi32>
    %177 = arith.cmpi eq, %48, %176 : vector<1x28xi32>
    %cst_55 = arith.constant 0.000000e+00 : f32
    %178 = vector.shape_cast %177 : vector<1x28xi1> to vector<1x28xi1>
    %179 = vector.broadcast %178 : vector<1x28xi1> to vector<2x28xi1>
    %180 = vector.shape_cast %175 : vector<2x1xf32> to vector<2x1xf32>
    %181 = vector.broadcast %180 : vector<2x1xf32> to vector<2x28xf32>
    %182 = vector.broadcast %cst_55 : f32 to vector<2x28xf32>
    %183 = arith.select %179, %181, %182 : vector<2x28xi1>, vector<2x28xf32>
    %184 = arith.addf %169, %183 : vector<2x28xf32>
    %185 = vector.extract_strided_slice %47 {offsets = [0, 2304], sizes = [2, 256], strides = [1, 1]} : vector<2x7168xf32> to vector<2x256xf32>
    %c9 = arith.constant 9 : index
    %c0_56 = arith.constant 0 : index
    %186 = vector.load %arg11[%c9, %c0_56] : memref<28x256xf32, #tpu.memory_space<vmem>>, vector<1x256xf32>
    %187 = vector.broadcast %186 : vector<1x256xf32> to vector<2x256xf32>
    %188 = arith.mulf %185, %187 : vector<2x256xf32>
    %cst_57 = arith.constant dense<0.000000e+00> : vector<2xf32>
    %189 = vector.multi_reduction <add>, %188, %cst_57 [1] : vector<2x256xf32> to vector<2xf32>
    %190 = vector.shape_cast %189 : vector<2xf32> to vector<2x1xf32>
    %c9_i32 = arith.constant 9 : i32
    %191 = vector.broadcast %c9_i32 : i32 to vector<1x28xi32>
    %192 = arith.cmpi eq, %48, %191 : vector<1x28xi32>
    %cst_58 = arith.constant 0.000000e+00 : f32
    %193 = vector.shape_cast %192 : vector<1x28xi1> to vector<1x28xi1>
    %194 = vector.broadcast %193 : vector<1x28xi1> to vector<2x28xi1>
    %195 = vector.shape_cast %190 : vector<2x1xf32> to vector<2x1xf32>
    %196 = vector.broadcast %195 : vector<2x1xf32> to vector<2x28xf32>
    %197 = vector.broadcast %cst_58 : f32 to vector<2x28xf32>
    %198 = arith.select %194, %196, %197 : vector<2x28xi1>, vector<2x28xf32>
    %199 = arith.addf %184, %198 : vector<2x28xf32>
    %200 = vector.extract_strided_slice %47 {offsets = [0, 2560], sizes = [2, 256], strides = [1, 1]} : vector<2x7168xf32> to vector<2x256xf32>
    %c10 = arith.constant 10 : index
    %c0_59 = arith.constant 0 : index
    %201 = vector.load %arg11[%c10, %c0_59] : memref<28x256xf32, #tpu.memory_space<vmem>>, vector<1x256xf32>
    %202 = vector.broadcast %201 : vector<1x256xf32> to vector<2x256xf32>
    %203 = arith.mulf %200, %202 : vector<2x256xf32>
    %cst_60 = arith.constant dense<0.000000e+00> : vector<2xf32>
    %204 = vector.multi_reduction <add>, %203, %cst_60 [1] : vector<2x256xf32> to vector<2xf32>
    %205 = vector.shape_cast %204 : vector<2xf32> to vector<2x1xf32>
    %c10_i32 = arith.constant 10 : i32
    %206 = vector.broadcast %c10_i32 : i32 to vector<1x28xi32>
    %207 = arith.cmpi eq, %48, %206 : vector<1x28xi32>
    %cst_61 = arith.constant 0.000000e+00 : f32
    %208 = vector.shape_cast %207 : vector<1x28xi1> to vector<1x28xi1>
    %209 = vector.broadcast %208 : vector<1x28xi1> to vector<2x28xi1>
    %210 = vector.shape_cast %205 : vector<2x1xf32> to vector<2x1xf32>
    %211 = vector.broadcast %210 : vector<2x1xf32> to vector<2x28xf32>
    %212 = vector.broadcast %cst_61 : f32 to vector<2x28xf32>
    %213 = arith.select %209, %211, %212 : vector<2x28xi1>, vector<2x28xf32>
    %214 = arith.addf %199, %213 : vector<2x28xf32>
    %215 = vector.extract_strided_slice %47 {offsets = [0, 2816], sizes = [2, 256], strides = [1, 1]} : vector<2x7168xf32> to vector<2x256xf32>
    %c11 = arith.constant 11 : index
    %c0_62 = arith.constant 0 : index
    %216 = vector.load %arg11[%c11, %c0_62] : memref<28x256xf32, #tpu.memory_space<vmem>>, vector<1x256xf32>
    %217 = vector.broadcast %216 : vector<1x256xf32> to vector<2x256xf32>
    %218 = arith.mulf %215, %217 : vector<2x256xf32>
    %cst_63 = arith.constant dense<0.000000e+00> : vector<2xf32>
    %219 = vector.multi_reduction <add>, %218, %cst_63 [1] : vector<2x256xf32> to vector<2xf32>
    %220 = vector.shape_cast %219 : vector<2xf32> to vector<2x1xf32>
    %c11_i32 = arith.constant 11 : i32
    %221 = vector.broadcast %c11_i32 : i32 to vector<1x28xi32>
    %222 = arith.cmpi eq, %48, %221 : vector<1x28xi32>
    %cst_64 = arith.constant 0.000000e+00 : f32
    %223 = vector.shape_cast %222 : vector<1x28xi1> to vector<1x28xi1>
    %224 = vector.broadcast %223 : vector<1x28xi1> to vector<2x28xi1>
    %225 = vector.shape_cast %220 : vector<2x1xf32> to vector<2x1xf32>
    %226 = vector.broadcast %225 : vector<2x1xf32> to vector<2x28xf32>
    %227 = vector.broadcast %cst_64 : f32 to vector<2x28xf32>
    %228 = arith.select %224, %226, %227 : vector<2x28xi1>, vector<2x28xf32>
    %229 = arith.addf %214, %228 : vector<2x28xf32>
    %230 = vector.extract_strided_slice %47 {offsets = [0, 3072], sizes = [2, 256], strides = [1, 1]} : vector<2x7168xf32> to vector<2x256xf32>
    %c12 = arith.constant 12 : index
    %c0_65 = arith.constant 0 : index
    %231 = vector.load %arg11[%c12, %c0_65] : memref<28x256xf32, #tpu.memory_space<vmem>>, vector<1x256xf32>
    %232 = vector.broadcast %231 : vector<1x256xf32> to vector<2x256xf32>
    %233 = arith.mulf %230, %232 : vector<2x256xf32>
    %cst_66 = arith.constant dense<0.000000e+00> : vector<2xf32>
    %234 = vector.multi_reduction <add>, %233, %cst_66 [1] : vector<2x256xf32> to vector<2xf32>
    %235 = vector.shape_cast %234 : vector<2xf32> to vector<2x1xf32>
    %c12_i32 = arith.constant 12 : i32
    %236 = vector.broadcast %c12_i32 : i32 to vector<1x28xi32>
    %237 = arith.cmpi eq, %48, %236 : vector<1x28xi32>
    %cst_67 = arith.constant 0.000000e+00 : f32
    %238 = vector.shape_cast %237 : vector<1x28xi1> to vector<1x28xi1>
    %239 = vector.broadcast %238 : vector<1x28xi1> to vector<2x28xi1>
    %240 = vector.shape_cast %235 : vector<2x1xf32> to vector<2x1xf32>
    %241 = vector.broadcast %240 : vector<2x1xf32> to vector<2x28xf32>
    %242 = vector.broadcast %cst_67 : f32 to vector<2x28xf32>
    %243 = arith.select %239, %241, %242 : vector<2x28xi1>, vector<2x28xf32>
    %244 = arith.addf %229, %243 : vector<2x28xf32>
    %245 = vector.extract_strided_slice %47 {offsets = [0, 3328], sizes = [2, 256], strides = [1, 1]} : vector<2x7168xf32> to vector<2x256xf32>
    %c13 = arith.constant 13 : index
    %c0_68 = arith.constant 0 : index
    %246 = vector.load %arg11[%c13, %c0_68] : memref<28x256xf32, #tpu.memory_space<vmem>>, vector<1x256xf32>
    %247 = vector.broadcast %246 : vector<1x256xf32> to vector<2x256xf32>
    %248 = arith.mulf %245, %247 : vector<2x256xf32>
    %cst_69 = arith.constant dense<0.000000e+00> : vector<2xf32>
    %249 = vector.multi_reduction <add>, %248, %cst_69 [1] : vector<2x256xf32> to vector<2xf32>
    %250 = vector.shape_cast %249 : vector<2xf32> to vector<2x1xf32>
    %c13_i32 = arith.constant 13 : i32
    %251 = vector.broadcast %c13_i32 : i32 to vector<1x28xi32>
    %252 = arith.cmpi eq, %48, %251 : vector<1x28xi32>
    %cst_70 = arith.constant 0.000000e+00 : f32
    %253 = vector.shape_cast %252 : vector<1x28xi1> to vector<1x28xi1>
    %254 = vector.broadcast %253 : vector<1x28xi1> to vector<2x28xi1>
    %255 = vector.shape_cast %250 : vector<2x1xf32> to vector<2x1xf32>
    %256 = vector.broadcast %255 : vector<2x1xf32> to vector<2x28xf32>
    %257 = vector.broadcast %cst_70 : f32 to vector<2x28xf32>
    %258 = arith.select %254, %256, %257 : vector<2x28xi1>, vector<2x28xf32>
    %259 = arith.addf %244, %258 : vector<2x28xf32>
    %260 = vector.extract_strided_slice %47 {offsets = [0, 3584], sizes = [2, 256], strides = [1, 1]} : vector<2x7168xf32> to vector<2x256xf32>
    %c14 = arith.constant 14 : index
    %c0_71 = arith.constant 0 : index
    %261 = vector.load %arg11[%c14, %c0_71] : memref<28x256xf32, #tpu.memory_space<vmem>>, vector<1x256xf32>
    %262 = vector.broadcast %261 : vector<1x256xf32> to vector<2x256xf32>
    %263 = arith.mulf %260, %262 : vector<2x256xf32>
    %cst_72 = arith.constant dense<0.000000e+00> : vector<2xf32>
    %264 = vector.multi_reduction <add>, %263, %cst_72 [1] : vector<2x256xf32> to vector<2xf32>
    %265 = vector.shape_cast %264 : vector<2xf32> to vector<2x1xf32>
    %c14_i32 = arith.constant 14 : i32
    %266 = vector.broadcast %c14_i32 : i32 to vector<1x28xi32>
    %267 = arith.cmpi eq, %48, %266 : vector<1x28xi32>
    %cst_73 = arith.constant 0.000000e+00 : f32
    %268 = vector.shape_cast %267 : vector<1x28xi1> to vector<1x28xi1>
    %269 = vector.broadcast %268 : vector<1x28xi1> to vector<2x28xi1>
    %270 = vector.shape_cast %265 : vector<2x1xf32> to vector<2x1xf32>
    %271 = vector.broadcast %270 : vector<2x1xf32> to vector<2x28xf32>
    %272 = vector.broadcast %cst_73 : f32 to vector<2x28xf32>
    %273 = arith.select %269, %271, %272 : vector<2x28xi1>, vector<2x28xf32>
    %274 = arith.addf %259, %273 : vector<2x28xf32>
    %275 = vector.extract_strided_slice %47 {offsets = [0, 3840], sizes = [2, 256], strides = [1, 1]} : vector<2x7168xf32> to vector<2x256xf32>
    %c15 = arith.constant 15 : index
    %c0_74 = arith.constant 0 : index
    %276 = vector.load %arg11[%c15, %c0_74] : memref<28x256xf32, #tpu.memory_space<vmem>>, vector<1x256xf32>
    %277 = vector.broadcast %276 : vector<1x256xf32> to vector<2x256xf32>
    %278 = arith.mulf %275, %277 : vector<2x256xf32>
    %cst_75 = arith.constant dense<0.000000e+00> : vector<2xf32>
    %279 = vector.multi_reduction <add>, %278, %cst_75 [1] : vector<2x256xf32> to vector<2xf32>
    %280 = vector.shape_cast %279 : vector<2xf32> to vector<2x1xf32>
    %c15_i32 = arith.constant 15 : i32
    %281 = vector.broadcast %c15_i32 : i32 to vector<1x28xi32>
    %282 = arith.cmpi eq, %48, %281 : vector<1x28xi32>
    %cst_76 = arith.constant 0.000000e+00 : f32
    %283 = vector.shape_cast %282 : vector<1x28xi1> to vector<1x28xi1>
    %284 = vector.broadcast %283 : vector<1x28xi1> to vector<2x28xi1>
    %285 = vector.shape_cast %280 : vector<2x1xf32> to vector<2x1xf32>
    %286 = vector.broadcast %285 : vector<2x1xf32> to vector<2x28xf32>
    %287 = vector.broadcast %cst_76 : f32 to vector<2x28xf32>
    %288 = arith.select %284, %286, %287 : vector<2x28xi1>, vector<2x28xf32>
    %289 = arith.addf %274, %288 : vector<2x28xf32>
    %290 = vector.extract_strided_slice %47 {offsets = [0, 4096], sizes = [2, 256], strides = [1, 1]} : vector<2x7168xf32> to vector<2x256xf32>
    %c16 = arith.constant 16 : index
    %c0_77 = arith.constant 0 : index
    %291 = vector.load %arg11[%c16, %c0_77] : memref<28x256xf32, #tpu.memory_space<vmem>>, vector<1x256xf32>
    %292 = vector.broadcast %291 : vector<1x256xf32> to vector<2x256xf32>
    %293 = arith.mulf %290, %292 : vector<2x256xf32>
    %cst_78 = arith.constant dense<0.000000e+00> : vector<2xf32>
    %294 = vector.multi_reduction <add>, %293, %cst_78 [1] : vector<2x256xf32> to vector<2xf32>
    %295 = vector.shape_cast %294 : vector<2xf32> to vector<2x1xf32>
    %c16_i32 = arith.constant 16 : i32
    %296 = vector.broadcast %c16_i32 : i32 to vector<1x28xi32>
    %297 = arith.cmpi eq, %48, %296 : vector<1x28xi32>
    %cst_79 = arith.constant 0.000000e+00 : f32
    %298 = vector.shape_cast %297 : vector<1x28xi1> to vector<1x28xi1>
    %299 = vector.broadcast %298 : vector<1x28xi1> to vector<2x28xi1>
    %300 = vector.shape_cast %295 : vector<2x1xf32> to vector<2x1xf32>
    %301 = vector.broadcast %300 : vector<2x1xf32> to vector<2x28xf32>
    %302 = vector.broadcast %cst_79 : f32 to vector<2x28xf32>
    %303 = arith.select %299, %301, %302 : vector<2x28xi1>, vector<2x28xf32>
    %304 = arith.addf %289, %303 : vector<2x28xf32>
    %305 = vector.extract_strided_slice %47 {offsets = [0, 4352], sizes = [2, 256], strides = [1, 1]} : vector<2x7168xf32> to vector<2x256xf32>
    %c17 = arith.constant 17 : index
    %c0_80 = arith.constant 0 : index
    %306 = vector.load %arg11[%c17, %c0_80] : memref<28x256xf32, #tpu.memory_space<vmem>>, vector<1x256xf32>
    %307 = vector.broadcast %306 : vector<1x256xf32> to vector<2x256xf32>
    %308 = arith.mulf %305, %307 : vector<2x256xf32>
    %cst_81 = arith.constant dense<0.000000e+00> : vector<2xf32>
    %309 = vector.multi_reduction <add>, %308, %cst_81 [1] : vector<2x256xf32> to vector<2xf32>
    %310 = vector.shape_cast %309 : vector<2xf32> to vector<2x1xf32>
    %c17_i32 = arith.constant 17 : i32
    %311 = vector.broadcast %c17_i32 : i32 to vector<1x28xi32>
    %312 = arith.cmpi eq, %48, %311 : vector<1x28xi32>
    %cst_82 = arith.constant 0.000000e+00 : f32
    %313 = vector.shape_cast %312 : vector<1x28xi1> to vector<1x28xi1>
    %314 = vector.broadcast %313 : vector<1x28xi1> to vector<2x28xi1>
    %315 = vector.shape_cast %310 : vector<2x1xf32> to vector<2x1xf32>
    %316 = vector.broadcast %315 : vector<2x1xf32> to vector<2x28xf32>
    %317 = vector.broadcast %cst_82 : f32 to vector<2x28xf32>
    %318 = arith.select %314, %316, %317 : vector<2x28xi1>, vector<2x28xf32>
    %319 = arith.addf %304, %318 : vector<2x28xf32>
    %320 = vector.extract_strided_slice %47 {offsets = [0, 4608], sizes = [2, 256], strides = [1, 1]} : vector<2x7168xf32> to vector<2x256xf32>
    %c18 = arith.constant 18 : index
    %c0_83 = arith.constant 0 : index
    %321 = vector.load %arg11[%c18, %c0_83] : memref<28x256xf32, #tpu.memory_space<vmem>>, vector<1x256xf32>
    %322 = vector.broadcast %321 : vector<1x256xf32> to vector<2x256xf32>
    %323 = arith.mulf %320, %322 : vector<2x256xf32>
    %cst_84 = arith.constant dense<0.000000e+00> : vector<2xf32>
    %324 = vector.multi_reduction <add>, %323, %cst_84 [1] : vector<2x256xf32> to vector<2xf32>
    %325 = vector.shape_cast %324 : vector<2xf32> to vector<2x1xf32>
    %c18_i32 = arith.constant 18 : i32
    %326 = vector.broadcast %c18_i32 : i32 to vector<1x28xi32>
    %327 = arith.cmpi eq, %48, %326 : vector<1x28xi32>
    %cst_85 = arith.constant 0.000000e+00 : f32
    %328 = vector.shape_cast %327 : vector<1x28xi1> to vector<1x28xi1>
    %329 = vector.broadcast %328 : vector<1x28xi1> to vector<2x28xi1>
    %330 = vector.shape_cast %325 : vector<2x1xf32> to vector<2x1xf32>
    %331 = vector.broadcast %330 : vector<2x1xf32> to vector<2x28xf32>
    %332 = vector.broadcast %cst_85 : f32 to vector<2x28xf32>
    %333 = arith.select %329, %331, %332 : vector<2x28xi1>, vector<2x28xf32>
    %334 = arith.addf %319, %333 : vector<2x28xf32>
    %335 = vector.extract_strided_slice %47 {offsets = [0, 4864], sizes = [2, 256], strides = [1, 1]} : vector<2x7168xf32> to vector<2x256xf32>
    %c19 = arith.constant 19 : index
    %c0_86 = arith.constant 0 : index
    %336 = vector.load %arg11[%c19, %c0_86] : memref<28x256xf32, #tpu.memory_space<vmem>>, vector<1x256xf32>
    %337 = vector.broadcast %336 : vector<1x256xf32> to vector<2x256xf32>
    %338 = arith.mulf %335, %337 : vector<2x256xf32>
    %cst_87 = arith.constant dense<0.000000e+00> : vector<2xf32>
    %339 = vector.multi_reduction <add>, %338, %cst_87 [1] : vector<2x256xf32> to vector<2xf32>
    %340 = vector.shape_cast %339 : vector<2xf32> to vector<2x1xf32>
    %c19_i32 = arith.constant 19 : i32
    %341 = vector.broadcast %c19_i32 : i32 to vector<1x28xi32>
    %342 = arith.cmpi eq, %48, %341 : vector<1x28xi32>
    %cst_88 = arith.constant 0.000000e+00 : f32
    %343 = vector.shape_cast %342 : vector<1x28xi1> to vector<1x28xi1>
    %344 = vector.broadcast %343 : vector<1x28xi1> to vector<2x28xi1>
    %345 = vector.shape_cast %340 : vector<2x1xf32> to vector<2x1xf32>
    %346 = vector.broadcast %345 : vector<2x1xf32> to vector<2x28xf32>
    %347 = vector.broadcast %cst_88 : f32 to vector<2x28xf32>
    %348 = arith.select %344, %346, %347 : vector<2x28xi1>, vector<2x28xf32>
    %349 = arith.addf %334, %348 : vector<2x28xf32>
    %350 = vector.extract_strided_slice %47 {offsets = [0, 5120], sizes = [2, 256], strides = [1, 1]} : vector<2x7168xf32> to vector<2x256xf32>
    %c20 = arith.constant 20 : index
    %c0_89 = arith.constant 0 : index
    %351 = vector.load %arg11[%c20, %c0_89] : memref<28x256xf32, #tpu.memory_space<vmem>>, vector<1x256xf32>
    %352 = vector.broadcast %351 : vector<1x256xf32> to vector<2x256xf32>
    %353 = arith.mulf %350, %352 : vector<2x256xf32>
    %cst_90 = arith.constant dense<0.000000e+00> : vector<2xf32>
    %354 = vector.multi_reduction <add>, %353, %cst_90 [1] : vector<2x256xf32> to vector<2xf32>
    %355 = vector.shape_cast %354 : vector<2xf32> to vector<2x1xf32>
    %c20_i32 = arith.constant 20 : i32
    %356 = vector.broadcast %c20_i32 : i32 to vector<1x28xi32>
    %357 = arith.cmpi eq, %48, %356 : vector<1x28xi32>
    %cst_91 = arith.constant 0.000000e+00 : f32
    %358 = vector.shape_cast %357 : vector<1x28xi1> to vector<1x28xi1>
    %359 = vector.broadcast %358 : vector<1x28xi1> to vector<2x28xi1>
    %360 = vector.shape_cast %355 : vector<2x1xf32> to vector<2x1xf32>
    %361 = vector.broadcast %360 : vector<2x1xf32> to vector<2x28xf32>
    %362 = vector.broadcast %cst_91 : f32 to vector<2x28xf32>
    %363 = arith.select %359, %361, %362 : vector<2x28xi1>, vector<2x28xf32>
    %364 = arith.addf %349, %363 : vector<2x28xf32>
    %365 = vector.extract_strided_slice %47 {offsets = [0, 5376], sizes = [2, 256], strides = [1, 1]} : vector<2x7168xf32> to vector<2x256xf32>
    %c21 = arith.constant 21 : index
    %c0_92 = arith.constant 0 : index
    %366 = vector.load %arg11[%c21, %c0_92] : memref<28x256xf32, #tpu.memory_space<vmem>>, vector<1x256xf32>
    %367 = vector.broadcast %366 : vector<1x256xf32> to vector<2x256xf32>
    %368 = arith.mulf %365, %367 : vector<2x256xf32>
    %cst_93 = arith.constant dense<0.000000e+00> : vector<2xf32>
    %369 = vector.multi_reduction <add>, %368, %cst_93 [1] : vector<2x256xf32> to vector<2xf32>
    %370 = vector.shape_cast %369 : vector<2xf32> to vector<2x1xf32>
    %c21_i32 = arith.constant 21 : i32
    %371 = vector.broadcast %c21_i32 : i32 to vector<1x28xi32>
    %372 = arith.cmpi eq, %48, %371 : vector<1x28xi32>
    %cst_94 = arith.constant 0.000000e+00 : f32
    %373 = vector.shape_cast %372 : vector<1x28xi1> to vector<1x28xi1>
    %374 = vector.broadcast %373 : vector<1x28xi1> to vector<2x28xi1>
    %375 = vector.shape_cast %370 : vector<2x1xf32> to vector<2x1xf32>
    %376 = vector.broadcast %375 : vector<2x1xf32> to vector<2x28xf32>
    %377 = vector.broadcast %cst_94 : f32 to vector<2x28xf32>
    %378 = arith.select %374, %376, %377 : vector<2x28xi1>, vector<2x28xf32>
    %379 = arith.addf %364, %378 : vector<2x28xf32>
    %380 = vector.extract_strided_slice %47 {offsets = [0, 5632], sizes = [2, 256], strides = [1, 1]} : vector<2x7168xf32> to vector<2x256xf32>
    %c22 = arith.constant 22 : index
    %c0_95 = arith.constant 0 : index
    %381 = vector.load %arg11[%c22, %c0_95] : memref<28x256xf32, #tpu.memory_space<vmem>>, vector<1x256xf32>
    %382 = vector.broadcast %381 : vector<1x256xf32> to vector<2x256xf32>
    %383 = arith.mulf %380, %382 : vector<2x256xf32>
    %cst_96 = arith.constant dense<0.000000e+00> : vector<2xf32>
    %384 = vector.multi_reduction <add>, %383, %cst_96 [1] : vector<2x256xf32> to vector<2xf32>
    %385 = vector.shape_cast %384 : vector<2xf32> to vector<2x1xf32>
    %c22_i32 = arith.constant 22 : i32
    %386 = vector.broadcast %c22_i32 : i32 to vector<1x28xi32>
    %387 = arith.cmpi eq, %48, %386 : vector<1x28xi32>
    %cst_97 = arith.constant 0.000000e+00 : f32
    %388 = vector.shape_cast %387 : vector<1x28xi1> to vector<1x28xi1>
    %389 = vector.broadcast %388 : vector<1x28xi1> to vector<2x28xi1>
    %390 = vector.shape_cast %385 : vector<2x1xf32> to vector<2x1xf32>
    %391 = vector.broadcast %390 : vector<2x1xf32> to vector<2x28xf32>
    %392 = vector.broadcast %cst_97 : f32 to vector<2x28xf32>
    %393 = arith.select %389, %391, %392 : vector<2x28xi1>, vector<2x28xf32>
    %394 = arith.addf %379, %393 : vector<2x28xf32>
    %395 = vector.extract_strided_slice %47 {offsets = [0, 5888], sizes = [2, 256], strides = [1, 1]} : vector<2x7168xf32> to vector<2x256xf32>
    %c23 = arith.constant 23 : index
    %c0_98 = arith.constant 0 : index
    %396 = vector.load %arg11[%c23, %c0_98] : memref<28x256xf32, #tpu.memory_space<vmem>>, vector<1x256xf32>
    %397 = vector.broadcast %396 : vector<1x256xf32> to vector<2x256xf32>
    %398 = arith.mulf %395, %397 : vector<2x256xf32>
    %cst_99 = arith.constant dense<0.000000e+00> : vector<2xf32>
    %399 = vector.multi_reduction <add>, %398, %cst_99 [1] : vector<2x256xf32> to vector<2xf32>
    %400 = vector.shape_cast %399 : vector<2xf32> to vector<2x1xf32>
    %c23_i32 = arith.constant 23 : i32
    %401 = vector.broadcast %c23_i32 : i32 to vector<1x28xi32>
    %402 = arith.cmpi eq, %48, %401 : vector<1x28xi32>
    %cst_100 = arith.constant 0.000000e+00 : f32
    %403 = vector.shape_cast %402 : vector<1x28xi1> to vector<1x28xi1>
    %404 = vector.broadcast %403 : vector<1x28xi1> to vector<2x28xi1>
    %405 = vector.shape_cast %400 : vector<2x1xf32> to vector<2x1xf32>
    %406 = vector.broadcast %405 : vector<2x1xf32> to vector<2x28xf32>
    %407 = vector.broadcast %cst_100 : f32 to vector<2x28xf32>
    %408 = arith.select %404, %406, %407 : vector<2x28xi1>, vector<2x28xf32>
    %409 = arith.addf %394, %408 : vector<2x28xf32>
    %410 = vector.extract_strided_slice %47 {offsets = [0, 6144], sizes = [2, 256], strides = [1, 1]} : vector<2x7168xf32> to vector<2x256xf32>
    %c24 = arith.constant 24 : index
    %c0_101 = arith.constant 0 : index
    %411 = vector.load %arg11[%c24, %c0_101] : memref<28x256xf32, #tpu.memory_space<vmem>>, vector<1x256xf32>
    %412 = vector.broadcast %411 : vector<1x256xf32> to vector<2x256xf32>
    %413 = arith.mulf %410, %412 : vector<2x256xf32>
    %cst_102 = arith.constant dense<0.000000e+00> : vector<2xf32>
    %414 = vector.multi_reduction <add>, %413, %cst_102 [1] : vector<2x256xf32> to vector<2xf32>
    %415 = vector.shape_cast %414 : vector<2xf32> to vector<2x1xf32>
    %c24_i32 = arith.constant 24 : i32
    %416 = vector.broadcast %c24_i32 : i32 to vector<1x28xi32>
    %417 = arith.cmpi eq, %48, %416 : vector<1x28xi32>
    %cst_103 = arith.constant 0.000000e+00 : f32
    %418 = vector.shape_cast %417 : vector<1x28xi1> to vector<1x28xi1>
    %419 = vector.broadcast %418 : vector<1x28xi1> to vector<2x28xi1>
    %420 = vector.shape_cast %415 : vector<2x1xf32> to vector<2x1xf32>
    %421 = vector.broadcast %420 : vector<2x1xf32> to vector<2x28xf32>
    %422 = vector.broadcast %cst_103 : f32 to vector<2x28xf32>
    %423 = arith.select %419, %421, %422 : vector<2x28xi1>, vector<2x28xf32>
    %424 = arith.addf %409, %423 : vector<2x28xf32>
    %425 = vector.extract_strided_slice %47 {offsets = [0, 6400], sizes = [2, 256], strides = [1, 1]} : vector<2x7168xf32> to vector<2x256xf32>
    %c25 = arith.constant 25 : index
    %c0_104 = arith.constant 0 : index
    %426 = vector.load %arg11[%c25, %c0_104] : memref<28x256xf32, #tpu.memory_space<vmem>>, vector<1x256xf32>
    %427 = vector.broadcast %426 : vector<1x256xf32> to vector<2x256xf32>
    %428 = arith.mulf %425, %427 : vector<2x256xf32>
    %cst_105 = arith.constant dense<0.000000e+00> : vector<2xf32>
    %429 = vector.multi_reduction <add>, %428, %cst_105 [1] : vector<2x256xf32> to vector<2xf32>
    %430 = vector.shape_cast %429 : vector<2xf32> to vector<2x1xf32>
    %c25_i32 = arith.constant 25 : i32
    %431 = vector.broadcast %c25_i32 : i32 to vector<1x28xi32>
    %432 = arith.cmpi eq, %48, %431 : vector<1x28xi32>
    %cst_106 = arith.constant 0.000000e+00 : f32
    %433 = vector.shape_cast %432 : vector<1x28xi1> to vector<1x28xi1>
    %434 = vector.broadcast %433 : vector<1x28xi1> to vector<2x28xi1>
    %435 = vector.shape_cast %430 : vector<2x1xf32> to vector<2x1xf32>
    %436 = vector.broadcast %435 : vector<2x1xf32> to vector<2x28xf32>
    %437 = vector.broadcast %cst_106 : f32 to vector<2x28xf32>
    %438 = arith.select %434, %436, %437 : vector<2x28xi1>, vector<2x28xf32>
    %439 = arith.addf %424, %438 : vector<2x28xf32>
    %440 = vector.extract_strided_slice %47 {offsets = [0, 6656], sizes = [2, 256], strides = [1, 1]} : vector<2x7168xf32> to vector<2x256xf32>
    %c26 = arith.constant 26 : index
    %c0_107 = arith.constant 0 : index
    %441 = vector.load %arg11[%c26, %c0_107] : memref<28x256xf32, #tpu.memory_space<vmem>>, vector<1x256xf32>
    %442 = vector.broadcast %441 : vector<1x256xf32> to vector<2x256xf32>
    %443 = arith.mulf %440, %442 : vector<2x256xf32>
    %cst_108 = arith.constant dense<0.000000e+00> : vector<2xf32>
    %444 = vector.multi_reduction <add>, %443, %cst_108 [1] : vector<2x256xf32> to vector<2xf32>
    %445 = vector.shape_cast %444 : vector<2xf32> to vector<2x1xf32>
    %c26_i32 = arith.constant 26 : i32
    %446 = vector.broadcast %c26_i32 : i32 to vector<1x28xi32>
    %447 = arith.cmpi eq, %48, %446 : vector<1x28xi32>
    %cst_109 = arith.constant 0.000000e+00 : f32
    %448 = vector.shape_cast %447 : vector<1x28xi1> to vector<1x28xi1>
    %449 = vector.broadcast %448 : vector<1x28xi1> to vector<2x28xi1>
    %450 = vector.shape_cast %445 : vector<2x1xf32> to vector<2x1xf32>
    %451 = vector.broadcast %450 : vector<2x1xf32> to vector<2x28xf32>
    %452 = vector.broadcast %cst_109 : f32 to vector<2x28xf32>
    %453 = arith.select %449, %451, %452 : vector<2x28xi1>, vector<2x28xf32>
    %454 = arith.addf %439, %453 : vector<2x28xf32>
    %455 = vector.extract_strided_slice %47 {offsets = [0, 6912], sizes = [2, 256], strides = [1, 1]} : vector<2x7168xf32> to vector<2x256xf32>
    %c27 = arith.constant 27 : index
    %c0_110 = arith.constant 0 : index
    %456 = vector.load %arg11[%c27, %c0_110] : memref<28x256xf32, #tpu.memory_space<vmem>>, vector<1x256xf32>
    %457 = vector.broadcast %456 : vector<1x256xf32> to vector<2x256xf32>
    %458 = arith.mulf %455, %457 : vector<2x256xf32>
    %cst_111 = arith.constant dense<0.000000e+00> : vector<2xf32>
    %459 = vector.multi_reduction <add>, %458, %cst_111 [1] : vector<2x256xf32> to vector<2xf32>
    %460 = vector.shape_cast %459 : vector<2xf32> to vector<2x1xf32>
    %c27_i32 = arith.constant 27 : i32
    %461 = vector.broadcast %c27_i32 : i32 to vector<1x28xi32>
    %462 = arith.cmpi eq, %48, %461 : vector<1x28xi32>
    %cst_112 = arith.constant 0.000000e+00 : f32
    %463 = vector.shape_cast %462 : vector<1x28xi1> to vector<1x28xi1>
    %464 = vector.broadcast %463 : vector<1x28xi1> to vector<2x28xi1>
    %465 = vector.shape_cast %460 : vector<2x1xf32> to vector<2x1xf32>
    %466 = vector.broadcast %465 : vector<2x1xf32> to vector<2x28xf32>
    %467 = vector.broadcast %cst_112 : f32 to vector<2x28xf32>
    %468 = arith.select %464, %466, %467 : vector<2x28xi1>, vector<2x28xf32>
    %469 = arith.addf %454, %468 : vector<2x28xf32>
    %c0_113 = arith.constant 0 : index
    %c0_114 = arith.constant 0 : index
    %470 = vector.load %arg12[%c0_113, %c0_114] : memref<1x28xf32, #tpu.memory_space<vmem>>, vector<1x28xf32>
    %471 = vector.broadcast %470 : vector<1x28xf32> to vector<2x28xf32>
    %472 = arith.addf %469, %471 : vector<2x28xf32>
    %473 = math.absf %472 : vector<2x28xf32>
    %cst_115 = arith.constant 0x7F800000 : f32
    %474 = vector.broadcast %cst_115 : f32 to vector<2x28xf32>
    %475 = arith.cmpf olt, %473, %474 : vector<2x28xf32>
    %cst_116 = arith.constant 1.000000e+00 : f32
    %cst_117 = arith.constant 0x7FC00000 : f32
    %476 = vector.broadcast %cst_116 : f32 to vector<2x28xf32>
    %477 = vector.broadcast %cst_117 : f32 to vector<2x28xf32>
    %478 = arith.select %475, %476, %477 : vector<2x28xi1>, vector<2x28xf32>
    %479 = arith.mulf %31, %478 : vector<2x28xf32>
    %c0_118 = arith.constant 0 : index
    %c0_119 = arith.constant 0 : index
    %480 = vector.load %arg13[%c0_118, %c0_119] : memref<64x28xbf16, #tpu.memory_space<vmem>>, vector<64x28xbf16>
    %cst_120 = arith.constant dense<0.000000e+00> : vector<2x28xf32>
    %481 = tpu.matmul %1, %480, %cst_120 {dimension_numbers = #tpu.dot_dimension_numbers<[1], [0], [0], [1], [0, 0, 1, 1], [], []>} : vector<2x64xbf16>, vector<64x28xbf16>, vector<2x28xf32> -> vector<2x28xf32>
    %482 = arith.mulf %479, %481 : vector<2x28xf32>
    %c0_121 = arith.constant 0 : index
    %c0_122 = arith.constant 0 : index
    %483 = vector.load %arg14[%c0_121, %c0_122] : memref<1x28xf32, #tpu.memory_space<vmem>>, vector<1x28xf32>
    %484 = vector.broadcast %483 : vector<1x28xf32> to vector<2x28xf32>
    %485 = arith.addf %482, %484 : vector<2x28xf32>
    %486 = arith.negf %485 : vector<2x28xf32>
    %487 = math.exp %486 : vector<2x28xf32>
    %cst_123 = arith.constant 1.000000e+00 : f32
    %488 = vector.broadcast %cst_123 : f32 to vector<2x28xf32>
    %489 = arith.addf %488, %487 : vector<2x28xf32>
    %490 = arith.divf %488, %489 : vector<2x28xf32>
    %c0_124 = arith.constant 0 : index
    %c0_125 = arith.constant 0 : index
    %491 = vector.load %arg15[%c0_124, %c0_125] : memref<28x28xf32, #tpu.memory_space<vmem>>, vector<28x28xf32>
    %cst_126 = arith.constant dense<0.000000e+00> : vector<2x28xf32>
    %492 = tpu.matmul %490, %491, %cst_126 {dimension_numbers = #tpu.dot_dimension_numbers<[1], [0], [0], [1], [0, 0, 1, 1], [], []>} : vector<2x28xf32>, vector<28x28xf32>, vector<2x28xf32> -> vector<2x28xf32>
    %c0_127 = arith.constant 0 : index
    %c0_128 = arith.constant 0 : index
    %493 = vector.load %arg16[%c0_127, %c0_128] : memref<1x28xf32, #tpu.memory_space<vmem>>, vector<1x28xf32>
    %494 = vector.broadcast %493 : vector<1x28xf32> to vector<2x28xf32>
    %495 = arith.addf %492, %494 : vector<2x28xf32>
    %c0_129 = arith.constant 0 : index
    %c0_130 = arith.constant 0 : index
    %496 = vector.load %arg17[%c0_129, %c0_130] : memref<28x28xf32, #tpu.memory_space<vmem>>, vector<28x28xf32>
    %cst_131 = arith.constant dense<0.000000e+00> : vector<2x28xf32>
    %497 = tpu.matmul %495, %496, %cst_131 {dimension_numbers = #tpu.dot_dimension_numbers<[1], [0], [0], [1], [0, 0, 1, 1], [], []>} : vector<2x28xf32>, vector<28x28xf32>, vector<2x28xf32> -> vector<2x28xf32>
    %c0_132 = arith.constant 0 : index
    %c0_133 = arith.constant 0 : index
    %498 = vector.load %arg18[%c0_132, %c0_133] : memref<1x28xf32, #tpu.memory_space<vmem>>, vector<1x28xf32>
    %499 = vector.broadcast %498 : vector<1x28xf32> to vector<2x28xf32>
    %500 = arith.addf %497, %499 : vector<2x28xf32>
    %c0_134 = arith.constant 0 : index
    %c0_135 = arith.constant 0 : index
    %501 = vector.load %arg2[%c0_134, %c0_135] : memref<2x1xf32, #tpu.memory_space<vmem>>, vector<2x1xf32>
    %502 = vector.broadcast %501 : vector<2x1xf32> to vector<2x28xf32>
    %503 = arith.addf %500, %502 : vector<2x28xf32>
    %c0_136 = arith.constant 0 : index
    %c0_137 = arith.constant 0 : index
    %504 = vector.load %arg3[%c0_136, %c0_137] : memref<2x1xf32, #tpu.memory_space<vmem>>, vector<2x1xf32>
    %505 = vector.broadcast %504 : vector<2x1xf32> to vector<2x28xf32>
    %506 = arith.addf %503, %505 : vector<2x28xf32>
    %cst_138 = arith.constant 0.000000e+00 : f32
    %507 = vector.broadcast %cst_138 : f32 to vector<2x72xf32>
    %508 = tpu.concatenate %506, %478, %507 in 1 : vector<2x28xf32>, vector<2x28xf32>, vector<2x72xf32> -> vector<2x128xf32>
    %c0_139 = arith.constant 0 : index
    %c0_140 = arith.constant 0 : index
    %509 = vector.load %arg19[%c0_139, %c0_140] : memref<2x128xf32, #tpu.memory_space<vmem>>, vector<2x128xf32>
    tpu.vector_store %arg19[%c0_139, %c0_140], %508 {strides = array<i32>} : memref<2x128xf32, #tpu.memory_space<vmem>>, vector<2x128xf32>,
    return
  }
}

</mosaic_0001>

<llo_original>
// kernel: tpu_custom_call.1
$region0: #{tpu_custom_call.1}
  #allocation0 [shape = 'u32[]', space=smem, size = 0x4, offset = 0x4, fixed_abs, tag = 'smem constant byte address 0x4 - core index']
  #allocation1 [shape = 'u32[144,128]{1,0:T(1,128)}', space=vmem, size = 0x12000, scoped, tag = 'internal scratch']
  %s0 = inlined_call_operand.vmem [shape: f32[2,64], index: 0, kind: input, shape index: {}]
  %s1 = inlined_call_operand.vmem [shape: f32[2,2], index: 1, kind: input, shape index: {}]
  %s2 = inlined_call_operand.vmem [shape: f32[2,1], index: 2, kind: input, shape index: {}]
  %s3 = inlined_call_operand.vmem [shape: f32[2,1], index: 3, kind: input, shape index: {}]
  %s4 = inlined_call_operand.vmem [shape: f32[2,256], index: 4, kind: input, shape index: {}]
  %s5 = inlined_call_operand.vmem [shape: f32[1,256], index: 5, kind: input, shape index: {}]
  %s6 = inlined_call_operand.vmem [shape: f32[256,28], index: 6, kind: input, shape index: {}]
  %s7 = inlined_call_operand.vmem [shape: f32[1,28], index: 7, kind: input, shape index: {}]
  %s8 = inlined_call_operand.hbm [shape: bf16[64,7168], index: 8, kind: input, shape index: {}]
  %s9 = inlined_call_operand.vmem [shape: f32[2,7168], index: 9, kind: input, shape index: {}]
  %s10 = inlined_call_operand.vmem [shape: f32[1,7168], index: 10, kind: input, shape index: {}]
  %s11 = inlined_call_operand.vmem [shape: f32[28,256], index: 11, kind: input, shape index: {}]
  %s12 = inlined_call_operand.vmem [shape: f32[1,28], index: 12, kind: input, shape index: {}]
  %s13 = inlined_call_operand.vmem [shape: bf16[64,28], index: 13, kind: input, shape index: {}]
  %s14 = inlined_call_operand.vmem [shape: f32[1,28], index: 14, kind: input, shape index: {}]
  %s15 = inlined_call_operand.vmem [shape: f32[28,28], index: 15, kind: input, shape index: {}]
  %s16 = inlined_call_operand.vmem [shape: f32[1,28], index: 16, kind: input, shape index: {}]
  %s17 = inlined_call_operand.vmem [shape: f32[28,28], index: 17, kind: input, shape index: {}]
  %s18 = inlined_call_operand.vmem [shape: f32[1,28], index: 18, kind: input, shape index: {}]
  %s19 = inlined_call_operand.hbm [shape: f32[2,128], index: 19, kind: output, shape index: {}]
  %s20 = sld [smem:[#allocation0]]
  $region90: #{tpu_custom_call.1} parent=0
    _
  %s22 = ssub.s32 1, %s20
  %s23 = scalar_select 0, %s22, %s20
  $region1: #{tpu_custom_call.1} parent=0
    #allocation2 [shape = 'u8[917504]{0}', space=vmem, size = 0xe0000, scoped, tag = 'input window, operand 8, single buffered']
    #allocation3 [shape = 's32[1]{0}', space=sflag, size = 0x4, scoped, tag = 'scoped memory for tpu_custom_call.1']
    #allocation4 [shape = 's32[1]{0}', space=sflag, size = 0x4, scoped, tag = 'scoped memory for tpu_custom_call.1']
    #allocation5 [shape = 'u8[1024]{0}', space=vmem, size = 0x400, scoped, tag = 'output window, operand 0, single buffered']
    %24 = vsyncpa [#allocation3], 0
    %25 = vsyncpa [#allocation4], 0
    // Predicated region
    $region2: #{tpu_custom_call.1} parent=1 // pred_check
      _
    $region3: #{tpu_custom_call.1} parent=1 // pred_check_branch
      %27 = sbr.rel (0) target = $region5
    $region4: #{tpu_custom_call.1} parent=1 // pred_region
      _
    $region5: #{tpu_custom_call.1} parent=1 // pred_fallthru
      _
    // Predicated region
    $region6: #{tpu_custom_call.1} parent=1 // pred_check
      _
    $region7: #{tpu_custom_call.1} parent=1 // pred_check_branch
      %29 = sbr.rel (0) target = $region9
    $region8: #{tpu_custom_call.1} parent=1 // pred_region
      _
    $region9: #{tpu_custom_call.1} parent=1 // pred_fallthru
      _
    // Predicated region
    $region10: #{tpu_custom_call.1} parent=1 // pred_check
      _
    $region11: #{tpu_custom_call.1} parent=1 // pred_check_branch
      %31 = sbr.rel (0) target = $region13
    $region12: #{tpu_custom_call.1} parent=1 // pred_region
      _
    $region13: #{tpu_custom_call.1} parent=1 // pred_fallthru
      _
    // Predicated region
    $region14: #{tpu_custom_call.1} parent=1 // pred_check
      _
    $region15: #{tpu_custom_call.1} parent=1 // pred_check_branch
      %33 = sbr.rel (0) target = $region17
    $region16: #{tpu_custom_call.1} parent=1 // pred_region
      _
    $region17: #{tpu_custom_call.1} parent=1 // pred_fallthru
      _
    // Predicated region
    $region18: #{tpu_custom_call.1} parent=1 // pred_check
      _
    $region19: #{tpu_custom_call.1} parent=1 // pred_check_branch
      %35 = sbr.rel (0) target = $region21
    $region20: #{tpu_custom_call.1} parent=1 // pred_region
      _
    $region21: #{tpu_custom_call.1} parent=1 // pred_fallthru
      _
    // Predicated region
    $region22: #{tpu_custom_call.1} parent=1 // pred_check
      _
    $region23: #{tpu_custom_call.1} parent=1 // pred_check_branch
      %37 = sbr.rel (0) target = $region25
    $region24: #{tpu_custom_call.1} parent=1 // pred_region
      _
    $region25: #{tpu_custom_call.1} parent=1 // pred_fallthru
      _
    // Predicated region
    $region26: #{tpu_custom_call.1} parent=1 // pred_check
      _
    $region27: #{tpu_custom_call.1} parent=1 // pred_check_branch
      %39 = sbr.rel (0) target = $region29
    $region28: #{tpu_custom_call.1} parent=1 // pred_region
      _
    $region29: #{tpu_custom_call.1} parent=1 // pred_fallthru
      _
    // Predicated region
    $region30: #{tpu_custom_call.1} parent=1 // pred_check
      _
    $region31: #{tpu_custom_call.1} parent=1 // pred_check_branch
      %41 = sbr.rel (0) target = $region33
    $region32: #{tpu_custom_call.1} parent=1 // pred_region
      _
    $region33: #{tpu_custom_call.1} parent=1 // pred_fallthru
      _
    // Predicated region
    $region34: #{tpu_custom_call.1} parent=1 // pred_check
      _
    $region35: #{tpu_custom_call.1} parent=1 // pred_check_branch
      %43 = sbr.rel (0) target = $region37
    $region36: #{tpu_custom_call.1} parent=1 // pred_region
      %s45 = ssub.s32 28672, 28672
      %46 = vsyncadd [#allocation3], %s45
      %s47 = sshll.u32 [#allocation2], 4
      %s48 = int_to_ptr.vmem [resolvable:$true] %s47
      %53 = dma.hbm_to_vmem [thread:$0]  %s8, 28672, %s48, [#allocation3], 3584, 3584, 224
    $region37: #{tpu_custom_call.1} parent=1 // pred_fallthru
      _
    // Predicated region
    $region38: #{tpu_custom_call.1} parent=1 // pred_check
      _
    $region39: #{tpu_custom_call.1} parent=1 // pred_check_branch
      %55 = sbr.rel (0) target = $region41
    $region40: #{tpu_custom_call.1} parent=1 // pred_region
      _
    $region41: #{tpu_custom_call.1} parent=1 // pred_fallthru
      _
    // Predicated region
    $region42: #{tpu_custom_call.1} parent=1 // pred_check
      _
    $region43: #{tpu_custom_call.1} parent=1 // pred_check_branch
      %57 = sbr.rel (0) target = $region45
    $region44: #{tpu_custom_call.1} parent=1 // pred_region
      _
    $region45: #{tpu_custom_call.1} parent=1 // pred_fallthru
      _
    // Predicated region
    $region46: #{tpu_custom_call.1} parent=1 // pred_check
      _
    $region47: #{tpu_custom_call.1} parent=1 // pred_check_branch
      %59 = sbr.rel (0) target = $region49
    $region48: #{tpu_custom_call.1} parent=1 // pred_region
      _
    $region49: #{tpu_custom_call.1} parent=1 // pred_fallthru
      _
    // Predicated region
    $region50: #{tpu_custom_call.1} parent=1 // pred_check
      _
    $region51: #{tpu_custom_call.1} parent=1 // pred_check_branch
      %61 = sbr.rel (0) target = $region53
    $region52: #{tpu_custom_call.1} parent=1 // pred_region
      _
    $region53: #{tpu_custom_call.1} parent=1 // pred_fallthru
      _
    // Predicated region
    $region54: #{tpu_custom_call.1} parent=1 // pred_check
      _
    $region55: #{tpu_custom_call.1} parent=1 // pred_check_branch
      %63 = sbr.rel (0) target = $region57
    $region56: #{tpu_custom_call.1} parent=1 // pred_region
      _
    $region57: #{tpu_custom_call.1} parent=1 // pred_fallthru
      _
    // Predicated region
    $region58: #{tpu_custom_call.1} parent=1 // pred_check
      _
    $region59: #{tpu_custom_call.1} parent=1 // pred_check_branch
      %65 = sbr.rel (0) target = $region61
    $region60: #{tpu_custom_call.1} parent=1 // pred_region
      _
    $region61: #{tpu_custom_call.1} parent=1 // pred_fallthru
      _
    // Predicated region
    $region62: #{tpu_custom_call.1} parent=1 // pred_check
      _
    $region63: #{tpu_custom_call.1} parent=1 // pred_check_branch
      %67 = sbr.rel (0) target = $region65
    $region64: #{tpu_custom_call.1} parent=1 // pred_region
      _
    $region65: #{tpu_custom_call.1} parent=1 // pred_fallthru
      _
    // Predicated region
    $region66: #{tpu_custom_call.1} parent=1 // pred_check
      _
    $region67: #{tpu_custom_call.1} parent=1 // pred_check_branch
      %69 = sbr.rel (0) target = $region69
    $region68: #{tpu_custom_call.1} parent=1 // pred_region
      _
    $region69: #{tpu_custom_call.1} parent=1 // pred_fallthru
      _
    // Predicated region
    $region70: #{tpu_custom_call.1} parent=1 // pred_check
      _
    $region71: #{tpu_custom_call.1} parent=1 // pred_check_branch
      %71 = sbr.rel (0) target = $region73
    $region72: #{tpu_custom_call.1} parent=1 // pred_region
      _
    $region73: #{tpu_custom_call.1} parent=1 // pred_fallthru
      _
    // Predicated region
    $region74: #{tpu_custom_call.1} parent=1 // pred_check
      _
    $region75: #{tpu_custom_call.1} parent=1 // pred_check_branch
      %73 = sbr.rel (0) target = $region77
    $region76: #{tpu_custom_call.1} parent=1 // pred_region
      _
    $region77: #{tpu_custom_call.1} parent=1 // pred_fallthru
      _
    // Predicated region
    $region78: #{tpu_custom_call.1} parent=1 // pred_check
      _
    $region79: #{tpu_custom_call.1} parent=1 // pred_check_branch
      %75 = sbr.rel (0) target = $region81
    $region80: #{tpu_custom_call.1} parent=1 // pred_region
      %76 = dma.done [#allocation3], 28672
    $region81: #{tpu_custom_call.1} parent=1 // pred_fallthru
      _
    %v78 = vld [vmem:[%s0] sm:$0x3]
    %v79 = vpack.c.bf16 %v78, %v78
    %v80 = vld [vmem:[%s1] sm:$0x3]
    %v81 = vld [vmem:[%s4] ss:$2 sm:$0x3]
    %83 = vset.pattern.permute.xlu0 0
    %84 = vperm.xlu0 %83, %v80
    %v85 = vpop.permute.xlu0 %84
    %v88 = vlaneseq
    %v89 = vshrl.u32 %v88, 7
    %v90 = vsub.s32 0, %v89
    %v91 = vrot.slane %v81, %v90
    %v92 = vlaneseq
    %v93 = vshrl.u32 %v92, 7
    %v94 = vsub.s32 1, %v93
    %v95 = vrot.slane %v81, %v94
    %v98 = vmul.f32 %v85, %v91
    %v99 = vmul.f32 %v85, %v95
    %s100 = scalar_lea.vmem %s4, 1
    %v101 = vld [vmem:[%s100] ss:$2 sm:$0x3]
    %102 = vset.pattern.permute.xlu0 1
    %103 = vperm.xlu0 %102, %v80
    %v104 = vpop.permute.xlu0 %103
    %v107 = vlaneseq
    %v108 = vshrl.u32 %v107, 7
    %v109 = vsub.s32 0, %v108
    %v110 = vrot.slane %v101, %v109
    %v111 = vlaneseq
    %v112 = vshrl.u32 %v111, 7
    %v113 = vsub.s32 1, %v112
    %v114 = vrot.slane %v101, %v113
    %v117 = vmul.f32 %v104, %v110
    %v118 = vmul.f32 %v104, %v114
    %v119 = vadd.f32 %v98, %v117
    %v120 = vadd.f32 %v99, %v118
    %v121 = vld [vmem:[%s5] sm:$0x3]
    %v123 = vlaneseq
    %v124 = vshrl.u32 %v123, 7
    %v125 = vsub.s32 0, %v124
    %v126 = vrot.slane %v121, %v125
    %v127 = vlaneseq
    %v128 = vshrl.u32 %v127, 7
    %v129 = vsub.s32 1, %v128
    %v130 = vrot.slane %v121, %v129
    %v133 = vadd.f32 %v119, %v126
    %v134 = vadd.f32 %v120, %v130
    %v135 = vmax.f32 %v133, 0.0
    %v136 = vmax.f32 %v134, 0.0
    %v137 = vld [vmem:[%s6] sm:$0xff]
    %v138 = vld [vmem:[%s6 + $0x8] sm:$0xff]
    %v139 = vld [vmem:[%s6 + $0x10] sm:$0xff]
    %v140 = vld [vmem:[%s6 + $0x18] sm:$0xff]
    %v141 = vld [vmem:[%s6 + $0x20] sm:$0xff]
    %v142 = vld [vmem:[%s6 + $0x28] sm:$0xff]
    %v143 = vld [vmem:[%s6 + $0x30] sm:$0xff]
    %v144 = vld [vmem:[%s6 + $0x38] sm:$0xff]
    %v145 = vld [vmem:[%s6 + $0x40] sm:$0xff]
    %v146 = vld [vmem:[%s6 + $0x48] sm:$0xff]
    %v147 = vld [vmem:[%s6 + $0x50] sm:$0xff]
    %v148 = vld [vmem:[%s6 + $0x58] sm:$0xff]
    %v149 = vld [vmem:[%s6 + $0x60] sm:$0xff]
    %v150 = vld [vmem:[%s6 + $0x68] sm:$0xff]
    %v151 = vld [vmem:[%s6 + $0x70] sm:$0xff]
    %v152 = vld [vmem:[%s6 + $0x78] sm:$0xff]
    %v153 = vld [vmem:[%s6 + $0x80] sm:$0xff]
    %v154 = vld [vmem:[%s6 + $0x88] sm:$0xff]
    %v155 = vld [vmem:[%s6 + $0x90] sm:$0xff]
    %v156 = vld [vmem:[%s6 + $0x98] sm:$0xff]
    %v157 = vld [vmem:[%s6 + $0xa0] sm:$0xff]
    %v158 = vld [vmem:[%s6 + $0xa8] sm:$0xff]
    %v159 = vld [vmem:[%s6 + $0xb0] sm:$0xff]
    %v160 = vld [vmem:[%s6 + $0xb8] sm:$0xff]
    %v161 = vld [vmem:[%s6 + $0xc0] sm:$0xff]
    %v162 = vld [vmem:[%s6 + $0xc8] sm:$0xff]
    %v163 = vld [vmem:[%s6 + $0xd0] sm:$0xff]
    %v164 = vld [vmem:[%s6 + $0xd8] sm:$0xff]
    %v165 = vld [vmem:[%s6 + $0xe0] sm:$0xff]
    %v166 = vld [vmem:[%s6 + $0xe8] sm:$0xff]
    %v167 = vld [vmem:[%s6 + $0xf0] sm:$0xff]
    %v168 = vld [vmem:[%s6 + $0xf8] sm:$0xff]
    %v169 = vld [vmem:[%s7] sm:$0x1]
    %v171 = vlaneseq
    %v172 = vshrl.u32 %v171, 7
    %v173 = vsub.s32 0, %v172
    %v174 = vrot.slane %v169, %v173
    %176 = vmatprep.subr.mxu0 0.0
    %177 = vmatpush1.msra.mxu0 %v137
    %178 = vmatprep.subr.mxu0 0.0
    %179 = vmatpush1.msra.mxu0 %v138
    %180 = vmatprep.subr.mxu0 0.0
    %181 = vmatpush1.msra.mxu0 %v139
    %182 = vmatprep.subr.mxu0 0.0
    %183 = vmatpush1.msra.mxu0 %v140
    %184 = vmatprep.subr.mxu0 0.0
    %185 = vmatpush1.msra.mxu0 %v141
    %186 = vmatprep.subr.mxu0 0.0
    %187 = vmatpush1.msra.mxu0 %v142
    %188 = vmatprep.subr.mxu0 0.0
    %189 = vmatpush1.msra.mxu0 %v143
    %190 = vmatprep.subr.mxu0 0.0
    %191 = vmatpush1.msra.mxu0 %v144
    %192 = vmatprep.subr.mxu0 0.0
    %193 = vmatpush1.msra.mxu0 %v145
    %194 = vmatprep.subr.mxu0 0.0
    %195 = vmatpush1.msra.mxu0 %v146
    %196 = vmatprep.subr.mxu0 0.0
    %197 = vmatpush1.msra.mxu0 %v147
    %198 = vmatprep.subr.mxu0 0.0
    %199 = vmatpush1.msra.mxu0 %v148
    %200 = vmatprep.subr.mxu0 0.0
    %201 = vmatpush1.msra.mxu0 %v149
    %202 = vmatprep.subr.mxu0 0.0
    %203 = vmatpush1.msra.mxu0 %v150
    %204 = vmatprep.subr.mxu0 0.0
    %205 = vmatpush1.msra.mxu0 %v151
    %206 = vmatprep.subr.mxu0 0.0
    %207 = vmatpush1.msra.mxu0 %v152
    %208 = vmatprep.subr.mxu0 0.0
    %209 = vmatpush1.msra.mxu0 %v153
    %210 = vmatprep.subr.mxu0 0.0
    %211 = vmatpush1.msra.mxu0 %v154
    %212 = vmatprep.subr.mxu0 0.0
    %213 = vmatpush1.msra.mxu0 %v155
    %214 = vmatprep.subr.mxu0 0.0
    %215 = vmatpush1.msra.mxu0 %v156
    %216 = vmatprep.subr.mxu0 0.0
    %217 = vmatpush1.msra.mxu0 %v157
    %218 = vmatprep.subr.mxu0 0.0
    %219 = vmatpush1.msra.mxu0 %v158
    %220 = vmatprep.subr.mxu0 0.0
    %221 = vmatpush1.msra.mxu0 %v159
    %222 = vmatprep.subr.mxu0 0.0
    %223 = vmatpush1.msra.mxu0 %v160
    %224 = vmatprep.subr.mxu0 0.0
    %225 = vmatpush1.msra.mxu0 %v161
    %226 = vmatprep.subr.mxu0 0.0
    %227 = vmatpush1.msra.mxu0 %v162
    %228 = vmatprep.subr.mxu0 0.0
    %229 = vmatpush1.msra.mxu0 %v163
    %230 = vmatprep.subr.mxu0 0.0
    %231 = vmatpush1.msra.mxu0 %v164
    %232 = vmatprep.subr.mxu0 0.0
    %233 = vmatpush1.msra.mxu0 %v165
    %234 = vmatprep.subr.mxu0 0.0
    %235 = vmatpush1.msra.mxu0 %v166
    %236 = vmatprep.subr.mxu0 0.0
    %237 = vmatpush1.msra.mxu0 %v167
    %238 = vmatprep.subr.mxu0 0.0
    %239 = vmatpush1.msra.mxu0 %v168
    %240 = vmatprep.mubr.f32.mxu0 %v136
    %241 = vmatmul.mubr.f32.gmra.mrb[0].mxu0 %v135
    %v242 = vpop.f32.mrb[0].mxu0
    %v243 = vadd.f32 %v174, %v242
    %v244 = vpop.f32.mrb[0].mxu0
    %245 = vdwg.mxu0
    %vm246 = vcmask 222208
    %v247 = vsel %vm246, %v243, -inf
    %248 = vmax.xlane.f32.xlu0 %v247
    %v249 = vpop.xlane.xlu0 %248
    %v250 = vsub.f32 %v243, %v249
    %v251 = vmul.f32 %v250, 1.442695
    %v252 = vpow.pop %v251
    %v253 = vsel %vm246, %v252, 0.0
    %254 = vadd.xlane.f32.xlu0 %v253
    %v255 = vpop.xlane.xlu0 %254
    %v256 = vrcp.pop %v255
    %v257 = vmul.f32 %v252, %v256
    %v258 = vld [vmem:[#allocation2] sm:$0xff]
    %v259 = vld [vmem:[#allocation2 + $0x8] sm:$0xff]
    %v260 = vld [vmem:[#allocation2 + $0x10] sm:$0xff]
    %v261 = vld [vmem:[#allocation2 + $0x18] sm:$0xff]
    %v262 = vld [vmem:[#allocation2 + $0x20] sm:$0xff]
    %v263 = vld [vmem:[#allocation2 + $0x28] sm:$0xff]
    %v264 = vld [vmem:[#allocation2 + $0x30] sm:$0xff]
    %v265 = vld [vmem:[#allocation2 + $0x38] sm:$0xff]
    %v266 = vld [vmem:[#allocation2 + $0x40] sm:$0xff]
    %v267 = vld [vmem:[#allocation2 + $0x48] sm:$0xff]
    %v268 = vld [vmem:[#allocation2 + $0x50] sm:$0xff]
    %v269 = vld [vmem:[#allocation2 + $0x58] sm:$0xff]
    %v270 = vld [vmem:[#allocation2 + $0x60] sm:$0xff]
    %v271 = vld [vmem:[#allocation2 + $0x68] sm:$0xff]
    %v272 = vld [vmem:[#allocation2 + $0x70] sm:$0xff]
    %v273 = vld [vmem:[#allocation2 + $0x78] sm:$0xff]
    %v274 = vld [vmem:[#allocation2 + $0x80] sm:$0xff]
    %v275 = vld [vmem:[#allocation2 + $0x88] sm:$0xff]
    %v276 = vld [vmem:[#allocation2 + $0x90] sm:$0xff]
    %v277 = vld [vmem:[#allocation2 + $0x98] sm:$0xff]
    %v278 = vld [vmem:[#allocation2 + $0xa0] sm:$0xff]
    %v279 = vld [vmem:[#allocation2 + $0xa8] sm:$0xff]
    %v280 = vld [vmem:[#allocation2 + $0xb0] sm:$0xff]
    %v281 = vld [vmem:[#allocation2 + $0xb8] sm:$0xff]
    %v282 = vld [vmem:[#allocation2 + $0xc0] sm:$0xff]
    %v283 = vld [vmem:[#allocation2 + $0xc8] sm:$0xff]
    %v284 = vld [vmem:[#allocation2 + $0xd0] sm:$0xff]
    %v285 = vld [vmem:[#allocation2 + $0xd8] sm:$0xff]
    %v286 = vld [vmem:[#allocation2 + $0xe0] sm:$0xff]
    %v287 = vld [vmem:[#allocation2 + $0xe8] sm:$0xff]
    %v288 = vld [vmem:[#allocation2 + $0xf0] sm:$0xff]
    %v289 = vld [vmem:[#allocation2 + $0xf8] sm:$0xff]
    %v290 = vld [vmem:[#allocation2 + $0x100] sm:$0xff]
    %v291 = vld [vmem:[#allocation2 + $0x108] sm:$0xff]
    %v292 = vld [vmem:[#allocation2 + $0x110] sm:$0xff]
    %v293 = vld [vmem:[#allocation2 + $0x118] sm:$0xff]
    %v294 = vld [vmem:[#allocation2 + $0x120] sm:$0xff]
    %v295 = vld [vmem:[#allocation2 + $0x128] sm:$0xff]
    %v296 = vld [vmem:[#allocation2 + $0x130] sm:$0xff]
    %v297 = vld [vmem:[#allocation2 + $0x138] sm:$0xff]
    %v298 = vld [vmem:[#allocation2 + $0x140] sm:$0xff]
    %v299 = vld [vmem:[#allocation2 + $0x148] sm:$0xff]
    %v300 = vld [vmem:[#allocation2 + $0x150] sm:$0xff]
    %v301 = vld [vmem:[#allocation2 + $0x158] sm:$0xff]
    %v302 = vld [vmem:[#allocation2 + $0x160] sm:$0xff]
    %v303 = vld [vmem:[#allocation2 + $0x168] sm:$0xff]
    %v304 = vld [vmem:[#allocation2 + $0x170] sm:$0xff]
    %v305 = vld [vmem:[#allocation2 + $0x178] sm:$0xff]
    %v306 = vld [vmem:[#allocation2 + $0x180] sm:$0xff]
    %v307 = vld [vmem:[#allocation2 + $0x188] sm:$0xff]
    %v308 = vld [vmem:[#allocation2 + $0x190] sm:$0xff]
    %v309 = vld [vmem:[#allocation2 + $0x198] sm:$0xff]
    %v310 = vld [vmem:[#allocation2 + $0x1a0] sm:$0xff]
    %v311 = vld [vmem:[#allocation2 + $0x1a8] sm:$0xff]
    %v312 = vld [vmem:[#allocation2 + $0x1b0] sm:$0xff]
    %v313 = vld [vmem:[#allocation2 + $0x1b8] sm:$0xff]
    %v314 = vld [vmem:[#allocation2 + $0x1c0] sm:$0xff]
    %v315 = vld [vmem:[#allocation2 + $0x1c8] sm:$0xff]
    %v316 = vld [vmem:[#allocation2 + $0x1d0] sm:$0xff]
    %v317 = vld [vmem:[#allocation2 + $0x1d8] sm:$0xff]
    %v318 = vld [vmem:[#allocation2 + $0x1e0] sm:$0xff]
    %v319 = vld [vmem:[#allocation2 + $0x1e8] sm:$0xff]
    %v320 = vld [vmem:[#allocation2 + $0x1f0] sm:$0xff]
    %v321 = vld [vmem:[#allocation2 + $0x1f8] sm:$0xff]
    %v322 = vld [vmem:[#allocation2 + $0x200] sm:$0xff]
    %v323 = vld [vmem:[#allocation2 + $0x208] sm:$0xff]
    %v324 = vld [vmem:[#allocation2 + $0x210] sm:$0xff]
    %v325 = vld [vmem:[#allocation2 + $0x218] sm:$0xff]
    %v326 = vld [vmem:[#allocation2 + $0x220] sm:$0xff]
    %v327 = vld [vmem:[#allocation2 + $0x228] sm:$0xff]
    %v328 = vld [vmem:[#allocation2 + $0x230] sm:$0xff]
    %v329 = vld [vmem:[#allocation2 + $0x238] sm:$0xff]
    %v330 = vld [vmem:[#allocation2 + $0x240] sm:$0xff]
    %v331 = vld [vmem:[#allocation2 + $0x248] sm:$0xff]
    %v332 = vld [vmem:[#allocation2 + $0x250] sm:$0xff]
    %v333 = vld [vmem:[#allocation2 + $0x258] sm:$0xff]
    %v334 = vld [vmem:[#allocation2 + $0x260] sm:$0xff]
    %v335 = vld [vmem:[#allocation2 + $0x268] sm:$0xff]
    %v336 = vld [vmem:[#allocation2 + $0x270] sm:$0xff]
    %v337 = vld [vmem:[#allocation2 + $0x278] sm:$0xff]
    %v338 = vld [vmem:[#allocation2 + $0x280] sm:$0xff]
    %v339 = vld [vmem:[#allocation2 + $0x288] sm:$0xff]
    %v340 = vld [vmem:[#allocation2 + $0x290] sm:$0xff]
    %v341 = vld [vmem:[#allocation2 + $0x298] sm:$0xff]
    %v342 = vld [vmem:[#allocation2 + $0x2a0] sm:$0xff]
    %v343 = vld [vmem:[#allocation2 + $0x2a8] sm:$0xff]
    %v344 = vld [vmem:[#allocation2 + $0x2b0] sm:$0xff]
    %v345 = vld [vmem:[#allocation2 + $0x2b8] sm:$0xff]
    %v346 = vld [vmem:[#allocation2 + $0x2c0] sm:$0xff]
    %v347 = vld [vmem:[#allocation2 + $0x2c8] sm:$0xff]
    %v348 = vld [vmem:[#allocation2 + $0x2d0] sm:$0xff]
    %v349 = vld [vmem:[#allocation2 + $0x2d8] sm:$0xff]
    %v350 = vld [vmem:[#allocation2 + $0x2e0] sm:$0xff]
    %v351 = vld [vmem:[#allocation2 + $0x2e8] sm:$0xff]
    %v352 = vld [vmem:[#allocation2 + $0x2f0] sm:$0xff]
    %v353 = vld [vmem:[#allocation2 + $0x2f8] sm:$0xff]
    %v354 = vld [vmem:[#allocation2 + $0x300] sm:$0xff]
    %v355 = vld [vmem:[#allocation2 + $0x308] sm:$0xff]
    %v356 = vld [vmem:[#allocation2 + $0x310] sm:$0xff]
    %v357 = vld [vmem:[#allocation2 + $0x318] sm:$0xff]
    %v358 = vld [vmem:[#allocation2 + $0x320] sm:$0xff]
    %v359 = vld [vmem:[#allocation2 + $0x328] sm:$0xff]
    %v360 = vld [vmem:[#allocation2 + $0x330] sm:$0xff]
    %v361 = vld [vmem:[#allocation2 + $0x338] sm:$0xff]
    %v362 = vld [vmem:[#allocation2 + $0x340] sm:$0xff]
    %v363 = vld [vmem:[#allocation2 + $0x348] sm:$0xff]
    %v364 = vld [vmem:[#allocation2 + $0x350] sm:$0xff]
    %v365 = vld [vmem:[#allocation2 + $0x358] sm:$0xff]
    %v366 = vld [vmem:[#allocation2 + $0x360] sm:$0xff]
    %v367 = vld [vmem:[#allocation2 + $0x368] sm:$0xff]
    %v368 = vld [vmem:[#allocation2 + $0x370] sm:$0xff]
    %v369 = vld [vmem:[#allocation2 + $0x378] sm:$0xff]
    %v370 = vld [vmem:[#allocation2 + $0x380] sm:$0xff]
    %v371 = vld [vmem:[#allocation2 + $0x388] sm:$0xff]
    %v372 = vld [vmem:[#allocation2 + $0x390] sm:$0xff]
    %v373 = vld [vmem:[#allocation2 + $0x398] sm:$0xff]
    %v374 = vld [vmem:[#allocation2 + $0x3a0] sm:$0xff]
    %v375 = vld [vmem:[#allocation2 + $0x3a8] sm:$0xff]
    %v376 = vld [vmem:[#allocation2 + $0x3b0] sm:$0xff]
    %v377 = vld [vmem:[#allocation2 + $0x3b8] sm:$0xff]
    %v378 = vld [vmem:[#allocation2 + $0x3c0] sm:$0xff]
    %v379 = vld [vmem:[#allocation2 + $0x3c8] sm:$0xff]
    %v380 = vld [vmem:[#allocation2 + $0x3d0] sm:$0xff]
    %v381 = vld [vmem:[#allocation2 + $0x3d8] sm:$0xff]
    %v382 = vld [vmem:[#allocation2 + $0x3e0] sm:$0xff]
    %v383 = vld [vmem:[#allocation2 + $0x3e8] sm:$0xff]
    %v384 = vld [vmem:[#allocation2 + $0x3f0] sm:$0xff]
    %v385 = vld [vmem:[#allocation2 + $0x3f8] sm:$0xff]
    %v386 = vld [vmem:[#allocation2 + $0x400] sm:$0xff]
    %v387 = vld [vmem:[#allocation2 + $0x408] sm:$0xff]
    %v388 = vld [vmem:[#allocation2 + $0x410] sm:$0xff]
    %v389 = vld [vmem:[#allocation2 + $0x418] sm:$0xff]
    %v390 = vld [vmem:[#allocation2 + $0x420] sm:$0xff]
    %v391 = vld [vmem:[#allocation2 + $0x428] sm:$0xff]
    %v392 = vld [vmem:[#allocation2 + $0x430] sm:$0xff]
    %v393 = vld [vmem:[#allocation2 + $0x438] sm:$0xff]
    %v394 = vld [vmem:[#allocation2 + $0x440] sm:$0xff]
    %v395 = vld [vmem:[#allocation2 + $0x448] sm:$0xff]
    %v396 = vld [vmem:[#allocation2 + $0x450] sm:$0xff]
    %v397 = vld [vmem:[#allocation2 + $0x458] sm:$0xff]
    %v398 = vld [vmem:[#allocation2 + $0x460] sm:$0xff]
    %v399 = vld [vmem:[#allocation2 + $0x468] sm:$0xff]
    %v400 = vld [vmem:[#allocation2 + $0x470] sm:$0xff]
    %v401 = vld [vmem:[#allocation2 + $0x478] sm:$0xff]
    %v402 = vld [vmem:[#allocation2 + $0x480] sm:$0xff]
    %v403 = vld [vmem:[#allocation2 + $0x488] sm:$0xff]
    %v404 = vld [vmem:[#allocation2 + $0x490] sm:$0xff]
    %v405 = vld [vmem:[#allocation2 + $0x498] sm:$0xff]
    %v406 = vld [vmem:[#allocation2 + $0x4a0] sm:$0xff]
    %v407 = vld [vmem:[#allocation2 + $0x4a8] sm:$0xff]
    %v408 = vld [vmem:[#allocation2 + $0x4b0] sm:$0xff]
    %v409 = vld [vmem:[#allocation2 + $0x4b8] sm:$0xff]
    %v410 = vld [vmem:[#allocation2 + $0x4c0] sm:$0xff]
    %v411 = vld [vmem:[#allocation2 + $0x4c8] sm:$0xff]
    %v412 = vld [vmem:[#allocation2 + $0x4d0] sm:$0xff]
    %v413 = vld [vmem:[#allocation2 + $0x4d8] sm:$0xff]
    %v414 = vld [vmem:[#allocation2 + $0x4e0] sm:$0xff]
    %v415 = vld [vmem:[#allocation2 + $0x4e8] sm:$0xff]
    %v416 = vld [vmem:[#allocation2 + $0x4f0] sm:$0xff]
    %v417 = vld [vmem:[#allocation2 + $0x4f8] sm:$0xff]
    %v418 = vld [vmem:[#allocation2 + $0x500] sm:$0xff]
    %v419 = vld [vmem:[#allocation2 + $0x508] sm:$0xff]
    %v420 = vld [vmem:[#allocation2 + $0x510] sm:$0xff]
    %v421 = vld [vmem:[#allocation2 + $0x518] sm:$0xff]
    %v422 = vld [vmem:[#allocation2 + $0x520] sm:$0xff]
    %v423 = vld [vmem:[#allocation2 + $0x528] sm:$0xff]
    %v424 = vld [vmem:[#allocation2 + $0x530] sm:$0xff]
    %v425 = vld [vmem:[#allocation2 + $0x538] sm:$0xff]
    %v426 = vld [vmem:[#allocation2 + $0x540] sm:$0xff]
    %v427 = vld [vmem:[#allocation2 + $0x548] sm:$0xff]
    %v428 = vld [vmem:[#allocation2 + $0x550] sm:$0xff]
    %v429 = vld [vmem:[#allocation2 + $0x558] sm:$0xff]
    %v430 = vld [vmem:[#allocation2 + $0x560] sm:$0xff]
    %v431 = vld [vmem:[#allocation2 + $0x568] sm:$0xff]
    %v432 = vld [vmem:[#allocation2 + $0x570] sm:$0xff]
    %v433 = vld [vmem:[#allocation2 + $0x578] sm:$0xff]
    %v434 = vld [vmem:[#allocation2 + $0x580] sm:$0xff]
    %v435 = vld [vmem:[#allocation2 + $0x588] sm:$0xff]
    %v436 = vld [vmem:[#allocation2 + $0x590] sm:$0xff]
    %v437 = vld [vmem:[#allocation2 + $0x598] sm:$0xff]
    %v438 = vld [vmem:[#allocation2 + $0x5a0] sm:$0xff]
    %v439 = vld [vmem:[#allocation2 + $0x5a8] sm:$0xff]
    %v440 = vld [vmem:[#allocation2 + $0x5b0] sm:$0xff]
    %v441 = vld [vmem:[#allocation2 + $0x5b8] sm:$0xff]
    %v442 = vld [vmem:[#allocation2 + $0x5c0] sm:$0xff]
    %v443 = vld [vmem:[#allocation2 + $0x5c8] sm:$0xff]
    %v444 = vld [vmem:[#allocation2 + $0x5d0] sm:$0xff]
    %v445 = vld [vmem:[#allocation2 + $0x5d8] sm:$0xff]
    %v446 = vld [vmem:[#allocation2 + $0x5e0] sm:$0xff]
    %v447 = vld [vmem:[#allocation2 + $0x5e8] sm:$0xff]
    %v448 = vld [vmem:[#allocation2 + $0x5f0] sm:$0xff]
    %v449 = vld [vmem:[#allocation2 + $0x5f8] sm:$0xff]
    %v450 = vld [vmem:[#allocation2 + $0x600] sm:$0xff]
    %v451 = vld [vmem:[#allocation2 + $0x608] sm:$0xff]
    %v452 = vld [vmem:[#allocation2 + $0x610] sm:$0xff]
    %v453 = vld [vmem:[#allocation2 + $0x618] sm:$0xff]
    %v454 = vld [vmem:[#allocation2 + $0x620] sm:$0xff]
    %v455 = vld [vmem:[#allocation2 + $0x628] sm:$0xff]
    %v456 = vld [vmem:[#allocation2 + $0x630] sm:$0xff]
    %v457 = vld [vmem:[#allocation2 + $0x638] sm:$0xff]
    %v458 = vld [vmem:[#allocation2 + $0x640] sm:$0xff]
    %v459 = vld [vmem:[#allocation2 + $0x648] sm:$0xff]
    %v460 = vld [vmem:[#allocation2 + $0x650] sm:$0xff]
    %v461 = vld [vmem:[#allocation2 + $0x658] sm:$0xff]
    %v462 = vld [vmem:[#allocation2 + $0x660] sm:$0xff]
    %v463 = vld [vmem:[#allocation2 + $0x668] sm:$0xff]
    %v464 = vld [vmem:[#allocation2 + $0x670] sm:$0xff]
    %v465 = vld [vmem:[#allocation2 + $0x678] sm:$0xff]
    %v466 = vld [vmem:[#allocation2 + $0x680] sm:$0xff]
    %v467 = vld [vmem:[#allocation2 + $0x688] sm:$0xff]
    %v468 = vld [vmem:[#allocation2 + $0x690] sm:$0xff]
    %v469 = vld [vmem:[#allocation2 + $0x698] sm:$0xff]
    %v470 = vld [vmem:[#allocation2 + $0x6a0] sm:$0xff]
    %v471 = vld [vmem:[#allocation2 + $0x6a8] sm:$0xff]
    %v472 = vld [vmem:[#allocation2 + $0x6b0] sm:$0xff]
    %v473 = vld [vmem:[#allocation2 + $0x6b8] sm:$0xff]
    %v474 = vld [vmem:[#allocation2 + $0x6c0] sm:$0xff]
    %v475 = vld [vmem:[#allocation2 + $0x6c8] sm:$0xff]
    %v476 = vld [vmem:[#allocation2 + $0x6d0] sm:$0xff]
    %v477 = vld [vmem:[#allocation2 + $0x6d8] sm:$0xff]
    %v478 = vld [vmem:[#allocation2 + $0x6e0] sm:$0xff]
    %v479 = vld [vmem:[#allocation2 + $0x6e8] sm:$0xff]
    %v480 = vld [vmem:[#allocation2 + $0x6f0] sm:$0xff]
    %v481 = vld [vmem:[#allocation2 + $0x6f8] sm:$0xff]
    %v482 = vld [vmem:[%s9] ss:$2 sm:$0xff]
    %s483 = scalar_lea.vmem %s9, 16
    %v484 = vld [vmem:[%s483] ss:$2 sm:$0xff]
    %s485 = scalar_lea.vmem %s9, 32
    %v486 = vld [vmem:[%s485] ss:$2 sm:$0xff]
    %s487 = scalar_lea.vmem %s9, 48
    %v488 = vld [vmem:[%s487] ss:$2 sm:$0xff]
    %s489 = scalar_lea.vmem %s9, 64
    %v490 = vld [vmem:[%s489] ss:$2 sm:$0xff]
    %s491 = scalar_lea.vmem %s9, 80
    %v492 = vld [vmem:[%s491] ss:$2 sm:$0xff]
    %s493 = scalar_lea.vmem %s9, 96
    %v494 = vld [vmem:[%s493] ss:$2 sm:$0xff]
    %v502 = vlaneseq
    %v503 = vshrl.u32 %v502, 7
    %v504 = vsub.s32 0, %v503
    %v505 = vrot.slane %v482, %v504
    %v506 = vlaneseq
    %v507 = vshrl.u32 %v506, 7
    %v508 = vsub.s32 1, %v507
    %v509 = vrot.slane %v482, %v508
    %v510 = vlaneseq
    %v511 = vshrl.u32 %v510, 7
    %v512 = vsub.s32 2, %v511
    %v513 = vrot.slane %v482, %v512
    %v514 = vlaneseq
    %v515 = vshrl.u32 %v514, 7
    %v516 = vsub.s32 3, %v515
    %v517 = vrot.slane %v482, %v516
    %v518 = vlaneseq
    %v519 = vshrl.u32 %v518, 7
    %v520 = vsub.s32 4, %v519
    %v521 = vrot.slane %v482, %v520
    %v522 = vlaneseq
    %v523 = vshrl.u32 %v522, 7
    %v524 = vsub.s32 5, %v523
    %v525 = vrot.slane %v482, %v524
    %v526 = vlaneseq
    %v527 = vshrl.u32 %v526, 7
    %v528 = vsub.s32 6, %v527
    %v529 = vrot.slane %v482, %v528
    %v530 = vlaneseq
    %v531 = vshrl.u32 %v530, 7
    %v532 = vsub.s32 7, %v531
    %v533 = vrot.slane %v482, %v532
    %v534 = vlaneseq
    %v535 = vshrl.u32 %v534, 7
    %v536 = vsub.s32 0, %v535
    %v537 = vrot.slane %v484, %v536
    %v538 = vlaneseq
    %v539 = vshrl.u32 %v538, 7
    %v540 = vsub.s32 1, %v539
    %v541 = vrot.slane %v484, %v540
    %v542 = vlaneseq
    %v543 = vshrl.u32 %v542, 7
    %v544 = vsub.s32 2, %v543
    %v545 = vrot.slane %v484, %v544
    %v546 = vlaneseq
    %v547 = vshrl.u32 %v546, 7
    %v548 = vsub.s32 3, %v547
    %v549 = vrot.slane %v484, %v548
    %v550 = vlaneseq
    %v551 = vshrl.u32 %v550, 7
    %v552 = vsub.s32 4, %v551
    %v553 = vrot.slane %v484, %v552
    %v554 = vlaneseq
    %v555 = vshrl.u32 %v554, 7
    %v556 = vsub.s32 5, %v555
    %v557 = vrot.slane %v484, %v556
    %v558 = vlaneseq
    %v559 = vshrl.u32 %v558, 7
    %v560 = vsub.s32 6, %v559
    %v561 = vrot.slane %v484, %v560
    %v562 = vlaneseq
    %v563 = vshrl.u32 %v562, 7
    %v564 = vsub.s32 7, %v563
    %v565 = vrot.slane %v484, %v564
    %v566 = vlaneseq
    %v567 = vshrl.u32 %v566, 7
    %v568 = vsub.s32 0, %v567
    %v569 = vrot.slane %v486, %v568
    %v570 = vlaneseq
    %v571 = vshrl.u32 %v570, 7
    %v572 = vsub.s32 1, %v571
    %v573 = vrot.slane %v486, %v572
    %v574 = vlaneseq
    %v575 = vshrl.u32 %v574, 7
    %v576 = vsub.s32 2, %v575
    %v577 = vrot.slane %v486, %v576
    %v578 = vlaneseq
    %v579 = vshrl.u32 %v578, 7
    %v580 = vsub.s32 3, %v579
    %v581 = vrot.slane %v486, %v580
    %v582 = vlaneseq
    %v583 = vshrl.u32 %v582, 7
    %v584 = vsub.s32 4, %v583
    %v585 = vrot.slane %v486, %v584
    %v586 = vlaneseq
    %v587 = vshrl.u32 %v586, 7
    %v588 = vsub.s32 5, %v587
    %v589 = vrot.slane %v486, %v588
    %v590 = vlaneseq
    %v591 = vshrl.u32 %v590, 7
    %v592 = vsub.s32 6, %v591
    %v593 = vrot.slane %v486, %v592
    %v594 = vlaneseq
    %v595 = vshrl.u32 %v594, 7
    %v596 = vsub.s32 7, %v595
    %v597 = vrot.slane %v486, %v596
    %v598 = vlaneseq
    %v599 = vshrl.u32 %v598, 7
    %v600 = vsub.s32 0, %v599
    %v601 = vrot.slane %v488, %v600
    %v602 = vlaneseq
    %v603 = vshrl.u32 %v602, 7
    %v604 = vsub.s32 1, %v603
    %v605 = vrot.slane %v488, %v604
    %v606 = vlaneseq
    %v607 = vshrl.u32 %v606, 7
    %v608 = vsub.s32 2, %v607
    %v609 = vrot.slane %v488, %v608
    %v610 = vlaneseq
    %v611 = vshrl.u32 %v610, 7
    %v612 = vsub.s32 3, %v611
    %v613 = vrot.slane %v488, %v612
    %v614 = vlaneseq
    %v615 = vshrl.u32 %v614, 7
    %v616 = vsub.s32 4, %v615
    %v617 = vrot.slane %v488, %v616
    %v618 = vlaneseq
    %v619 = vshrl.u32 %v618, 7
    %v620 = vsub.s32 5, %v619
    %v621 = vrot.slane %v488, %v620
    %v622 = vlaneseq
    %v623 = vshrl.u32 %v622, 7
    %v624 = vsub.s32 6, %v623
    %v625 = vrot.slane %v488, %v624
    %v626 = vlaneseq
    %v627 = vshrl.u32 %v626, 7
    %v628 = vsub.s32 7, %v627
    %v629 = vrot.slane %v488, %v628
    %v630 = vlaneseq
    %v631 = vshrl.u32 %v630, 7
    %v632 = vsub.s32 0, %v631
    %v633 = vrot.slane %v490, %v632
    %v634 = vlaneseq
    %v635 = vshrl.u32 %v634, 7
    %v636 = vsub.s32 1, %v635
    %v637 = vrot.slane %v490, %v636
    %v638 = vlaneseq
    %v639 = vshrl.u32 %v638, 7
    %v640 = vsub.s32 2, %v639
    %v641 = vrot.slane %v490, %v640
    %v642 = vlaneseq
    %v643 = vshrl.u32 %v642, 7
    %v644 = vsub.s32 3, %v643
    %v645 = vrot.slane %v490, %v644
    %v646 = vlaneseq
    %v647 = vshrl.u32 %v646, 7
    %v648 = vsub.s32 4, %v647
    %v649 = vrot.slane %v490, %v648
    %v650 = vlaneseq
    %v651 = vshrl.u32 %v650, 7
    %v652 = vsub.s32 5, %v651
    %v653 = vrot.slane %v490, %v652
    %v654 = vlaneseq
    %v655 = vshrl.u32 %v654, 7
    %v656 = vsub.s32 6, %v655
    %v657 = vrot.slane %v490, %v656
    %v658 = vlaneseq
    %v659 = vshrl.u32 %v658, 7
    %v660 = vsub.s32 7, %v659
    %v661 = vrot.slane %v490, %v660
    %v662 = vlaneseq
    %v663 = vshrl.u32 %v662, 7
    %v664 = vsub.s32 0, %v663
    %v665 = vrot.slane %v492, %v664
    %v666 = vlaneseq
    %v667 = vshrl.u32 %v666, 7
    %v668 = vsub.s32 1, %v667
    %v669 = vrot.slane %v492, %v668
    %v670 = vlaneseq
    %v671 = vshrl.u32 %v670, 7
    %v672 = vsub.s32 2, %v671
    %v673 = vrot.slane %v492, %v672
    %v674 = vlaneseq
    %v675 = vshrl.u32 %v674, 7
    %v676 = vsub.s32 3, %v675
    %v677 = vrot.slane %v492, %v676
    %v678 = vlaneseq
    %v679 = vshrl.u32 %v678, 7
    %v680 = vsub.s32 4, %v679
    %v681 = vrot.slane %v492, %v680
    %v682 = vlaneseq
    %v683 = vshrl.u32 %v682, 7
    %v684 = vsub.s32 5, %v683
    %v685 = vrot.slane %v492, %v684
    %v686 = vlaneseq
    %v687 = vshrl.u32 %v686, 7
    %v688 = vsub.s32 6, %v687
    %v689 = vrot.slane %v492, %v688
    %v690 = vlaneseq
    %v691 = vshrl.u32 %v690, 7
    %v692 = vsub.s32 7, %v691
    %v693 = vrot.slane %v492, %v692
    %v694 = vlaneseq
    %v695 = vshrl.u32 %v694, 7
    %v696 = vsub.s32 0, %v695
    %v697 = vrot.slane %v494, %v696
    %v698 = vlaneseq
    %v699 = vshrl.u32 %v698, 7
    %v700 = vsub.s32 1, %v699
    %v701 = vrot.slane %v494, %v700
    %v702 = vlaneseq
    %v703 = vshrl.u32 %v702, 7
    %v704 = vsub.s32 2, %v703
    %v705 = vrot.slane %v494, %v704
    %v706 = vlaneseq
    %v707 = vshrl.u32 %v706, 7
    %v708 = vsub.s32 3, %v707
    %v709 = vrot.slane %v494, %v708
    %v710 = vlaneseq
    %v711 = vshrl.u32 %v710, 7
    %v712 = vsub.s32 4, %v711
    %v713 = vrot.slane %v494, %v712
    %v714 = vlaneseq
    %v715 = vshrl.u32 %v714, 7
    %v716 = vsub.s32 5, %v715
    %v717 = vrot.slane %v494, %v716
    %v718 = vlaneseq
    %v719 = vshrl.u32 %v718, 7
    %v720 = vsub.s32 6, %v719
    %v721 = vrot.slane %v494, %v720
    %v722 = vlaneseq
    %v723 = vshrl.u32 %v722, 7
    %v724 = vsub.s32 7, %v723
    %v725 = vrot.slane %v494, %v724
    %v782 = vmul.f32 %v85, %v505
    %v783 = vmul.f32 %v85, %v509
    %v784 = vmul.f32 %v85, %v513
    %v785 = vmul.f32 %v85, %v517
    %v786 = vmul.f32 %v85, %v521
    %v787 = vmul.f32 %v85, %v525
    %v788 = vmul.f32 %v85, %v529
    %v789 = vmul.f32 %v85, %v533
    %v790 = vmul.f32 %v85, %v537
    %v791 = vmul.f32 %v85, %v541
    %v792 = vmul.f32 %v85, %v545
    %v793 = vmul.f32 %v85, %v549
    %v794 = vmul.f32 %v85, %v553
    %v795 = vmul.f32 %v85, %v557
    %v796 = vmul.f32 %v85, %v561
    %v797 = vmul.f32 %v85, %v565
    %v798 = vmul.f32 %v85, %v569
    %v799 = vmul.f32 %v85, %v573
    %v800 = vmul.f32 %v85, %v577
    %v801 = vmul.f32 %v85, %v581
    %v802 = vmul.f32 %v85, %v585
    %v803 = vmul.f32 %v85, %v589
    %v804 = vmul.f32 %v85, %v593
    %v805 = vmul.f32 %v85, %v597
    %v806 = vmul.f32 %v85, %v601
    %v807 = vmul.f32 %v85, %v605
    %v808 = vmul.f32 %v85, %v609
    %v809 = vmul.f32 %v85, %v613
    %v810 = vmul.f32 %v85, %v617
    %v811 = vmul.f32 %v85, %v621
    %v812 = vmul.f32 %v85, %v625
    %v813 = vmul.f32 %v85, %v629
    %v814 = vmul.f32 %v85, %v633
    %v815 = vmul.f32 %v85, %v637
    %v816 = vmul.f32 %v85, %v641
    %v817 = vmul.f32 %v85, %v645
    %v818 = vmul.f32 %v85, %v649
    %v819 = vmul.f32 %v85, %v653
    %v820 = vmul.f32 %v85, %v657
    %v821 = vmul.f32 %v85, %v661
    %v822 = vmul.f32 %v85, %v665
    %v823 = vmul.f32 %v85, %v669
    %v824 = vmul.f32 %v85, %v673
    %v825 = vmul.f32 %v85, %v677
    %v826 = vmul.f32 %v85, %v681
    %v827 = vmul.f32 %v85, %v685
    %v828 = vmul.f32 %v85, %v689
    %v829 = vmul.f32 %v85, %v693
    %v830 = vmul.f32 %v85, %v697
    %v831 = vmul.f32 %v85, %v701
    %v832 = vmul.f32 %v85, %v705
    %v833 = vmul.f32 %v85, %v709
    %v834 = vmul.f32 %v85, %v713
    %v835 = vmul.f32 %v85, %v717
    %v836 = vmul.f32 %v85, %v721
    %v837 = vmul.f32 %v85, %v725
    %v1062 = vunpack.c.l.b16 %v258
    %v1063 = vunpack.c.h.b16 %v258
    %v1064 = vunpack.c.l.b16 %v259
    %v1065 = vunpack.c.h.b16 %v259
    %v1066 = vunpack.c.l.b16 %v260
    %v1067 = vunpack.c.h.b16 %v260
    %v1068 = vunpack.c.l.b16 %v261
    %v1069 = vunpack.c.h.b16 %v261
    %v1070 = vunpack.c.l.b16 %v262
    %v1071 = vunpack.c.h.b16 %v262
    %v1072 = vunpack.c.l.b16 %v263
    %v1073 = vunpack.c.h.b16 %v263
    %v1074 = vunpack.c.l.b16 %v264
    %v1075 = vunpack.c.h.b16 %v264
    %v1076 = vunpack.c.l.b16 %v265
    %v1077 = vunpack.c.h.b16 %v265
    %v1078 = vunpack.c.l.b16 %v266
    %v1079 = vunpack.c.h.b16 %v266
    %v1080 = vunpack.c.l.b16 %v267
    %v1081 = vunpack.c.h.b16 %v267
    %v1082 = vunpack.c.l.b16 %v268
    %v1083 = vunpack.c.h.b16 %v268
    %v1084 = vunpack.c.l.b16 %v269
    %v1085 = vunpack.c.h.b16 %v269
    %v1086 = vunpack.c.l.b16 %v270
    %v1087 = vunpack.c.h.b16 %v270
    %v1088 = vunpack.c.l.b16 %v271
    %v1089 = vunpack.c.h.b16 %v271
    %v1090 = vunpack.c.l.b16 %v272
    %v1091 = vunpack.c.h.b16 %v272
    %v1092 = vunpack.c.l.b16 %v273
    %v1093 = vunpack.c.h.b16 %v273
    %v1094 = vunpack.c.l.b16 %v274
    %v1095 = vunpack.c.h.b16 %v274
    %v1096 = vunpack.c.l.b16 %v275
    %v1097 = vunpack.c.h.b16 %v275
    %v1098 = vunpack.c.l.b16 %v276
    %v1099 = vunpack.c.h.b16 %v276
    %v1100 = vunpack.c.l.b16 %v277
    %v1101 = vunpack.c.h.b16 %v277
    %v1102 = vunpack.c.l.b16 %v278
    %v1103 = vunpack.c.h.b16 %v278
    %v1104 = vunpack.c.l.b16 %v279
    %v1105 = vunpack.c.h.b16 %v279
    %v1106 = vunpack.c.l.b16 %v280
    %v1107 = vunpack.c.h.b16 %v280
    %v1108 = vunpack.c.l.b16 %v281
    %v1109 = vunpack.c.h.b16 %v281
    %v1110 = vunpack.c.l.b16 %v282
    %v1111 = vunpack.c.h.b16 %v282
    %v1112 = vunpack.c.l.b16 %v283
    %v1113 = vunpack.c.h.b16 %v283
    %v1114 = vunpack.c.l.b16 %v284
    %v1115 = vunpack.c.h.b16 %v284
    %v1116 = vunpack.c.l.b16 %v285
    %v1117 = vunpack.c.h.b16 %v285
    %v1118 = vunpack.c.l.b16 %v286
    %v1119 = vunpack.c.h.b16 %v286
    %v1120 = vunpack.c.l.b16 %v287
    %v1121 = vunpack.c.h.b16 %v287
    %v1122 = vunpack.c.l.b16 %v288
    %v1123 = vunpack.c.h.b16 %v288
    %v1124 = vunpack.c.l.b16 %v289
    %v1125 = vunpack.c.h.b16 %v289
    %v1126 = vunpack.c.l.b16 %v290
    %v1127 = vunpack.c.h.b16 %v290
    %v1128 = vunpack.c.l.b16 %v291
    %v1129 = vunpack.c.h.b16 %v291
    %v1130 = vunpack.c.l.b16 %v292
    %v1131 = vunpack.c.h.b16 %v292
    %v1132 = vunpack.c.l.b16 %v293
    %v1133 = vunpack.c.h.b16 %v293
    %v1134 = vunpack.c.l.b16 %v294
    %v1135 = vunpack.c.h.b16 %v294
    %v1136 = vunpack.c.l.b16 %v295
    %v1137 = vunpack.c.h.b16 %v295
    %v1138 = vunpack.c.l.b16 %v296
    %v1139 = vunpack.c.h.b16 %v296
    %v1140 = vunpack.c.l.b16 %v297
    %v1141 = vunpack.c.h.b16 %v297
    %v1142 = vunpack.c.l.b16 %v298
    %v1143 = vunpack.c.h.b16 %v298
    %v1144 = vunpack.c.l.b16 %v299
    %v1145 = vunpack.c.h.b16 %v299
    %v1146 = vunpack.c.l.b16 %v300
    %v1147 = vunpack.c.h.b16 %v300
    %v1148 = vunpack.c.l.b16 %v301
    %v1149 = vunpack.c.h.b16 %v301
    %v1150 = vunpack.c.l.b16 %v302
    %v1151 = vunpack.c.h.b16 %v302
    %v1152 = vunpack.c.l.b16 %v303
    %v1153 = vunpack.c.h.b16 %v303
    %v1154 = vunpack.c.l.b16 %v304
    %v1155 = vunpack.c.h.b16 %v304
    %v1156 = vunpack.c.l.b16 %v305
    %v1157 = vunpack.c.h.b16 %v305
    %v1158 = vunpack.c.l.b16 %v306
    %v1159 = vunpack.c.h.b16 %v306
    %v1160 = vunpack.c.l.b16 %v307
    %v1161 = vunpack.c.h.b16 %v307
    %v1162 = vunpack.c.l.b16 %v308
    %v1163 = vunpack.c.h.b16 %v308
    %v1164 = vunpack.c.l.b16 %v309
    %v1165 = vunpack.c.h.b16 %v309
    %v1166 = vunpack.c.l.b16 %v310
    %v1167 = vunpack.c.h.b16 %v310
    %v1168 = vunpack.c.l.b16 %v311
    %v1169 = vunpack.c.h.b16 %v311
    %v1170 = vunpack.c.l.b16 %v312
    %v1171 = vunpack.c.h.b16 %v312
    %v1172 = vunpack.c.l.b16 %v313
    %v1173 = vunpack.c.h.b16 %v313
    %v1174 = vunpack.c.l.b16 %v314
    %v1175 = vunpack.c.h.b16 %v314
    %v1176 = vunpack.c.l.b16 %v315
    %v1177 = vunpack.c.h.b16 %v315
    %v1178 = vunpack.c.l.b16 %v316
    %v1179 = vunpack.c.h.b16 %v316
    %v1180 = vunpack.c.l.b16 %v317
    %v1181 = vunpack.c.h.b16 %v317
    %v1182 = vunpack.c.l.b16 %v318
    %v1183 = vunpack.c.h.b16 %v318
    %v1184 = vunpack.c.l.b16 %v319
    %v1185 = vunpack.c.h.b16 %v319
    %v1186 = vunpack.c.l.b16 %v320
    %v1187 = vunpack.c.h.b16 %v320
    %v1188 = vunpack.c.l.b16 %v321
    %v1189 = vunpack.c.h.b16 %v321
    %v1190 = vunpack.c.l.b16 %v322
    %v1191 = vunpack.c.h.b16 %v322
    %v1192 = vunpack.c.l.b16 %v323
    %v1193 = vunpack.c.h.b16 %v323
    %v1194 = vunpack.c.l.b16 %v324
    %v1195 = vunpack.c.h.b16 %v324
    %v1196 = vunpack.c.l.b16 %v325
    %v1197 = vunpack.c.h.b16 %v325
    %v1198 = vunpack.c.l.b16 %v326
    %v1199 = vunpack.c.h.b16 %v326
    %v1200 = vunpack.c.l.b16 %v327
    %v1201 = vunpack.c.h.b16 %v327
    %v1202 = vunpack.c.l.b16 %v328
    %v1203 = vunpack.c.h.b16 %v328
    %v1204 = vunpack.c.l.b16 %v329
    %v1205 = vunpack.c.h.b16 %v329
    %v1206 = vunpack.c.l.b16 %v330
    %v1207 = vunpack.c.h.b16 %v330
    %v1208 = vunpack.c.l.b16 %v331
    %v1209 = vunpack.c.h.b16 %v331
    %v1210 = vunpack.c.l.b16 %v332
    %v1211 = vunpack.c.h.b16 %v332
    %v1212 = vunpack.c.l.b16 %v333
    %v1213 = vunpack.c.h.b16 %v333
    %v1214 = vunpack.c.l.b16 %v334
    %v1215 = vunpack.c.h.b16 %v334
    %v1216 = vunpack.c.l.b16 %v335
    %v1217 = vunpack.c.h.b16 %v335
    %v1218 = vunpack.c.l.b16 %v336
    %v1219 = vunpack.c.h.b16 %v336
    %v1220 = vunpack.c.l.b16 %v337
    %v1221 = vunpack.c.h.b16 %v337
    %v1222 = vunpack.c.l.b16 %v338
    %v1223 = vunpack.c.h.b16 %v338
    %v1224 = vunpack.c.l.b16 %v339
    %v1225 = vunpack.c.h.b16 %v339
    %v1226 = vunpack.c.l.b16 %v340
    %v1227 = vunpack.c.h.b16 %v340
    %v1228 = vunpack.c.l.b16 %v341
    %v1229 = vunpack.c.h.b16 %v341
    %v1230 = vunpack.c.l.b16 %v342
    %v1231 = vunpack.c.h.b16 %v342
    %v1232 = vunpack.c.l.b16 %v343
    %v1233 = vunpack.c.h.b16 %v343
    %v1234 = vunpack.c.l.b16 %v344
    %v1235 = vunpack.c.h.b16 %v344
    %v1236 = vunpack.c.l.b16 %v345
    %v1237 = vunpack.c.h.b16 %v345
    %v1238 = vunpack.c.l.b16 %v346
    %v1239 = vunpack.c.h.b16 %v346
    %v1240 = vunpack.c.l.b16 %v347
    %v1241 = vunpack.c.h.b16 %v347
    %v1242 = vunpack.c.l.b16 %v348
    %v1243 = vunpack.c.h.b16 %v348
    %v1244 = vunpack.c.l.b16 %v349
    %v1245 = vunpack.c.h.b16 %v349
    %v1246 = vunpack.c.l.b16 %v350
    %v1247 = vunpack.c.h.b16 %v350
    %v1248 = vunpack.c.l.b16 %v351
    %v1249 = vunpack.c.h.b16 %v351
    %v1250 = vunpack.c.l.b16 %v352
    %v1251 = vunpack.c.h.b16 %v352
    %v1252 = vunpack.c.l.b16 %v353
    %v1253 = vunpack.c.h.b16 %v353
    %v1254 = vunpack.c.l.b16 %v354
    %v1255 = vunpack.c.h.b16 %v354
    %v1256 = vunpack.c.l.b16 %v355
    %v1257 = vunpack.c.h.b16 %v355
    %v1258 = vunpack.c.l.b16 %v356
    %v1259 = vunpack.c.h.b16 %v356
    %v1260 = vunpack.c.l.b16 %v357
    %v1261 = vunpack.c.h.b16 %v357
    %v1262 = vunpack.c.l.b16 %v358
    %v1263 = vunpack.c.h.b16 %v358
    %v1264 = vunpack.c.l.b16 %v359
    %v1265 = vunpack.c.h.b16 %v359
    %v1266 = vunpack.c.l.b16 %v360
    %v1267 = vunpack.c.h.b16 %v360
    %v1268 = vunpack.c.l.b16 %v361
    %v1269 = vunpack.c.h.b16 %v361
    %v1270 = vunpack.c.l.b16 %v362
    %v1271 = vunpack.c.h.b16 %v362
    %v1272 = vunpack.c.l.b16 %v363
    %v1273 = vunpack.c.h.b16 %v363
    %v1274 = vunpack.c.l.b16 %v364
    %v1275 = vunpack.c.h.b16 %v364
    %v1276 = vunpack.c.l.b16 %v365
    %v1277 = vunpack.c.h.b16 %v365
    %v1278 = vunpack.c.l.b16 %v366
    %v1279 = vunpack.c.h.b16 %v366
    %v1280 = vunpack.c.l.b16 %v367
    %v1281 = vunpack.c.h.b16 %v367
    %v1282 = vunpack.c.l.b16 %v368
    %v1283 = vunpack.c.h.b16 %v368
    %v1284 = vunpack.c.l.b16 %v369
    %v1285 = vunpack.c.h.b16 %v369
    %v1286 = vunpack.c.l.b16 %v370
    %v1287 = vunpack.c.h.b16 %v370
    %v1288 = vunpack.c.l.b16 %v371
    %v1289 = vunpack.c.h.b16 %v371
    %v1290 = vunpack.c.l.b16 %v372
    %v1291 = vunpack.c.h.b16 %v372
    %v1292 = vunpack.c.l.b16 %v373
    %v1293 = vunpack.c.h.b16 %v373
    %v1294 = vunpack.c.l.b16 %v374
    %v1295 = vunpack.c.h.b16 %v374
    %v1296 = vunpack.c.l.b16 %v375
    %v1297 = vunpack.c.h.b16 %v375
    %v1298 = vunpack.c.l.b16 %v376
    %v1299 = vunpack.c.h.b16 %v376
    %v1300 = vunpack.c.l.b16 %v377
    %v1301 = vunpack.c.h.b16 %v377
    %v1302 = vunpack.c.l.b16 %v378
    %v1303 = vunpack.c.h.b16 %v378
    %v1304 = vunpack.c.l.b16 %v379
    %v1305 = vunpack.c.h.b16 %v379
    %v1306 = vunpack.c.l.b16 %v380
    %v1307 = vunpack.c.h.b16 %v380
    %v1308 = vunpack.c.l.b16 %v381
    %v1309 = vunpack.c.h.b16 %v381
    %v1310 = vunpack.c.l.b16 %v382
    %v1311 = vunpack.c.h.b16 %v382
    %v1312 = vunpack.c.l.b16 %v383
    %v1313 = vunpack.c.h.b16 %v383
    %v1314 = vunpack.c.l.b16 %v384
    %v1315 = vunpack.c.h.b16 %v384
    %v1316 = vunpack.c.l.b16 %v385
    %v1317 = vunpack.c.h.b16 %v385
    %v1318 = vunpack.c.l.b16 %v386
    %v1319 = vunpack.c.h.b16 %v386
    %v1320 = vunpack.c.l.b16 %v387
    %v1321 = vunpack.c.h.b16 %v387
    %v1322 = vunpack.c.l.b16 %v388
    %v1323 = vunpack.c.h.b16 %v388
    %v1324 = vunpack.c.l.b16 %v389
    %v1325 = vunpack.c.h.b16 %v389
    %v1326 = vunpack.c.l.b16 %v390
    %v1327 = vunpack.c.h.b16 %v390
    %v1328 = vunpack.c.l.b16 %v391
    %v1329 = vunpack.c.h.b16 %v391
    %v1330 = vunpack.c.l.b16 %v392
    %v1331 = vunpack.c.h.b16 %v392
    %v1332 = vunpack.c.l.b16 %v393
    %v1333 = vunpack.c.h.b16 %v393
    %v1334 = vunpack.c.l.b16 %v394
    %v1335 = vunpack.c.h.b16 %v394
    %v1336 = vunpack.c.l.b16 %v395
    %v1337 = vunpack.c.h.b16 %v395
    %v1338 = vunpack.c.l.b16 %v396
    %v1339 = vunpack.c.h.b16 %v396
    %v1340 = vunpack.c.l.b16 %v397
    %v1341 = vunpack.c.h.b16 %v397
    %v1342 = vunpack.c.l.b16 %v398
    %v1343 = vunpack.c.h.b16 %v398
    %v1344 = vunpack.c.l.b16 %v399
    %v1345 = vunpack.c.h.b16 %v399
    %v1346 = vunpack.c.l.b16 %v400
    %v1347 = vunpack.c.h.b16 %v400
    %v1348 = vunpack.c.l.b16 %v401
    %v1349 = vunpack.c.h.b16 %v401
    %v1350 = vunpack.c.l.b16 %v402
    %v1351 = vunpack.c.h.b16 %v402
    %v1352 = vunpack.c.l.b16 %v403
    %v1353 = vunpack.c.h.b16 %v403
    %v1354 = vunpack.c.l.b16 %v404
    %v1355 = vunpack.c.h.b16 %v404
    %v1356 = vunpack.c.l.b16 %v405
    %v1357 = vunpack.c.h.b16 %v405
    %v1358 = vunpack.c.l.b16 %v406
    %v1359 = vunpack.c.h.b16 %v406
    %v1360 = vunpack.c.l.b16 %v407
    %v1361 = vunpack.c.h.b16 %v407
    %v1362 = vunpack.c.l.b16 %v408
    %v1363 = vunpack.c.h.b16 %v408
    %v1364 = vunpack.c.l.b16 %v409
    %v1365 = vunpack.c.h.b16 %v409
    %v1366 = vunpack.c.l.b16 %v410
    %v1367 = vunpack.c.h.b16 %v410
    %v1368 = vunpack.c.l.b16 %v411
    %v1369 = vunpack.c.h.b16 %v411
    %v1370 = vunpack.c.l.b16 %v412
    %v1371 = vunpack.c.h.b16 %v412
    %v1372 = vunpack.c.l.b16 %v413
    %v1373 = vunpack.c.h.b16 %v413
    %v1374 = vunpack.c.l.b16 %v414
    %v1375 = vunpack.c.h.b16 %v414
    %v1376 = vunpack.c.l.b16 %v415
    %v1377 = vunpack.c.h.b16 %v415
    %v1378 = vunpack.c.l.b16 %v416
    %v1379 = vunpack.c.h.b16 %v416
    %v1380 = vunpack.c.l.b16 %v417
    %v1381 = vunpack.c.h.b16 %v417
    %v1382 = vunpack.c.l.b16 %v418
    %v1383 = vunpack.c.h.b16 %v418
    %v1384 = vunpack.c.l.b16 %v419
    %v1385 = vunpack.c.h.b16 %v419
    %v1386 = vunpack.c.l.b16 %v420
    %v1387 = vunpack.c.h.b16 %v420
    %v1388 = vunpack.c.l.b16 %v421
    %v1389 = vunpack.c.h.b16 %v421
    %v1390 = vunpack.c.l.b16 %v422
    %v1391 = vunpack.c.h.b16 %v422
    %v1392 = vunpack.c.l.b16 %v423
    %v1393 = vunpack.c.h.b16 %v423
    %v1394 = vunpack.c.l.b16 %v424
    %v1395 = vunpack.c.h.b16 %v424
    %v1396 = vunpack.c.l.b16 %v425
    %v1397 = vunpack.c.h.b16 %v425
    %v1398 = vunpack.c.l.b16 %v426
    %v1399 = vunpack.c.h.b16 %v426
    %v1400 = vunpack.c.l.b16 %v427
    %v1401 = vunpack.c.h.b16 %v427
    %v1402 = vunpack.c.l.b16 %v428
    %v1403 = vunpack.c.h.b16 %v428
    %v1404 = vunpack.c.l.b16 %v429
    %v1405 = vunpack.c.h.b16 %v429
    %v1406 = vunpack.c.l.b16 %v430
    %v1407 = vunpack.c.h.b16 %v430
    %v1408 = vunpack.c.l.b16 %v431
    %v1409 = vunpack.c.h.b16 %v431
    %v1410 = vunpack.c.l.b16 %v432
    %v1411 = vunpack.c.h.b16 %v432
    %v1412 = vunpack.c.l.b16 %v433
    %v1413 = vunpack.c.h.b16 %v433
    %v1414 = vunpack.c.l.b16 %v434
    %v1415 = vunpack.c.h.b16 %v434
    %v1416 = vunpack.c.l.b16 %v435
    %v1417 = vunpack.c.h.b16 %v435
    %v1418 = vunpack.c.l.b16 %v436
    %v1419 = vunpack.c.h.b16 %v436
    %v1420 = vunpack.c.l.b16 %v437
    %v1421 = vunpack.c.h.b16 %v437
    %v1422 = vunpack.c.l.b16 %v438
    %v1423 = vunpack.c.h.b16 %v438
    %v1424 = vunpack.c.l.b16 %v439
    %v1425 = vunpack.c.h.b16 %v439
    %v1426 = vunpack.c.l.b16 %v440
    %v1427 = vunpack.c.h.b16 %v440
    %v1428 = vunpack.c.l.b16 %v441
    %v1429 = vunpack.c.h.b16 %v441
    %v1430 = vunpack.c.l.b16 %v442
    %v1431 = vunpack.c.h.b16 %v442
    %v1432 = vunpack.c.l.b16 %v443
    %v1433 = vunpack.c.h.b16 %v443
    %v1434 = vunpack.c.l.b16 %v444
    %v1435 = vunpack.c.h.b16 %v444
    %v1436 = vunpack.c.l.b16 %v445
    %v1437 = vunpack.c.h.b16 %v445
    %v1438 = vunpack.c.l.b16 %v446
    %v1439 = vunpack.c.h.b16 %v446
    %v1440 = vunpack.c.l.b16 %v447
    %v1441 = vunpack.c.h.b16 %v447
    %v1442 = vunpack.c.l.b16 %v448
    %v1443 = vunpack.c.h.b16 %v448
    %v1444 = vunpack.c.l.b16 %v449
    %v1445 = vunpack.c.h.b16 %v449
    %v1446 = vunpack.c.l.b16 %v450
    %v1447 = vunpack.c.h.b16 %v450
    %v1448 = vunpack.c.l.b16 %v451
    %v1449 = vunpack.c.h.b16 %v451
    %v1450 = vunpack.c.l.b16 %v452
    %v1451 = vunpack.c.h.b16 %v452
    %v1452 = vunpack.c.l.b16 %v453
    %v1453 = vunpack.c.h.b16 %v453
    %v1454 = vunpack.c.l.b16 %v454
    %v1455 = vunpack.c.h.b16 %v454
    %v1456 = vunpack.c.l.b16 %v455
    %v1457 = vunpack.c.h.b16 %v455
    %v1458 = vunpack.c.l.b16 %v456
    %v1459 = vunpack.c.h.b16 %v456
    %v1460 = vunpack.c.l.b16 %v457
    %v1461 = vunpack.c.h.b16 %v457
    %v1462 = vunpack.c.l.b16 %v458
    %v1463 = vunpack.c.h.b16 %v458
    %v1464 = vunpack.c.l.b16 %v459
    %v1465 = vunpack.c.h.b16 %v459
    %v1466 = vunpack.c.l.b16 %v460
    %v1467 = vunpack.c.h.b16 %v460
    %v1468 = vunpack.c.l.b16 %v461
    %v1469 = vunpack.c.h.b16 %v461
    %v1470 = vunpack.c.l.b16 %v462
    %v1471 = vunpack.c.h.b16 %v462
    %v1472 = vunpack.c.l.b16 %v463
    %v1473 = vunpack.c.h.b16 %v463
    %v1474 = vunpack.c.l.b16 %v464
    %v1475 = vunpack.c.h.b16 %v464
    %v1476 = vunpack.c.l.b16 %v465
    %v1477 = vunpack.c.h.b16 %v465
    %v1478 = vunpack.c.l.b16 %v466
    %v1479 = vunpack.c.h.b16 %v466
    %v1480 = vunpack.c.l.b16 %v467
    %v1481 = vunpack.c.h.b16 %v467
    %v1482 = vunpack.c.l.b16 %v468
    %v1483 = vunpack.c.h.b16 %v468
    %v1484 = vunpack.c.l.b16 %v469
    %v1485 = vunpack.c.h.b16 %v469
    %v1486 = vunpack.c.l.b16 %v470
    %v1487 = vunpack.c.h.b16 %v470
    %v1488 = vunpack.c.l.b16 %v471
    %v1489 = vunpack.c.h.b16 %v471
    %v1490 = vunpack.c.l.b16 %v472
    %v1491 = vunpack.c.h.b16 %v472
    %v1492 = vunpack.c.l.b16 %v473
    %v1493 = vunpack.c.h.b16 %v473
    %v1494 = vunpack.c.l.b16 %v474
    %v1495 = vunpack.c.h.b16 %v474
    %v1496 = vunpack.c.l.b16 %v475
    %v1497 = vunpack.c.h.b16 %v475
    %v1498 = vunpack.c.l.b16 %v476
    %v1499 = vunpack.c.h.b16 %v476
    %v1500 = vunpack.c.l.b16 %v477
    %v1501 = vunpack.c.h.b16 %v477
    %v1502 = vunpack.c.l.b16 %v478
    %v1503 = vunpack.c.h.b16 %v478
    %v1504 = vunpack.c.l.b16 %v479
    %v1505 = vunpack.c.h.b16 %v479
    %v1506 = vunpack.c.l.b16 %v480
    %v1507 = vunpack.c.h.b16 %v480
    %v1508 = vunpack.c.l.b16 %v481
    %v1509 = vunpack.c.h.b16 %v481
    %v1510 = vpack.c.b16 %v1118, %v1062
    %v1511 = vpack.c.b16 %v1119, %v1063
    %v1512 = vpack.c.b16 %v1120, %v1064
    %v1513 = vpack.c.b16 %v1121, %v1065
    %v1514 = vpack.c.b16 %v1122, %v1066
    %v1515 = vpack.c.b16 %v1123, %v1067
    %v1516 = vpack.c.b16 %v1124, %v1068
    %v1517 = vpack.c.b16 %v1125, %v1069
    %v1518 = vpack.c.b16 %v1126, %v1070
    %v1519 = vpack.c.b16 %v1127, %v1071
    %v1520 = vpack.c.b16 %v1128, %v1072
    %v1521 = vpack.c.b16 %v1129, %v1073
    %v1522 = vpack.c.b16 %v1130, %v1074
    %v1523 = vpack.c.b16 %v1131, %v1075
    %v1524 = vpack.c.b16 %v1132, %v1076
    %v1525 = vpack.c.b16 %v1133, %v1077
    %v1526 = vpack.c.b16 %v1134, %v1078
    %v1527 = vpack.c.b16 %v1135, %v1079
    %v1528 = vpack.c.b16 %v1136, %v1080
    %v1529 = vpack.c.b16 %v1137, %v1081
    %v1530 = vpack.c.b16 %v1138, %v1082
    %v1531 = vpack.c.b16 %v1139, %v1083
    %v1532 = vpack.c.b16 %v1140, %v1084
    %v1533 = vpack.c.b16 %v1141, %v1085
    %v1534 = vpack.c.b16 %v1142, %v1086
    %v1535 = vpack.c.b16 %v1143, %v1087
    %v1536 = vpack.c.b16 %v1144, %v1088
    %v1537 = vpack.c.b16 %v1145, %v1089
    %v1538 = vpack.c.b16 %v1146, %v1090
    %v1539 = vpack.c.b16 %v1147, %v1091
    %v1540 = vpack.c.b16 %v1148, %v1092
    %v1541 = vpack.c.b16 %v1149, %v1093
    %v1542 = vpack.c.b16 %v1150, %v1094
    %v1543 = vpack.c.b16 %v1151, %v1095
    %v1544 = vpack.c.b16 %v1152, %v1096
    %v1545 = vpack.c.b16 %v1153, %v1097
    %v1546 = vpack.c.b16 %v1154, %v1098
    %v1547 = vpack.c.b16 %v1155, %v1099
    %v1548 = vpack.c.b16 %v1156, %v1100
    %v1549 = vpack.c.b16 %v1157, %v1101
    %v1550 = vpack.c.b16 %v1158, %v1102
    %v1551 = vpack.c.b16 %v1159, %v1103
    %v1552 = vpack.c.b16 %v1160, %v1104
    %v1553 = vpack.c.b16 %v1161, %v1105
    %v1554 = vpack.c.b16 %v1162, %v1106
    %v1555 = vpack.c.b16 %v1163, %v1107
    %v1556 = vpack.c.b16 %v1164, %v1108
    %v1557 = vpack.c.b16 %v1165, %v1109
    %v1558 = vpack.c.b16 %v1166, %v1110
    %v1559 = vpack.c.b16 %v1167, %v1111
    %v1560 = vpack.c.b16 %v1168, %v1112
    %v1561 = vpack.c.b16 %v1169, %v1113
    %v1562 = vpack.c.b16 %v1170, %v1114
    %v1563 = vpack.c.b16 %v1171, %v1115
    %v1564 = vpack.c.b16 %v1172, %v1116
    %v1565 = vpack.c.b16 %v1173, %v1117
    %v1566 = vpack.c.b16 %v1230, %v1174
    %v1567 = vpack.c.b16 %v1231, %v1175
    %v1568 = vpack.c.b16 %v1232, %v1176
    %v1569 = vpack.c.b16 %v1233, %v1177
    %v1570 = vpack.c.b16 %v1234, %v1178
    %v1571 = vpack.c.b16 %v1235, %v1179
    %v1572 = vpack.c.b16 %v1236, %v1180
    %v1573 = vpack.c.b16 %v1237, %v1181
    %v1574 = vpack.c.b16 %v1238, %v1182
    %v1575 = vpack.c.b16 %v1239, %v1183
    %v1576 = vpack.c.b16 %v1240, %v1184
    %v1577 = vpack.c.b16 %v1241, %v1185
    %v1578 = vpack.c.b16 %v1242, %v1186
    %v1579 = vpack.c.b16 %v1243, %v1187
    %v1580 = vpack.c.b16 %v1244, %v1188
    %v1581 = vpack.c.b16 %v1245, %v1189
    %v1582 = vpack.c.b16 %v1246, %v1190
    %v1583 = vpack.c.b16 %v1247, %v1191
    %v1584 = vpack.c.b16 %v1248, %v1192
    %v1585 = vpack.c.b16 %v1249, %v1193
    %v1586 = vpack.c.b16 %v1250, %v1194
    %v1587 = vpack.c.b16 %v1251, %v1195
    %v1588 = vpack.c.b16 %v1252, %v1196
    %v1589 = vpack.c.b16 %v1253, %v1197
    %v1590 = vpack.c.b16 %v1254, %v1198
    %v1591 = vpack.c.b16 %v1255, %v1199
    %v1592 = vpack.c.b16 %v1256, %v1200
    %v1593 = vpack.c.b16 %v1257, %v1201
    %v1594 = vpack.c.b16 %v1258, %v1202
    %v1595 = vpack.c.b16 %v1259, %v1203
    %v1596 = vpack.c.b16 %v1260, %v1204
    %v1597 = vpack.c.b16 %v1261, %v1205
    %v1598 = vpack.c.b16 %v1262, %v1206
    %v1599 = vpack.c.b16 %v1263, %v1207
    %v1600 = vpack.c.b16 %v1264, %v1208
    %v1601 = vpack.c.b16 %v1265, %v1209
    %v1602 = vpack.c.b16 %v1266, %v1210
    %v1603 = vpack.c.b16 %v1267, %v1211
    %v1604 = vpack.c.b16 %v1268, %v1212
    %v1605 = vpack.c.b16 %v1269, %v1213
    %v1606 = vpack.c.b16 %v1270, %v1214
    %v1607 = vpack.c.b16 %v1271, %v1215
    %v1608 = vpack.c.b16 %v1272, %v1216
    %v1609 = vpack.c.b16 %v1273, %v1217
    %v1610 = vpack.c.b16 %v1274, %v1218
    %v1611 = vpack.c.b16 %v1275, %v1219
    %v1612 = vpack.c.b16 %v1276, %v1220
    %v1613 = vpack.c.b16 %v1277, %v1221
    %v1614 = vpack.c.b16 %v1278, %v1222
    %v1615 = vpack.c.b16 %v1279, %v1223
    %v1616 = vpack.c.b16 %v1280, %v1224
    %v1617 = vpack.c.b16 %v1281, %v1225
    %v1618 = vpack.c.b16 %v1282, %v1226
    %v1619 = vpack.c.b16 %v1283, %v1227
    %v1620 = vpack.c.b16 %v1284, %v1228
    %v1621 = vpack.c.b16 %v1285, %v1229
    %v1622 = vpack.c.b16 %v1342, %v1286
    %v1623 = vpack.c.b16 %v1343, %v1287
    %v1624 = vpack.c.b16 %v1344, %v1288
    %v1625 = vpack.c.b16 %v1345, %v1289
    %v1626 = vpack.c.b16 %v1346, %v1290
    %v1627 = vpack.c.b16 %v1347, %v1291
    %v1628 = vpack.c.b16 %v1348, %v1292
    %v1629 = vpack.c.b16 %v1349, %v1293
    %v1630 = vpack.c.b16 %v1350, %v1294
    %v1631 = vpack.c.b16 %v1351, %v1295
    %v1632 = vpack.c.b16 %v1352, %v1296
    %v1633 = vpack.c.b16 %v1353, %v1297
    %v1634 = vpack.c.b16 %v1354, %v1298
    %v1635 = vpack.c.b16 %v1355, %v1299
    %v1636 = vpack.c.b16 %v1356, %v1300
    %v1637 = vpack.c.b16 %v1357, %v1301
    %v1638 = vpack.c.b16 %v1358, %v1302
    %v1639 = vpack.c.b16 %v1359, %v1303
    %v1640 = vpack.c.b16 %v1360, %v1304
    %v1641 = vpack.c.b16 %v1361, %v1305
    %v1642 = vpack.c.b16 %v1362, %v1306
    %v1643 = vpack.c.b16 %v1363, %v1307
    %v1644 = vpack.c.b16 %v1364, %v1308
    %v1645 = vpack.c.b16 %v1365, %v1309
    %v1646 = vpack.c.b16 %v1366, %v1310
    %v1647 = vpack.c.b16 %v1367, %v1311
    %v1648 = vpack.c.b16 %v1368, %v1312
    %v1649 = vpack.c.b16 %v1369, %v1313
    %v1650 = vpack.c.b16 %v1370, %v1314
    %v1651 = vpack.c.b16 %v1371, %v1315
    %v1652 = vpack.c.b16 %v1372, %v1316
    %v1653 = vpack.c.b16 %v1373, %v1317
    %v1654 = vpack.c.b16 %v1374, %v1318
    %v1655 = vpack.c.b16 %v1375, %v1319
    %v1656 = vpack.c.b16 %v1376, %v1320
    %v1657 = vpack.c.b16 %v1377, %v1321
    %v1658 = vpack.c.b16 %v1378, %v1322
    %v1659 = vpack.c.b16 %v1379, %v1323
    %v1660 = vpack.c.b16 %v1380, %v1324
    %v1661 = vpack.c.b16 %v1381, %v1325
    %v1662 = vpack.c.b16 %v1382, %v1326
    %v1663 = vpack.c.b16 %v1383, %v1327
    %v1664 = vpack.c.b16 %v1384, %v1328
    %v1665 = vpack.c.b16 %v1385, %v1329
    %v1666 = vpack.c.b16 %v1386, %v1330
    %v1667 = vpack.c.b16 %v1387, %v1331
    %v1668 = vpack.c.b16 %v1388, %v1332
    %v1669 = vpack.c.b16 %v1389, %v1333
    %v1670 = vpack.c.b16 %v1390, %v1334
    %v1671 = vpack.c.b16 %v1391, %v1335
    %v1672 = vpack.c.b16 %v1392, %v1336
    %v1673 = vpack.c.b16 %v1393, %v1337
    %v1674 = vpack.c.b16 %v1394, %v1338
    %v1675 = vpack.c.b16 %v1395, %v1339
    %v1676 = vpack.c.b16 %v1396, %v1340
    %v1677 = vpack.c.b16 %v1397, %v1341
    %v1678 = vpack.c.b16 %v1454, %v1398
    %v1679 = vpack.c.b16 %v1455, %v1399
    %v1680 = vpack.c.b16 %v1456, %v1400
    %v1681 = vpack.c.b16 %v1457, %v1401
    %v1682 = vpack.c.b16 %v1458, %v1402
    %v1683 = vpack.c.b16 %v1459, %v1403
    %v1684 = vpack.c.b16 %v1460, %v1404
    %v1685 = vpack.c.b16 %v1461, %v1405
    %v1686 = vpack.c.b16 %v1462, %v1406
    %v1687 = vpack.c.b16 %v1463, %v1407
    %v1688 = vpack.c.b16 %v1464, %v1408
    %v1689 = vpack.c.b16 %v1465, %v1409
    %v1690 = vpack.c.b16 %v1466, %v1410
    %v1691 = vpack.c.b16 %v1467, %v1411
    %v1692 = vpack.c.b16 %v1468, %v1412
    %v1693 = vpack.c.b16 %v1469, %v1413
    %v1694 = vpack.c.b16 %v1470, %v1414
    %v1695 = vpack.c.b16 %v1471, %v1415
    %v1696 = vpack.c.b16 %v1472, %v1416
    %v1697 = vpack.c.b16 %v1473, %v1417
    %v1698 = vpack.c.b16 %v1474, %v1418
    %v1699 = vpack.c.b16 %v1475, %v1419
    %v1700 = vpack.c.b16 %v1476, %v1420
    %v1701 = vpack.c.b16 %v1477, %v1421
    %v1702 = vpack.c.b16 %v1478, %v1422
    %v1703 = vpack.c.b16 %v1479, %v1423
    %v1704 = vpack.c.b16 %v1480, %v1424
    %v1705 = vpack.c.b16 %v1481, %v1425
    %v1706 = vpack.c.b16 %v1482, %v1426
    %v1707 = vpack.c.b16 %v1483, %v1427
    %v1708 = vpack.c.b16 %v1484, %v1428
    %v1709 = vpack.c.b16 %v1485, %v1429
    %v1710 = vpack.c.b16 %v1486, %v1430
    %v1711 = vpack.c.b16 %v1487, %v1431
    %v1712 = vpack.c.b16 %v1488, %v1432
    %v1713 = vpack.c.b16 %v1489, %v1433
    %v1714 = vpack.c.b16 %v1490, %v1434
    %v1715 = vpack.c.b16 %v1491, %v1435
    %v1716 = vpack.c.b16 %v1492, %v1436
    %v1717 = vpack.c.b16 %v1493, %v1437
    %v1718 = vpack.c.b16 %v1494, %v1438
    %v1719 = vpack.c.b16 %v1495, %v1439
    %v1720 = vpack.c.b16 %v1496, %v1440
    %v1721 = vpack.c.b16 %v1497, %v1441
    %v1722 = vpack.c.b16 %v1498, %v1442
    %v1723 = vpack.c.b16 %v1499, %v1443
    %v1724 = vpack.c.b16 %v1500, %v1444
    %v1725 = vpack.c.b16 %v1501, %v1445
    %v1726 = vpack.c.b16 %v1502, %v1446
    %v1727 = vpack.c.b16 %v1503, %v1447
    %v1728 = vpack.c.b16 %v1504, %v1448
    %v1729 = vpack.c.b16 %v1505, %v1449
    %v1730 = vpack.c.b16 %v1506, %v1450
    %v1731 = vpack.c.b16 %v1507, %v1451
    %v1732 = vpack.c.b16 %v1508, %v1452
    %v1733 = vpack.c.b16 %v1509, %v1453
    %vm1958 = vcmask 523264
    %v1960 = vsel %vm1958, %v79, 0
    %1962 = vmatprep.subr.bf16.mxu0 %v1511
    %1963 = vmatpush1.bf16.msra.mxu0 %v1510
    %1964 = vmatprep.subr.bf16.mxu0 %v1567
    %1965 = vmatpush1.bf16.msra.mxu0 %v1566
    %1966 = vmatprep.subr.bf16.mxu0 %v1623
    %1967 = vmatpush1.bf16.msra.mxu0 %v1622
    %1968 = vmatprep.subr.bf16.mxu0 %v1679
    %1969 = vmatpush1.bf16.msra.mxu0 %v1678
    %1970 = vmatprep.subr.bf16.mxu0 0
    %1971 = vmatpush1.bf16.msra.mxu0 0
    %1972 = vmatprep.subr.bf16.mxu0 0
    %1973 = vmatpush1.bf16.msra.mxu0 0
    %1974 = vmatprep.subr.bf16.mxu0 0
    %1975 = vmatpush1.bf16.msra.mxu0 0
    %1976 = vmatprep.subr.bf16.mxu0 0
    %1977 = vmatpush1.bf16.msra.mxu0 0
    %1978 = vmatprep.subr.bf16.mxu0 0
    %1979 = vmatpush1.bf16.msra.mxu0 0
    %1980 = vmatprep.subr.bf16.mxu0 0
    %1981 = vmatpush1.bf16.msra.mxu0 0
    %1982 = vmatprep.subr.bf16.mxu0 0
    %1983 = vmatpush1.bf16.msra.mxu0 0
    %1984 = vmatprep.subr.bf16.mxu0 0
    %1985 = vmatpush1.bf16.msra.mxu0 0
    %1986 = vmatprep.subr.bf16.mxu0 0
    %1987 = vmatpush1.bf16.msra.mxu0 0
    %1988 = vmatprep.subr.bf16.mxu0 0
    %1989 = vmatpush1.bf16.msra.mxu0 0
    %1990 = vmatprep.subr.bf16.mxu0 0
    %1991 = vmatpush1.bf16.msra.mxu0 0
    %1992 = vmatprep.subr.bf16.mxu0 0
    %1993 = vmatpush1.bf16.msra.mxu0 0
    %1994 = vmatprep.mubr.bf16.mxu0 0
    %1995 = vmatmul.mubr.bf16.gmra.mrb[0].mxu0 %v1960
    %v1996 = vpop.f32.mrb[0].mxu0
    %v1997 = vadd.f32 %v782, %v1996
    %v1998 = vpop.f32.mrb[0].mxu0
    %v1999 = vadd.f32 %v783, %v1998
    %v2000 = vpop.f32.mrb[0].mxu0
    %v2001 = vpop.f32.mrb[0].mxu0
    %2002 = vdwg.mxu0
    %2003 = vmatprep.subr.bf16.mxu0 %v1513
    %2004 = vmatpush1.bf16.msra.mxu0 %v1512
    %2005 = vmatprep.subr.bf16.mxu0 %v1569
    %2006 = vmatpush1.bf16.msra.mxu0 %v1568
    %2007 = vmatprep.subr.bf16.mxu0 %v1625
    %2008 = vmatpush1.bf16.msra.mxu0 %v1624
    %2009 = vmatprep.subr.bf16.mxu0 %v1681
    %2010 = vmatpush1.bf16.msra.mxu0 %v1680
    %2011 = vmatprep.subr.bf16.mxu0 0
    %2012 = vmatpush1.bf16.msra.mxu0 0
    %2013 = vmatprep.subr.bf16.mxu0 0
    %2014 = vmatpush1.bf16.msra.mxu0 0
    %2015 = vmatprep.subr.bf16.mxu0 0
    %2016 = vmatpush1.bf16.msra.mxu0 0
    %2017 = vmatprep.subr.bf16.mxu0 0
    %2018 = vmatpush1.bf16.msra.mxu0 0
    %2019 = vmatprep.subr.bf16.mxu0 0
    %2020 = vmatpush1.bf16.msra.mxu0 0
    %2021 = vmatprep.subr.bf16.mxu0 0
    %2022 = vmatpush1.bf16.msra.mxu0 0
    %2023 = vmatprep.subr.bf16.mxu0 0
    %2024 = vmatpush1.bf16.msra.mxu0 0
    %2025 = vmatprep.subr.bf16.mxu0 0
    %2026 = vmatpush1.bf16.msra.mxu0 0
    %2027 = vmatprep.subr.bf16.mxu0 0
    %2028 = vmatpush1.bf16.msra.mxu0 0
    %2029 = vmatprep.subr.bf16.mxu0 0
    %2030 = vmatpush1.bf16.msra.mxu0 0
    %2031 = vmatprep.subr.bf16.mxu0 0
    %2032 = vmatpush1.bf16.msra.mxu0 0
    %2033 = vmatprep.subr.bf16.mxu0 0
    %2034 = vmatpush1.bf16.msra.mxu0 0
    %2035 = vmatprep.mubr.bf16.mxu0 0
    %2036 = vmatmul.mubr.bf16.gmra.mrb[0].mxu0 %v1960
    %v2037 = vpop.f32.mrb[0].mxu0
    %v2038 = vadd.f32 %v784, %v2037
    %v2039 = vpop.f32.mrb[0].mxu0
    %v2040 = vadd.f32 %v785, %v2039
    %v2041 = vpop.f32.mrb[0].mxu0
    %v2042 = vpop.f32.mrb[0].mxu0
    %2043 = vdwg.mxu0
    %2044 = vmatprep.subr.bf16.mxu0 %v1515
    %2045 = vmatpush1.bf16.msra.mxu0 %v1514
    %2046 = vmatprep.subr.bf16.mxu0 %v1571
    %2047 = vmatpush1.bf16.msra.mxu0 %v1570
    %2048 = vmatprep.subr.bf16.mxu0 %v1627
    %2049 = vmatpush1.bf16.msra.mxu0 %v1626
    %2050 = vmatprep.subr.bf16.mxu0 %v1683
    %2051 = vmatpush1.bf16.msra.mxu0 %v1682
    %2052 = vmatprep.subr.bf16.mxu0 0
    %2053 = vmatpush1.bf16.msra.mxu0 0
    %2054 = vmatprep.subr.bf16.mxu0 0
    %2055 = vmatpush1.bf16.msra.mxu0 0
    %2056 = vmatprep.subr.bf16.mxu0 0
    %2057 = vmatpush1.bf16.msra.mxu0 0
    %2058 = vmatprep.subr.bf16.mxu0 0
    %2059 = vmatpush1.bf16.msra.mxu0 0
    %2060 = vmatprep.subr.bf16.mxu0 0
    %2061 = vmatpush1.bf16.msra.mxu0 0
    %2062 = vmatprep.subr.bf16.mxu0 0
    %2063 = vmatpush1.bf16.msra.mxu0 0
    %2064 = vmatprep.subr.bf16.mxu0 0
    %2065 = vmatpush1.bf16.msra.mxu0 0
    %2066 = vmatprep.subr.bf16.mxu0 0
    %2067 = vmatpush1.bf16.msra.mxu0 0
    %2068 = vmatprep.subr.bf16.mxu0 0
    %2069 = vmatpush1.bf16.msra.mxu0 0
    %2070 = vmatprep.subr.bf16.mxu0 0
    %2071 = vmatpush1.bf16.msra.mxu0 0
    %2072 = vmatprep.subr.bf16.mxu0 0
    %2073 = vmatpush1.bf16.msra.mxu0 0
    %2074 = vmatprep.subr.bf16.mxu0 0
    %2075 = vmatpush1.bf16.msra.mxu0 0
    %2076 = vmatprep.mubr.bf16.mxu0 0
    %2077 = vmatmul.mubr.bf16.gmra.mrb[0].mxu0 %v1960
    %v2078 = vpop.f32.mrb[0].mxu0
    %v2079 = vadd.f32 %v786, %v2078
    %v2080 = vpop.f32.mrb[0].mxu0
    %v2081 = vadd.f32 %v787, %v2080
    %v2082 = vpop.f32.mrb[0].mxu0
    %v2083 = vpop.f32.mrb[0].mxu0
    %2084 = vdwg.mxu0
    %2085 = vmatprep.subr.bf16.mxu0 %v1517
    %2086 = vmatpush1.bf16.msra.mxu0 %v1516
    %2087 = vmatprep.subr.bf16.mxu0 %v1573
    %2088 = vmatpush1.bf16.msra.mxu0 %v1572
    %2089 = vmatprep.subr.bf16.mxu0 %v1629
    %2090 = vmatpush1.bf16.msra.mxu0 %v1628
    %2091 = vmatprep.subr.bf16.mxu0 %v1685
    %2092 = vmatpush1.bf16.msra.mxu0 %v1684
    %2093 = vmatprep.subr.bf16.mxu0 0
    %2094 = vmatpush1.bf16.msra.mxu0 0
    %2095 = vmatprep.subr.bf16.mxu0 0
    %2096 = vmatpush1.bf16.msra.mxu0 0
    %2097 = vmatprep.subr.bf16.mxu0 0
    %2098 = vmatpush1.bf16.msra.mxu0 0
    %2099 = vmatprep.subr.bf16.mxu0 0
    %2100 = vmatpush1.bf16.msra.mxu0 0
    %2101 = vmatprep.subr.bf16.mxu0 0
    %2102 = vmatpush1.bf16.msra.mxu0 0
    %2103 = vmatprep.subr.bf16.mxu0 0
    %2104 = vmatpush1.bf16.msra.mxu0 0
    %2105 = vmatprep.subr.bf16.mxu0 0
    %2106 = vmatpush1.bf16.msra.mxu0 0
    %2107 = vmatprep.subr.bf16.mxu0 0
    %2108 = vmatpush1.bf16.msra.mxu0 0
    %2109 = vmatprep.subr.bf16.mxu0 0
    %2110 = vmatpush1.bf16.msra.mxu0 0
    %2111 = vmatprep.subr.bf16.mxu0 0
    %2112 = vmatpush1.bf16.msra.mxu0 0
    %2113 = vmatprep.subr.bf16.mxu0 0
    %2114 = vmatpush1.bf16.msra.mxu0 0
    %2115 = vmatprep.subr.bf16.mxu0 0
    %2116 = vmatpush1.bf16.msra.mxu0 0
    %2117 = vmatprep.mubr.bf16.mxu0 0
    %2118 = vmatmul.mubr.bf16.gmra.mrb[0].mxu0 %v1960
    %v2119 = vpop.f32.mrb[0].mxu0
    %v2120 = vadd.f32 %v788, %v2119
    %v2121 = vpop.f32.mrb[0].mxu0
    %v2122 = vadd.f32 %v789, %v2121
    %v2123 = vpop.f32.mrb[0].mxu0
    %v2124 = vpop.f32.mrb[0].mxu0
    %2125 = vdwg.mxu0
    %2126 = vmatprep.subr.bf16.mxu0 %v1519
    %2127 = vmatpush1.bf16.msra.mxu0 %v1518
    %2128 = vmatprep.subr.bf16.mxu0 %v1575
    %2129 = vmatpush1.bf16.msra.mxu0 %v1574
    %2130 = vmatprep.subr.bf16.mxu0 %v1631
    %2131 = vmatpush1.bf16.msra.mxu0 %v1630
    %2132 = vmatprep.subr.bf16.mxu0 %v1687
    %2133 = vmatpush1.bf16.msra.mxu0 %v1686
    %2134 = vmatprep.subr.bf16.mxu0 0
    %2135 = vmatpush1.bf16.msra.mxu0 0
    %2136 = vmatprep.subr.bf16.mxu0 0
    %2137 = vmatpush1.bf16.msra.mxu0 0
    %2138 = vmatprep.subr.bf16.mxu0 0
    %2139 = vmatpush1.bf16.msra.mxu0 0
    %2140 = vmatprep.subr.bf16.mxu0 0
    %2141 = vmatpush1.bf16.msra.mxu0 0
    %2142 = vmatprep.subr.bf16.mxu0 0
    %2143 = vmatpush1.bf16.msra.mxu0 0
    %2144 = vmatprep.subr.bf16.mxu0 0
    %2145 = vmatpush1.bf16.msra.mxu0 0
    %2146 = vmatprep.subr.bf16.mxu0 0
    %2147 = vmatpush1.bf16.msra.mxu0 0
    %2148 = vmatprep.subr.bf16.mxu0 0
    %2149 = vmatpush1.bf16.msra.mxu0 0
    %2150 = vmatprep.subr.bf16.mxu0 0
    %2151 = vmatpush1.bf16.msra.mxu0 0
    %2152 = vmatprep.subr.bf16.mxu0 0
    %2153 = vmatpush1.bf16.msra.mxu0 0
    %2154 = vmatprep.subr.bf16.mxu0 0
    %2155 = vmatpush1.bf16.msra.mxu0 0
    %2156 = vmatprep.subr.bf16.mxu0 0
    %2157 = vmatpush1.bf16.msra.mxu0 0
    %2158 = vmatprep.mubr.bf16.mxu0 0
    %2159 = vmatmul.mubr.bf16.gmra.mrb[0].mxu0 %v1960
    %v2160 = vpop.f32.mrb[0].mxu0
    %v2161 = vadd.f32 %v790, %v2160
    %v2162 = vpop.f32.mrb[0].mxu0
    %v2163 = vadd.f32 %v791, %v2162
    %v2164 = vpop.f32.mrb[0].mxu0
    %v2165 = vpop.f32.mrb[0].mxu0
    %2166 = vdwg.mxu0
    %2167 = vmatprep.subr.bf16.mxu0 %v1521
    %2168 = vmatpush1.bf16.msra.mxu0 %v1520
    %2169 = vmatprep.subr.bf16.mxu0 %v1577
    %2170 = vmatpush1.bf16.msra.mxu0 %v1576
    %2171 = vmatprep.subr.bf16.mxu0 %v1633
    %2172 = vmatpush1.bf16.msra.mxu0 %v1632
    %2173 = vmatprep.subr.bf16.mxu0 %v1689
    %2174 = vmatpush1.bf16.msra.mxu0 %v1688
    %2175 = vmatprep.subr.bf16.mxu0 0
    %2176 = vmatpush1.bf16.msra.mxu0 0
    %2177 = vmatprep.subr.bf16.mxu0 0
    %2178 = vmatpush1.bf16.msra.mxu0 0
    %2179 = vmatprep.subr.bf16.mxu0 0
    %2180 = vmatpush1.bf16.msra.mxu0 0
    %2181 = vmatprep.subr.bf16.mxu0 0
    %2182 = vmatpush1.bf16.msra.mxu0 0
    %2183 = vmatprep.subr.bf16.mxu0 0
    %2184 = vmatpush1.bf16.msra.mxu0 0
    %2185 = vmatprep.subr.bf16.mxu0 0
    %2186 = vmatpush1.bf16.msra.mxu0 0
    %2187 = vmatprep.subr.bf16.mxu0 0
    %2188 = vmatpush1.bf16.msra.mxu0 0
    %2189 = vmatprep.subr.bf16.mxu0 0
    %2190 = vmatpush1.bf16.msra.mxu0 0
    %2191 = vmatprep.subr.bf16.mxu0 0
    %2192 = vmatpush1.bf16.msra.mxu0 0
    %2193 = vmatprep.subr.bf16.mxu0 0
    %2194 = vmatpush1.bf16.msra.mxu0 0
    %2195 = vmatprep.subr.bf16.mxu0 0
    %2196 = vmatpush1.bf16.msra.mxu0 0
    %2197 = vmatprep.subr.bf16.mxu0 0
    %2198 = vmatpush1.bf16.msra.mxu0 0
    %2199 = vmatprep.mubr.bf16.mxu0 0
    %2200 = vmatmul.mubr.bf16.gmra.mrb[0].mxu0 %v1960
    %v2201 = vpop.f32.mrb[0].mxu0
    %v2202 = vadd.f32 %v792, %v2201
    %v2203 = vpop.f32.mrb[0].mxu0
    %v2204 = vadd.f32 %v793, %v2203
    %v2205 = vpop.f32.mrb[0].mxu0
    %v2206 = vpop.f32.mrb[0].mxu0
    %2207 = vdwg.mxu0
    %2208 = vmatprep.subr.bf16.mxu0 %v1523
    %2209 = vmatpush1.bf16.msra.mxu0 %v1522
    %2210 = vmatprep.subr.bf16.mxu0 %v1579
    %2211 = vmatpush1.bf16.msra.mxu0 %v1578
    %2212 = vmatprep.subr.bf16.mxu0 %v1635
    %2213 = vmatpush1.bf16.msra.mxu0 %v1634
    %2214 = vmatprep.subr.bf16.mxu0 %v1691
    %2215 = vmatpush1.bf16.msra.mxu0 %v1690
    %2216 = vmatprep.subr.bf16.mxu0 0
    %2217 = vmatpush1.bf16.msra.mxu0 0
    %2218 = vmatprep.subr.bf16.mxu0 0
    %2219 = vmatpush1.bf16.msra.mxu0 0
    %2220 = vmatprep.subr.bf16.mxu0 0
    %2221 = vmatpush1.bf16.msra.mxu0 0
    %2222 = vmatprep.subr.bf16.mxu0 0
    %2223 = vmatpush1.bf16.msra.mxu0 0
    %2224 = vmatprep.subr.bf16.mxu0 0
    %2225 = vmatpush1.bf16.msra.mxu0 0
    %2226 = vmatprep.subr.bf16.mxu0 0
    %2227 = vmatpush1.bf16.msra.mxu0 0
    %2228 = vmatprep.subr.bf16.mxu0 0
    %2229 = vmatpush1.bf16.msra.mxu0 0
    %2230 = vmatprep.subr.bf16.mxu0 0
    %2231 = vmatpush1.bf16.msra.mxu0 0
    %2232 = vmatprep.subr.bf16.mxu0 0
    %2233 = vmatpush1.bf16.msra.mxu0 0
    %2234 = vmatprep.subr.bf16.mxu0 0
    %2235 = vmatpush1.bf16.msra.mxu0 0
    %2236 = vmatprep.subr.bf16.mxu0 0
    %2237 = vmatpush1.bf16.msra.mxu0 0
    %2238 = vmatprep.subr.bf16.mxu0 0
    %2239 = vmatpush1.bf16.msra.mxu0 0
    %2240 = vmatprep.mubr.bf16.mxu0 0
    %2241 = vmatmul.mubr.bf16.gmra.mrb[0].mxu0 %v1960
    %v2242 = vpop.f32.mrb[0].mxu0
    %v2243 = vadd.f32 %v794, %v2242
    %v2244 = vpop.f32.mrb[0].mxu0
    %v2245 = vadd.f32 %v795, %v2244
    %v2246 = vpop.f32.mrb[0].mxu0
    %v2247 = vpop.f32.mrb[0].mxu0
    %2248 = vdwg.mxu0
    %2249 = vmatprep.subr.bf16.mxu0 %v1525
    %2250 = vmatpush1.bf16.msra.mxu0 %v1524
    %2251 = vmatprep.subr.bf16.mxu0 %v1581
    %2252 = vmatpush1.bf16.msra.mxu0 %v1580
    %2253 = vmatprep.subr.bf16.mxu0 %v1637
    %2254 = vmatpush1.bf16.msra.mxu0 %v1636
    %2255 = vmatprep.subr.bf16.mxu0 %v1693
    %2256 = vmatpush1.bf16.msra.mxu0 %v1692
    %2257 = vmatprep.subr.bf16.mxu0 0
    %2258 = vmatpush1.bf16.msra.mxu0 0
    %2259 = vmatprep.subr.bf16.mxu0 0
    %2260 = vmatpush1.bf16.msra.mxu0 0
    %2261 = vmatprep.subr.bf16.mxu0 0
    %2262 = vmatpush1.bf16.msra.mxu0 0
    %2263 = vmatprep.subr.bf16.mxu0 0
    %2264 = vmatpush1.bf16.msra.mxu0 0
    %2265 = vmatprep.subr.bf16.mxu0 0
    %2266 = vmatpush1.bf16.msra.mxu0 0
    %2267 = vmatprep.subr.bf16.mxu0 0
    %2268 = vmatpush1.bf16.msra.mxu0 0
    %2269 = vmatprep.subr.bf16.mxu0 0
    %2270 = vmatpush1.bf16.msra.mxu0 0
    %2271 = vmatprep.subr.bf16.mxu0 0
    %2272 = vmatpush1.bf16.msra.mxu0 0
    %2273 = vmatprep.subr.bf16.mxu0 0
    %2274 = vmatpush1.bf16.msra.mxu0 0
    %2275 = vmatprep.subr.bf16.mxu0 0
    %2276 = vmatpush1.bf16.msra.mxu0 0
    %2277 = vmatprep.subr.bf16.mxu0 0
    %2278 = vmatpush1.bf16.msra.mxu0 0
    %2279 = vmatprep.subr.bf16.mxu0 0
    %2280 = vmatpush1.bf16.msra.mxu0 0
    %2281 = vmatprep.mubr.bf16.mxu0 0
    %2282 = vmatmul.mubr.bf16.gmra.mrb[0].mxu0 %v1960
    %v2283 = vpop.f32.mrb[0].mxu0
    %v2284 = vadd.f32 %v796, %v2283
    %v2285 = vpop.f32.mrb[0].mxu0
    %v2286 = vadd.f32 %v797, %v2285
    %v2287 = vpop.f32.mrb[0].mxu0
    %v2288 = vpop.f32.mrb[0].mxu0
    %2289 = vdwg.mxu0
    %2290 = vmatprep.subr.bf16.mxu0 %v1527
    %2291 = vmatpush1.bf16.msra.mxu0 %v1526
    %2292 = vmatprep.subr.bf16.mxu0 %v1583
    %2293 = vmatpush1.bf16.msra.mxu0 %v1582
    %2294 = vmatprep.subr.bf16.mxu0 %v1639
    %2295 = vmatpush1.bf16.msra.mxu0 %v1638
    %2296 = vmatprep.subr.bf16.mxu0 %v1695
    %2297 = vmatpush1.bf16.msra.mxu0 %v1694
    %2298 = vmatprep.subr.bf16.mxu0 0
    %2299 = vmatpush1.bf16.msra.mxu0 0
    %2300 = vmatprep.subr.bf16.mxu0 0
    %2301 = vmatpush1.bf16.msra.mxu0 0
    %2302 = vmatprep.subr.bf16.mxu0 0
    %2303 = vmatpush1.bf16.msra.mxu0 0
    %2304 = vmatprep.subr.bf16.mxu0 0
    %2305 = vmatpush1.bf16.msra.mxu0 0
    %2306 = vmatprep.subr.bf16.mxu0 0
    %2307 = vmatpush1.bf16.msra.mxu0 0
    %2308 = vmatprep.subr.bf16.mxu0 0
    %2309 = vmatpush1.bf16.msra.mxu0 0
    %2310 = vmatprep.subr.bf16.mxu0 0
    %2311 = vmatpush1.bf16.msra.mxu0 0
    %2312 = vmatprep.subr.bf16.mxu0 0
    %2313 = vmatpush1.bf16.msra.mxu0 0
    %2314 = vmatprep.subr.bf16.mxu0 0
    %2315 = vmatpush1.bf16.msra.mxu0 0
    %2316 = vmatprep.subr.bf16.mxu0 0
    %2317 = vmatpush1.bf16.msra.mxu0 0
    %2318 = vmatprep.subr.bf16.mxu0 0
    %2319 = vmatpush1.bf16.msra.mxu0 0
    %2320 = vmatprep.subr.bf16.mxu0 0
    %2321 = vmatpush1.bf16.msra.mxu0 0
    %2322 = vmatprep.mubr.bf16.mxu0 0
    %2323 = vmatmul.mubr.bf16.gmra.mrb[0].mxu0 %v1960
    %v2324 = vpop.f32.mrb[0].mxu0
    %v2325 = vadd.f32 %v798, %v2324
    %v2326 = vpop.f32.mrb[0].mxu0
    %v2327 = vadd.f32 %v799, %v2326
    %v2328 = vpop.f32.mrb[0].mxu0
    %v2329 = vpop.f32.mrb[0].mxu0
    %2330 = vdwg.mxu0
    %2331 = vmatprep.subr.bf16.mxu0 %v1529
    %2332 = vmatpush1.bf16.msra.mxu0 %v1528
    %2333 = vmatprep.subr.bf16.mxu0 %v1585
    %2334 = vmatpush1.bf16.msra.mxu0 %v1584
    %2335 = vmatprep.subr.bf16.mxu0 %v1641
    %2336 = vmatpush1.bf16.msra.mxu0 %v1640
    %2337 = vmatprep.subr.bf16.mxu0 %v1697
    %2338 = vmatpush1.bf16.msra.mxu0 %v1696
    %2339 = vmatprep.subr.bf16.mxu0 0
    %2340 = vmatpush1.bf16.msra.mxu0 0
    %2341 = vmatprep.subr.bf16.mxu0 0
    %2342 = vmatpush1.bf16.msra.mxu0 0
    %2343 = vmatprep.subr.bf16.mxu0 0
    %2344 = vmatpush1.bf16.msra.mxu0 0
    %2345 = vmatprep.subr.bf16.mxu0 0
    %2346 = vmatpush1.bf16.msra.mxu0 0
    %2347 = vmatprep.subr.bf16.mxu0 0
    %2348 = vmatpush1.bf16.msra.mxu0 0
    %2349 = vmatprep.subr.bf16.mxu0 0
    %2350 = vmatpush1.bf16.msra.mxu0 0
    %2351 = vmatprep.subr.bf16.mxu0 0
    %2352 = vmatpush1.bf16.msra.mxu0 0
    %2353 = vmatprep.subr.bf16.mxu0 0
    %2354 = vmatpush1.bf16.msra.mxu0 0
    %2355 = vmatprep.subr.bf16.mxu0 0
    %2356 = vmatpush1.bf16.msra.mxu0 0
    %2357 = vmatprep.subr.bf16.mxu0 0
    %2358 = vmatpush1.bf16.msra.mxu0 0
    %2359 = vmatprep.subr.bf16.mxu0 0
    %2360 = vmatpush1.bf16.msra.mxu0 0
    %2361 = vmatprep.subr.bf16.mxu0 0
    %2362 = vmatpush1.bf16.msra.mxu0 0
    %2363 = vmatprep.mubr.bf16.mxu0 0
    %2364 = vmatmul.mubr.bf16.gmra.mrb[0].mxu0 %v1960
    %v2365 = vpop.f32.mrb[0].mxu0
    %v2366 = vadd.f32 %v800, %v2365
    %v2367 = vpop.f32.mrb[0].mxu0
    %v2368 = vadd.f32 %v801, %v2367
    %v2369 = vpop.f32.mrb[0].mxu0
    %v2370 = vpop.f32.mrb[0].mxu0
    %2371 = vdwg.mxu0
    %2372 = vmatprep.subr.bf16.mxu0 %v1531
    %2373 = vmatpush1.bf16.msra.mxu0 %v1530
    %2374 = vmatprep.subr.bf16.mxu0 %v1587
    %2375 = vmatpush1.bf16.msra.mxu0 %v1586
    %2376 = vmatprep.subr.bf16.mxu0 %v1643
    %2377 = vmatpush1.bf16.msra.mxu0 %v1642
    %2378 = vmatprep.subr.bf16.mxu0 %v1699
    %2379 = vmatpush1.bf16.msra.mxu0 %v1698
    %2380 = vmatprep.subr.bf16.mxu0 0
    %2381 = vmatpush1.bf16.msra.mxu0 0
    %2382 = vmatprep.subr.bf16.mxu0 0
    %2383 = vmatpush1.bf16.msra.mxu0 0
    %2384 = vmatprep.subr.bf16.mxu0 0
    %2385 = vmatpush1.bf16.msra.mxu0 0
    %2386 = vmatprep.subr.bf16.mxu0 0
    %2387 = vmatpush1.bf16.msra.mxu0 0
    %2388 = vmatprep.subr.bf16.mxu0 0
    %2389 = vmatpush1.bf16.msra.mxu0 0
    %2390 = vmatprep.subr.bf16.mxu0 0
    %2391 = vmatpush1.bf16.msra.mxu0 0
    %2392 = vmatprep.subr.bf16.mxu0 0
    %2393 = vmatpush1.bf16.msra.mxu0 0
    %2394 = vmatprep.subr.bf16.mxu0 0
    %2395 = vmatpush1.bf16.msra.mxu0 0
    %2396 = vmatprep.subr.bf16.mxu0 0
    %2397 = vmatpush1.bf16.msra.mxu0 0
    %2398 = vmatprep.subr.bf16.mxu0 0
    %2399 = vmatpush1.bf16.msra.mxu0 0
    %2400 = vmatprep.subr.bf16.mxu0 0
    %2401 = vmatpush1.bf16.msra.mxu0 0
    %2402 = vmatprep.subr.bf16.mxu0 0
    %2403 = vmatpush1.bf16.msra.mxu0 0
    %2404 = vmatprep.mubr.bf16.mxu0 0
    %2405 = vmatmul.mubr.bf16.gmra.mrb[0].mxu0 %v1960
    %v2406 = vpop.f32.mrb[0].mxu0
    %v2407 = vadd.f32 %v802, %v2406
    %v2408 = vpop.f32.mrb[0].mxu0
    %v2409 = vadd.f32 %v803, %v2408
    %v2410 = vpop.f32.mrb[0].mxu0
    %v2411 = vpop.f32.mrb[0].mxu0
    %2412 = vdwg.mxu0
    %2413 = vmatprep.subr.bf16.mxu0 %v1533
    %2414 = vmatpush1.bf16.msra.mxu0 %v1532
    %2415 = vmatprep.subr.bf16.mxu0 %v1589
    %2416 = vmatpush1.bf16.msra.mxu0 %v1588
    %2417 = vmatprep.subr.bf16.mxu0 %v1645
    %2418 = vmatpush1.bf16.msra.mxu0 %v1644
    %2419 = vmatprep.subr.bf16.mxu0 %v1701
    %2420 = vmatpush1.bf16.msra.mxu0 %v1700
    %2421 = vmatprep.subr.bf16.mxu0 0
    %2422 = vmatpush1.bf16.msra.mxu0 0
    %2423 = vmatprep.subr.bf16.mxu0 0
    %2424 = vmatpush1.bf16.msra.mxu0 0
    %2425 = vmatprep.subr.bf16.mxu0 0
    %2426 = vmatpush1.bf16.msra.mxu0 0
    %2427 = vmatprep.subr.bf16.mxu0 0
    %2428 = vmatpush1.bf16.msra.mxu0 0
    %2429 = vmatprep.subr.bf16.mxu0 0
    %2430 = vmatpush1.bf16.msra.mxu0 0
    %2431 = vmatprep.subr.bf16.mxu0 0
    %2432 = vmatpush1.bf16.msra.mxu0 0
    %2433 = vmatprep.subr.bf16.mxu0 0
    %2434 = vmatpush1.bf16.msra.mxu0 0
    %2435 = vmatprep.subr.bf16.mxu0 0
    %2436 = vmatpush1.bf16.msra.mxu0 0
    %2437 = vmatprep.subr.bf16.mxu0 0
    %2438 = vmatpush1.bf16.msra.mxu0 0
    %2439 = vmatprep.subr.bf16.mxu0 0
    %2440 = vmatpush1.bf16.msra.mxu0 0
    %2441 = vmatprep.subr.bf16.mxu0 0
    %2442 = vmatpush1.bf16.msra.mxu0 0
    %2443 = vmatprep.subr.bf16.mxu0 0
    %2444 = vmatpush1.bf16.msra.mxu0 0
    %2445 = vmatprep.mubr.bf16.mxu0 0
    %2446 = vmatmul.mubr.bf16.gmra.mrb[0].mxu0 %v1960
    %v2447 = vpop.f32.mrb[0].mxu0
    %v2448 = vadd.f32 %v804, %v2447
    %v2449 = vpop.f32.mrb[0].mxu0
    %v2450 = vadd.f32 %v805, %v2449
    %v2451 = vpop.f32.mrb[0].mxu0
    %v2452 = vpop.f32.mrb[0].mxu0
    %2453 = vdwg.mxu0
    %2454 = vmatprep.subr.bf16.mxu0 %v1535
    %2455 = vmatpush1.bf16.msra.mxu0 %v1534
    %2456 = vmatprep.subr.bf16.mxu0 %v1591
    %2457 = vmatpush1.bf16.msra.mxu0 %v1590
    %2458 = vmatprep.subr.bf16.mxu0 %v1647
    %2459 = vmatpush1.bf16.msra.mxu0 %v1646
    %2460 = vmatprep.subr.bf16.mxu0 %v1703
    %2461 = vmatpush1.bf16.msra.mxu0 %v1702
    %2462 = vmatprep.subr.bf16.mxu0 0
    %2463 = vmatpush1.bf16.msra.mxu0 0
    %2464 = vmatprep.subr.bf16.mxu0 0
    %2465 = vmatpush1.bf16.msra.mxu0 0
    %2466 = vmatprep.subr.bf16.mxu0 0
    %2467 = vmatpush1.bf16.msra.mxu0 0
    %2468 = vmatprep.subr.bf16.mxu0 0
    %2469 = vmatpush1.bf16.msra.mxu0 0
    %2470 = vmatprep.subr.bf16.mxu0 0
    %2471 = vmatpush1.bf16.msra.mxu0 0
    %2472 = vmatprep.subr.bf16.mxu0 0
    %2473 = vmatpush1.bf16.msra.mxu0 0
    %2474 = vmatprep.subr.bf16.mxu0 0
    %2475 = vmatpush1.bf16.msra.mxu0 0
    %2476 = vmatprep.subr.bf16.mxu0 0
    %2477 = vmatpush1.bf16.msra.mxu0 0
    %2478 = vmatprep.subr.bf16.mxu0 0
    %2479 = vmatpush1.bf16.msra.mxu0 0
    %2480 = vmatprep.subr.bf16.mxu0 0
    %2481 = vmatpush1.bf16.msra.mxu0 0
    %2482 = vmatprep.subr.bf16.mxu0 0
    %2483 = vmatpush1.bf16.msra.mxu0 0
    %2484 = vmatprep.subr.bf16.mxu0 0
    %2485 = vmatpush1.bf16.msra.mxu0 0
    %2486 = vmatprep.mubr.bf16.mxu0 0
    %2487 = vmatmul.mubr.bf16.gmra.mrb[0].mxu0 %v1960
    %v2488 = vpop.f32.mrb[0].mxu0
    %v2489 = vadd.f32 %v806, %v2488
    %v2490 = vpop.f32.mrb[0].mxu0
    %v2491 = vadd.f32 %v807, %v2490
    %v2492 = vpop.f32.mrb[0].mxu0
    %v2493 = vpop.f32.mrb[0].mxu0
    %2494 = vdwg.mxu0
    %2495 = vmatprep.subr.bf16.mxu0 %v1537
    %2496 = vmatpush1.bf16.msra.mxu0 %v1536
    %2497 = vmatprep.subr.bf16.mxu0 %v1593
    %2498 = vmatpush1.bf16.msra.mxu0 %v1592
    %2499 = vmatprep.subr.bf16.mxu0 %v1649
    %2500 = vmatpush1.bf16.msra.mxu0 %v1648
    %2501 = vmatprep.subr.bf16.mxu0 %v1705
    %2502 = vmatpush1.bf16.msra.mxu0 %v1704
    %2503 = vmatprep.subr.bf16.mxu0 0
    %2504 = vmatpush1.bf16.msra.mxu0 0
    %2505 = vmatprep.subr.bf16.mxu0 0
    %2506 = vmatpush1.bf16.msra.mxu0 0
    %2507 = vmatprep.subr.bf16.mxu0 0
    %2508 = vmatpush1.bf16.msra.mxu0 0
    %2509 = vmatprep.subr.bf16.mxu0 0
    %2510 = vmatpush1.bf16.msra.mxu0 0
    %2511 = vmatprep.subr.bf16.mxu0 0
    %2512 = vmatpush1.bf16.msra.mxu0 0
    %2513 = vmatprep.subr.bf16.mxu0 0
    %2514 = vmatpush1.bf16.msra.mxu0 0
    %2515 = vmatprep.subr.bf16.mxu0 0
    %2516 = vmatpush1.bf16.msra.mxu0 0
    %2517 = vmatprep.subr.bf16.mxu0 0
    %2518 = vmatpush1.bf16.msra.mxu0 0
    %2519 = vmatprep.subr.bf16.mxu0 0
    %2520 = vmatpush1.bf16.msra.mxu0 0
    %2521 = vmatprep.subr.bf16.mxu0 0
    %2522 = vmatpush1.bf16.msra.mxu0 0
    %2523 = vmatprep.subr.bf16.mxu0 0
    %2524 = vmatpush1.bf16.msra.mxu0 0
    %2525 = vmatprep.subr.bf16.mxu0 0
    %2526 = vmatpush1.bf16.msra.mxu0 0
    %2527 = vmatprep.mubr.bf16.mxu0 0
    %2528 = vmatmul.mubr.bf16.gmra.mrb[0].mxu0 %v1960
    %v2529 = vpop.f32.mrb[0].mxu0
    %v2530 = vadd.f32 %v808, %v2529
    %v2531 = vpop.f32.mrb[0].mxu0
    %v2532 = vadd.f32 %v809, %v2531
    %v2533 = vpop.f32.mrb[0].mxu0
    %v2534 = vpop.f32.mrb[0].mxu0
    %2535 = vdwg.mxu0
    %2536 = vmatprep.subr.bf16.mxu0 %v1539
    %2537 = vmatpush1.bf16.msra.mxu0 %v1538
    %2538 = vmatprep.subr.bf16.mxu0 %v1595
    %2539 = vmatpush1.bf16.msra.mxu0 %v1594
    %2540 = vmatprep.subr.bf16.mxu0 %v1651
    %2541 = vmatpush1.bf16.msra.mxu0 %v1650
    %2542 = vmatprep.subr.bf16.mxu0 %v1707
    %2543 = vmatpush1.bf16.msra.mxu0 %v1706
    %2544 = vmatprep.subr.bf16.mxu0 0
    %2545 = vmatpush1.bf16.msra.mxu0 0
    %2546 = vmatprep.subr.bf16.mxu0 0
    %2547 = vmatpush1.bf16.msra.mxu0 0
    %2548 = vmatprep.subr.bf16.mxu0 0
    %2549 = vmatpush1.bf16.msra.mxu0 0
    %2550 = vmatprep.subr.bf16.mxu0 0
    %2551 = vmatpush1.bf16.msra.mxu0 0
    %2552 = vmatprep.subr.bf16.mxu0 0
    %2553 = vmatpush1.bf16.msra.mxu0 0
    %2554 = vmatprep.subr.bf16.mxu0 0
    %2555 = vmatpush1.bf16.msra.mxu0 0
    %2556 = vmatprep.subr.bf16.mxu0 0
    %2557 = vmatpush1.bf16.msra.mxu0 0
    %2558 = vmatprep.subr.bf16.mxu0 0
    %2559 = vmatpush1.bf16.msra.mxu0 0
    %2560 = vmatprep.subr.bf16.mxu0 0
    %2561 = vmatpush1.bf16.msra.mxu0 0
    %2562 = vmatprep.subr.bf16.mxu0 0
    %2563 = vmatpush1.bf16.msra.mxu0 0
    %2564 = vmatprep.subr.bf16.mxu0 0
    %2565 = vmatpush1.bf16.msra.mxu0 0
    %2566 = vmatprep.subr.bf16.mxu0 0
    %2567 = vmatpush1.bf16.msra.mxu0 0
    %2568 = vmatprep.mubr.bf16.mxu0 0
    %2569 = vmatmul.mubr.bf16.gmra.mrb[0].mxu0 %v1960
    %v2570 = vpop.f32.mrb[0].mxu0
    %v2571 = vadd.f32 %v810, %v2570
    %v2572 = vpop.f32.mrb[0].mxu0
    %v2573 = vadd.f32 %v811, %v2572
    %v2574 = vpop.f32.mrb[0].mxu0
    %v2575 = vpop.f32.mrb[0].mxu0
    %2576 = vdwg.mxu0
    %2577 = vmatprep.subr.bf16.mxu0 %v1541
    %2578 = vmatpush1.bf16.msra.mxu0 %v1540
    %2579 = vmatprep.subr.bf16.mxu0 %v1597
    %2580 = vmatpush1.bf16.msra.mxu0 %v1596
    %2581 = vmatprep.subr.bf16.mxu0 %v1653
    %2582 = vmatpush1.bf16.msra.mxu0 %v1652
    %2583 = vmatprep.subr.bf16.mxu0 %v1709
    %2584 = vmatpush1.bf16.msra.mxu0 %v1708
    %2585 = vmatprep.subr.bf16.mxu0 0
    %2586 = vmatpush1.bf16.msra.mxu0 0
    %2587 = vmatprep.subr.bf16.mxu0 0
    %2588 = vmatpush1.bf16.msra.mxu0 0
    %2589 = vmatprep.subr.bf16.mxu0 0
    %2590 = vmatpush1.bf16.msra.mxu0 0
    %2591 = vmatprep.subr.bf16.mxu0 0
    %2592 = vmatpush1.bf16.msra.mxu0 0
    %2593 = vmatprep.subr.bf16.mxu0 0
    %2594 = vmatpush1.bf16.msra.mxu0 0
    %2595 = vmatprep.subr.bf16.mxu0 0
    %2596 = vmatpush1.bf16.msra.mxu0 0
    %2597 = vmatprep.subr.bf16.mxu0 0
    %2598 = vmatpush1.bf16.msra.mxu0 0
    %2599 = vmatprep.subr.bf16.mxu0 0
    %2600 = vmatpush1.bf16.msra.mxu0 0
    %2601 = vmatprep.subr.bf16.mxu0 0
    %2602 = vmatpush1.bf16.msra.mxu0 0
    %2603 = vmatprep.subr.bf16.mxu0 0
    %2604 = vmatpush1.bf16.msra.mxu0 0
    %2605 = vmatprep.subr.bf16.mxu0 0
    %2606 = vmatpush1.bf16.msra.mxu0 0
    %2607 = vmatprep.subr.bf16.mxu0 0
    %2608 = vmatpush1.bf16.msra.mxu0 0
    %2609 = vmatprep.mubr.bf16.mxu0 0
    %2610 = vmatmul.mubr.bf16.gmra.mrb[0].mxu0 %v1960
    %v2611 = vpop.f32.mrb[0].mxu0
    %v2612 = vadd.f32 %v812, %v2611
    %v2613 = vpop.f32.mrb[0].mxu0
    %v2614 = vadd.f32 %v813, %v2613
    %v2615 = vpop.f32.mrb[0].mxu0
    %v2616 = vpop.f32.mrb[0].mxu0
    %2617 = vdwg.mxu0
    %2618 = vmatprep.subr.bf16.mxu0 %v1543
    %2619 = vmatpush1.bf16.msra.mxu0 %v1542
    %2620 = vmatprep.subr.bf16.mxu0 %v1599
    %2621 = vmatpush1.bf16.msra.mxu0 %v1598
    %2622 = vmatprep.subr.bf16.mxu0 %v1655
    %2623 = vmatpush1.bf16.msra.mxu0 %v1654
    %2624 = vmatprep.subr.bf16.mxu0 %v1711
    %2625 = vmatpush1.bf16.msra.mxu0 %v1710
    %2626 = vmatprep.subr.bf16.mxu0 0
    %2627 = vmatpush1.bf16.msra.mxu0 0
    %2628 = vmatprep.subr.bf16.mxu0 0
    %2629 = vmatpush1.bf16.msra.mxu0 0
    %2630 = vmatprep.subr.bf16.mxu0 0
    %2631 = vmatpush1.bf16.msra.mxu0 0
    %2632 = vmatprep.subr.bf16.mxu0 0
    %2633 = vmatpush1.bf16.msra.mxu0 0
    %2634 = vmatprep.subr.bf16.mxu0 0
    %2635 = vmatpush1.bf16.msra.mxu0 0
    %2636 = vmatprep.subr.bf16.mxu0 0
    %2637 = vmatpush1.bf16.msra.mxu0 0
    %2638 = vmatprep.subr.bf16.mxu0 0
    %2639 = vmatpush1.bf16.msra.mxu0 0
    %2640 = vmatprep.subr.bf16.mxu0 0
    %2641 = vmatpush1.bf16.msra.mxu0 0
    %2642 = vmatprep.subr.bf16.mxu0 0
    %2643 = vmatpush1.bf16.msra.mxu0 0
    %2644 = vmatprep.subr.bf16.mxu0 0
    %2645 = vmatpush1.bf16.msra.mxu0 0
    %2646 = vmatprep.subr.bf16.mxu0 0
    %2647 = vmatpush1.bf16.msra.mxu0 0
    %2648 = vmatprep.subr.bf16.mxu0 0
    %2649 = vmatpush1.bf16.msra.mxu0 0
    %2650 = vmatprep.mubr.bf16.mxu0 0
    %2651 = vmatmul.mubr.bf16.gmra.mrb[0].mxu0 %v1960
    %v2652 = vpop.f32.mrb[0].mxu0
    %v2653 = vadd.f32 %v814, %v2652
    %v2654 = vpop.f32.mrb[0].mxu0
    %v2655 = vadd.f32 %v815, %v2654
    %v2656 = vpop.f32.mrb[0].mxu0
    %v2657 = vpop.f32.mrb[0].mxu0
    %2658 = vdwg.mxu0
    %2659 = vmatprep.subr.bf16.mxu0 %v1545
    %2660 = vmatpush1.bf16.msra.mxu0 %v1544
    %2661 = vmatprep.subr.bf16.mxu0 %v1601
    %2662 = vmatpush1.bf16.msra.mxu0 %v1600
    %2663 = vmatprep.subr.bf16.mxu0 %v1657
    %2664 = vmatpush1.bf16.msra.mxu0 %v1656
    %2665 = vmatprep.subr.bf16.mxu0 %v1713
    %2666 = vmatpush1.bf16.msra.mxu0 %v1712
    %2667 = vmatprep.subr.bf16.mxu0 0
    %2668 = vmatpush1.bf16.msra.mxu0 0
    %2669 = vmatprep.subr.bf16.mxu0 0
    %2670 = vmatpush1.bf16.msra.mxu0 0
    %2671 = vmatprep.subr.bf16.mxu0 0
    %2672 = vmatpush1.bf16.msra.mxu0 0
    %2673 = vmatprep.subr.bf16.mxu0 0
    %2674 = vmatpush1.bf16.msra.mxu0 0
    %2675 = vmatprep.subr.bf16.mxu0 0
    %2676 = vmatpush1.bf16.msra.mxu0 0
    %2677 = vmatprep.subr.bf16.mxu0 0
    %2678 = vmatpush1.bf16.msra.mxu0 0
    %2679 = vmatprep.subr.bf16.mxu0 0
    %2680 = vmatpush1.bf16.msra.mxu0 0
    %2681 = vmatprep.subr.bf16.mxu0 0
    %2682 = vmatpush1.bf16.msra.mxu0 0
    %2683 = vmatprep.subr.bf16.mxu0 0
    %2684 = vmatpush1.bf16.msra.mxu0 0
    %2685 = vmatprep.subr.bf16.mxu0 0
    %2686 = vmatpush1.bf16.msra.mxu0 0
    %2687 = vmatprep.subr.bf16.mxu0 0
    %2688 = vmatpush1.bf16.msra.mxu0 0
    %2689 = vmatprep.subr.bf16.mxu0 0
    %2690 = vmatpush1.bf16.msra.mxu0 0
    %2691 = vmatprep.mubr.bf16.mxu0 0
    %2692 = vmatmul.mubr.bf16.gmra.mrb[0].mxu0 %v1960
    %v2693 = vpop.f32.mrb[0].mxu0
    %v2694 = vadd.f32 %v816, %v2693
    %v2695 = vpop.f32.mrb[0].mxu0
    %v2696 = vadd.f32 %v817, %v2695
    %v2697 = vpop.f32.mrb[0].mxu0
    %v2698 = vpop.f32.mrb[0].mxu0
    %2699 = vdwg.mxu0
    %2700 = vmatprep.subr.bf16.mxu0 %v1547
    %2701 = vmatpush1.bf16.msra.mxu0 %v1546
    %2702 = vmatprep.subr.bf16.mxu0 %v1603
    %2703 = vmatpush1.bf16.msra.mxu0 %v1602
    %2704 = vmatprep.subr.bf16.mxu0 %v1659
    %2705 = vmatpush1.bf16.msra.mxu0 %v1658
    %2706 = vmatprep.subr.bf16.mxu0 %v1715
    %2707 = vmatpush1.bf16.msra.mxu0 %v1714
    %2708 = vmatprep.subr.bf16.mxu0 0
    %2709 = vmatpush1.bf16.msra.mxu0 0
    %2710 = vmatprep.subr.bf16.mxu0 0
    %2711 = vmatpush1.bf16.msra.mxu0 0
    %2712 = vmatprep.subr.bf16.mxu0 0
    %2713 = vmatpush1.bf16.msra.mxu0 0
    %2714 = vmatprep.subr.bf16.mxu0 0
    %2715 = vmatpush1.bf16.msra.mxu0 0
    %2716 = vmatprep.subr.bf16.mxu0 0
    %2717 = vmatpush1.bf16.msra.mxu0 0
    %2718 = vmatprep.subr.bf16.mxu0 0
    %2719 = vmatpush1.bf16.msra.mxu0 0
    %2720 = vmatprep.subr.bf16.mxu0 0
    %2721 = vmatpush1.bf16.msra.mxu0 0
    %2722 = vmatprep.subr.bf16.mxu0 0
    %2723 = vmatpush1.bf16.msra.mxu0 0
    %2724 = vmatprep.subr.bf16.mxu0 0
    %2725 = vmatpush1.bf16.msra.mxu0 0
    %2726 = vmatprep.subr.bf16.mxu0 0
    %2727 = vmatpush1.bf16.msra.mxu0 0
    %2728 = vmatprep.subr.bf16.mxu0 0
    %2729 = vmatpush1.bf16.msra.mxu0 0
    %2730 = vmatprep.subr.bf16.mxu0 0
    %2731 = vmatpush1.bf16.msra.mxu0 0
    %2732 = vmatprep.mubr.bf16.mxu0 0
    %2733 = vmatmul.mubr.bf16.gmra.mrb[0].mxu0 %v1960
    %v2734 = vpop.f32.mrb[0].mxu0
    %v2735 = vadd.f32 %v818, %v2734
    %v2736 = vpop.f32.mrb[0].mxu0
    %v2737 = vadd.f32 %v819, %v2736
    %v2738 = vpop.f32.mrb[0].mxu0
    %v2739 = vpop.f32.mrb[0].mxu0
    %2740 = vdwg.mxu0
    %2741 = vmatprep.subr.bf16.mxu0 %v1549
    %2742 = vmatpush1.bf16.msra.mxu0 %v1548
    %2743 = vmatprep.subr.bf16.mxu0 %v1605
    %2744 = vmatpush1.bf16.msra.mxu0 %v1604
    %2745 = vmatprep.subr.bf16.mxu0 %v1661
    %2746 = vmatpush1.bf16.msra.mxu0 %v1660
    %2747 = vmatprep.subr.bf16.mxu0 %v1717
    %2748 = vmatpush1.bf16.msra.mxu0 %v1716
    %2749 = vmatprep.subr.bf16.mxu0 0
    %2750 = vmatpush1.bf16.msra.mxu0 0
    %2751 = vmatprep.subr.bf16.mxu0 0
    %2752 = vmatpush1.bf16.msra.mxu0 0
    %2753 = vmatprep.subr.bf16.mxu0 0
    %2754 = vmatpush1.bf16.msra.mxu0 0
    %2755 = vmatprep.subr.bf16.mxu0 0
    %2756 = vmatpush1.bf16.msra.mxu0 0
    %2757 = vmatprep.subr.bf16.mxu0 0
    %2758 = vmatpush1.bf16.msra.mxu0 0
    %2759 = vmatprep.subr.bf16.mxu0 0
    %2760 = vmatpush1.bf16.msra.mxu0 0
    %2761 = vmatprep.subr.bf16.mxu0 0
    %2762 = vmatpush1.bf16.msra.mxu0 0
    %2763 = vmatprep.subr.bf16.mxu0 0
    %2764 = vmatpush1.bf16.msra.mxu0 0
    %2765 = vmatprep.subr.bf16.mxu0 0
    %2766 = vmatpush1.bf16.msra.mxu0 0
    %2767 = vmatprep.subr.bf16.mxu0 0
    %2768 = vmatpush1.bf16.msra.mxu0 0
    %2769 = vmatprep.subr.bf16.mxu0 0
    %2770 = vmatpush1.bf16.msra.mxu0 0
    %2771 = vmatprep.subr.bf16.mxu0 0
    %2772 = vmatpush1.bf16.msra.mxu0 0
    %2773 = vmatprep.mubr.bf16.mxu0 0
    %2774 = vmatmul.mubr.bf16.gmra.mrb[0].mxu0 %v1960
    %v2775 = vpop.f32.mrb[0].mxu0
    %v2776 = vadd.f32 %v820, %v2775
    %v2777 = vpop.f32.mrb[0].mxu0
    %v2778 = vadd.f32 %v821, %v2777
    %v2779 = vpop.f32.mrb[0].mxu0
    %v2780 = vpop.f32.mrb[0].mxu0
    %2781 = vdwg.mxu0
    %2782 = vmatprep.subr.bf16.mxu0 %v1551
    %2783 = vmatpush1.bf16.msra.mxu0 %v1550
    %2784 = vmatprep.subr.bf16.mxu0 %v1607
    %2785 = vmatpush1.bf16.msra.mxu0 %v1606
    %2786 = vmatprep.subr.bf16.mxu0 %v1663
    %2787 = vmatpush1.bf16.msra.mxu0 %v1662
    %2788 = vmatprep.subr.bf16.mxu0 %v1719
    %2789 = vmatpush1.bf16.msra.mxu0 %v1718
    %2790 = vmatprep.subr.bf16.mxu0 0
    %2791 = vmatpush1.bf16.msra.mxu0 0
    %2792 = vmatprep.subr.bf16.mxu0 0
    %2793 = vmatpush1.bf16.msra.mxu0 0
    %2794 = vmatprep.subr.bf16.mxu0 0
    %2795 = vmatpush1.bf16.msra.mxu0 0
    %2796 = vmatprep.subr.bf16.mxu0 0
    %2797 = vmatpush1.bf16.msra.mxu0 0
    %2798 = vmatprep.subr.bf16.mxu0 0
    %2799 = vmatpush1.bf16.msra.mxu0 0
    %2800 = vmatprep.subr.bf16.mxu0 0
    %2801 = vmatpush1.bf16.msra.mxu0 0
    %2802 = vmatprep.subr.bf16.mxu0 0
    %2803 = vmatpush1.bf16.msra.mxu0 0
    %2804 = vmatprep.subr.bf16.mxu0 0
    %2805 = vmatpush1.bf16.msra.mxu0 0
    %2806 = vmatprep.subr.bf16.mxu0 0
    %2807 = vmatpush1.bf16.msra.mxu0 0
    %2808 = vmatprep.subr.bf16.mxu0 0
    %2809 = vmatpush1.bf16.msra.mxu0 0
    %2810 = vmatprep.subr.bf16.mxu0 0
    %2811 = vmatpush1.bf16.msra.mxu0 0
    %2812 = vmatprep.subr.bf16.mxu0 0
    %2813 = vmatpush1.bf16.msra.mxu0 0
    %2814 = vmatprep.mubr.bf16.mxu0 0
    %2815 = vmatmul.mubr.bf16.gmra.mrb[0].mxu0 %v1960
    %v2816 = vpop.f32.mrb[0].mxu0
    %v2817 = vadd.f32 %v822, %v2816
    %v2818 = vpop.f32.mrb[0].mxu0
    %v2819 = vadd.f32 %v823, %v2818
    %v2820 = vpop.f32.mrb[0].mxu0
    %v2821 = vpop.f32.mrb[0].mxu0
    %2822 = vdwg.mxu0
    %2823 = vmatprep.subr.bf16.mxu0 %v1553
    %2824 = vmatpush1.bf16.msra.mxu0 %v1552
    %2825 = vmatprep.subr.bf16.mxu0 %v1609
    %2826 = vmatpush1.bf16.msra.mxu0 %v1608
    %2827 = vmatprep.subr.bf16.mxu0 %v1665
    %2828 = vmatpush1.bf16.msra.mxu0 %v1664
    %2829 = vmatprep.subr.bf16.mxu0 %v1721
    %2830 = vmatpush1.bf16.msra.mxu0 %v1720
    %2831 = vmatprep.subr.bf16.mxu0 0
    %2832 = vmatpush1.bf16.msra.mxu0 0
    %2833 = vmatprep.subr.bf16.mxu0 0
    %2834 = vmatpush1.bf16.msra.mxu0 0
    %2835 = vmatprep.subr.bf16.mxu0 0
    %2836 = vmatpush1.bf16.msra.mxu0 0
    %2837 = vmatprep.subr.bf16.mxu0 0
    %2838 = vmatpush1.bf16.msra.mxu0 0
    %2839 = vmatprep.subr.bf16.mxu0 0
    %2840 = vmatpush1.bf16.msra.mxu0 0
    %2841 = vmatprep.subr.bf16.mxu0 0
    %2842 = vmatpush1.bf16.msra.mxu0 0
    %2843 = vmatprep.subr.bf16.mxu0 0
    %2844 = vmatpush1.bf16.msra.mxu0 0
    %2845 = vmatprep.subr.bf16.mxu0 0
    %2846 = vmatpush1.bf16.msra.mxu0 0
    %2847 = vmatprep.subr.bf16.mxu0 0
    %2848 = vmatpush1.bf16.msra.mxu0 0
    %2849 = vmatprep.subr.bf16.mxu0 0
    %2850 = vmatpush1.bf16.msra.mxu0 0
    %2851 = vmatprep.subr.bf16.mxu0 0
    %2852 = vmatpush1.bf16.msra.mxu0 0
    %2853 = vmatprep.subr.bf16.mxu0 0
    %2854 = vmatpush1.bf16.msra.mxu0 0
    %2855 = vmatprep.mubr.bf16.mxu0 0
    %2856 = vmatmul.mubr.bf16.gmra.mrb[0].mxu0 %v1960
    %v2857 = vpop.f32.mrb[0].mxu0
    %v2858 = vadd.f32 %v824, %v2857
    %v2859 = vpop.f32.mrb[0].mxu0
    %v2860 = vadd.f32 %v825, %v2859
    %v2861 = vpop.f32.mrb[0].mxu0
    %v2862 = vpop.f32.mrb[0].mxu0
    %2863 = vdwg.mxu0
    %2864 = vmatprep.subr.bf16.mxu0 %v1555
    %2865 = vmatpush1.bf16.msra.mxu0 %v1554
    %2866 = vmatprep.subr.bf16.mxu0 %v1611
    %2867 = vmatpush1.bf16.msra.mxu0 %v1610
    %2868 = vmatprep.subr.bf16.mxu0 %v1667
    %2869 = vmatpush1.bf16.msra.mxu0 %v1666
    %2870 = vmatprep.subr.bf16.mxu0 %v1723
    %2871 = vmatpush1.bf16.msra.mxu0 %v1722
    %2872 = vmatprep.subr.bf16.mxu0 0
    %2873 = vmatpush1.bf16.msra.mxu0 0
    %2874 = vmatprep.subr.bf16.mxu0 0
    %2875 = vmatpush1.bf16.msra.mxu0 0
    %2876 = vmatprep.subr.bf16.mxu0 0
    %2877 = vmatpush1.bf16.msra.mxu0 0
    %2878 = vmatprep.subr.bf16.mxu0 0
    %2879 = vmatpush1.bf16.msra.mxu0 0
    %2880 = vmatprep.subr.bf16.mxu0 0
    %2881 = vmatpush1.bf16.msra.mxu0 0
    %2882 = vmatprep.subr.bf16.mxu0 0
    %2883 = vmatpush1.bf16.msra.mxu0 0
    %2884 = vmatprep.subr.bf16.mxu0 0
    %2885 = vmatpush1.bf16.msra.mxu0 0
    %2886 = vmatprep.subr.bf16.mxu0 0
    %2887 = vmatpush1.bf16.msra.mxu0 0
    %2888 = vmatprep.subr.bf16.mxu0 0
    %2889 = vmatpush1.bf16.msra.mxu0 0
    %2890 = vmatprep.subr.bf16.mxu0 0
    %2891 = vmatpush1.bf16.msra.mxu0 0
    %2892 = vmatprep.subr.bf16.mxu0 0
    %2893 = vmatpush1.bf16.msra.mxu0 0
    %2894 = vmatprep.subr.bf16.mxu0 0
    %2895 = vmatpush1.bf16.msra.mxu0 0
    %2896 = vmatprep.mubr.bf16.mxu0 0
    %2897 = vmatmul.mubr.bf16.gmra.mrb[0].mxu0 %v1960
    %v2898 = vpop.f32.mrb[0].mxu0
    %v2899 = vadd.f32 %v826, %v2898
    %v2900 = vpop.f32.mrb[0].mxu0
    %v2901 = vadd.f32 %v827, %v2900
    %v2902 = vpop.f32.mrb[0].mxu0
    %v2903 = vpop.f32.mrb[0].mxu0
    %2904 = vdwg.mxu0
    %2905 = vmatprep.subr.bf16.mxu0 %v1557
    %2906 = vmatpush1.bf16.msra.mxu0 %v1556
    %2907 = vmatprep.subr.bf16.mxu0 %v1613
    %2908 = vmatpush1.bf16.msra.mxu0 %v1612
    %2909 = vmatprep.subr.bf16.mxu0 %v1669
    %2910 = vmatpush1.bf16.msra.mxu0 %v1668
    %2911 = vmatprep.subr.bf16.mxu0 %v1725
    %2912 = vmatpush1.bf16.msra.mxu0 %v1724
    %2913 = vmatprep.subr.bf16.mxu0 0
    %2914 = vmatpush1.bf16.msra.mxu0 0
    %2915 = vmatprep.subr.bf16.mxu0 0
    %2916 = vmatpush1.bf16.msra.mxu0 0
    %2917 = vmatprep.subr.bf16.mxu0 0
    %2918 = vmatpush1.bf16.msra.mxu0 0
    %2919 = vmatprep.subr.bf16.mxu0 0
    %2920 = vmatpush1.bf16.msra.mxu0 0
    %2921 = vmatprep.subr.bf16.mxu0 0
    %2922 = vmatpush1.bf16.msra.mxu0 0
    %2923 = vmatprep.subr.bf16.mxu0 0
    %2924 = vmatpush1.bf16.msra.mxu0 0
    %2925 = vmatprep.subr.bf16.mxu0 0
    %2926 = vmatpush1.bf16.msra.mxu0 0
    %2927 = vmatprep.subr.bf16.mxu0 0
    %2928 = vmatpush1.bf16.msra.mxu0 0
    %2929 = vmatprep.subr.bf16.mxu0 0
    %2930 = vmatpush1.bf16.msra.mxu0 0
    %2931 = vmatprep.subr.bf16.mxu0 0
    %2932 = vmatpush1.bf16.msra.mxu0 0
    %2933 = vmatprep.subr.bf16.mxu0 0
    %2934 = vmatpush1.bf16.msra.mxu0 0
    %2935 = vmatprep.subr.bf16.mxu0 0
    %2936 = vmatpush1.bf16.msra.mxu0 0
    %2937 = vmatprep.mubr.bf16.mxu0 0
    %2938 = vmatmul.mubr.bf16.gmra.mrb[0].mxu0 %v1960
    %v2939 = vpop.f32.mrb[0].mxu0
    %v2940 = vadd.f32 %v828, %v2939
    %v2941 = vpop.f32.mrb[0].mxu0
    %v2942 = vadd.f32 %v829, %v2941
    %v2943 = vpop.f32.mrb[0].mxu0
    %v2944 = vpop.f32.mrb[0].mxu0
    %2945 = vdwg.mxu0
    %2946 = vmatprep.subr.bf16.mxu0 %v1559
    %2947 = vmatpush1.bf16.msra.mxu0 %v1558
    %2948 = vmatprep.subr.bf16.mxu0 %v1615
    %2949 = vmatpush1.bf16.msra.mxu0 %v1614
    %2950 = vmatprep.subr.bf16.mxu0 %v1671
    %2951 = vmatpush1.bf16.msra.mxu0 %v1670
    %2952 = vmatprep.subr.bf16.mxu0 %v1727
    %2953 = vmatpush1.bf16.msra.mxu0 %v1726
    %2954 = vmatprep.subr.bf16.mxu0 0
    %2955 = vmatpush1.bf16.msra.mxu0 0
    %2956 = vmatprep.subr.bf16.mxu0 0
    %2957 = vmatpush1.bf16.msra.mxu0 0
    %2958 = vmatprep.subr.bf16.mxu0 0
    %2959 = vmatpush1.bf16.msra.mxu0 0
    %2960 = vmatprep.subr.bf16.mxu0 0
    %2961 = vmatpush1.bf16.msra.mxu0 0
    %2962 = vmatprep.subr.bf16.mxu0 0
    %2963 = vmatpush1.bf16.msra.mxu0 0
    %2964 = vmatprep.subr.bf16.mxu0 0
    %2965 = vmatpush1.bf16.msra.mxu0 0
    %2966 = vmatprep.subr.bf16.mxu0 0
    %2967 = vmatpush1.bf16.msra.mxu0 0
    %2968 = vmatprep.subr.bf16.mxu0 0
    %2969 = vmatpush1.bf16.msra.mxu0 0
    %2970 = vmatprep.subr.bf16.mxu0 0
    %2971 = vmatpush1.bf16.msra.mxu0 0
    %2972 = vmatprep.subr.bf16.mxu0 0
    %2973 = vmatpush1.bf16.msra.mxu0 0
    %2974 = vmatprep.subr.bf16.mxu0 0
    %2975 = vmatpush1.bf16.msra.mxu0 0
    %2976 = vmatprep.subr.bf16.mxu0 0
    %2977 = vmatpush1.bf16.msra.mxu0 0
    %2978 = vmatprep.mubr.bf16.mxu0 0
    %2979 = vmatmul.mubr.bf16.gmra.mrb[0].mxu0 %v1960
    %v2980 = vpop.f32.mrb[0].mxu0
    %v2981 = vadd.f32 %v830, %v2980
    %v2982 = vpop.f32.mrb[0].mxu0
    %v2983 = vadd.f32 %v831, %v2982
    %v2984 = vpop.f32.mrb[0].mxu0
    %v2985 = vpop.f32.mrb[0].mxu0
    %2986 = vdwg.mxu0
    %2987 = vmatprep.subr.bf16.mxu0 %v1561
    %2988 = vmatpush1.bf16.msra.mxu0 %v1560
    %2989 = vmatprep.subr.bf16.mxu0 %v1617
    %2990 = vmatpush1.bf16.msra.mxu0 %v1616
    %2991 = vmatprep.subr.bf16.mxu0 %v1673
    %2992 = vmatpush1.bf16.msra.mxu0 %v1672
    %2993 = vmatprep.subr.bf16.mxu0 %v1729
    %2994 = vmatpush1.bf16.msra.mxu0 %v1728
    %2995 = vmatprep.subr.bf16.mxu0 0
    %2996 = vmatpush1.bf16.msra.mxu0 0
    %2997 = vmatprep.subr.bf16.mxu0 0
    %2998 = vmatpush1.bf16.msra.mxu0 0
    %2999 = vmatprep.subr.bf16.mxu0 0
    %3000 = vmatpush1.bf16.msra.mxu0 0
    %3001 = vmatprep.subr.bf16.mxu0 0
    %3002 = vmatpush1.bf16.msra.mxu0 0
    %3003 = vmatprep.subr.bf16.mxu0 0
    %3004 = vmatpush1.bf16.msra.mxu0 0
    %3005 = vmatprep.subr.bf16.mxu0 0
    %3006 = vmatpush1.bf16.msra.mxu0 0
    %3007 = vmatprep.subr.bf16.mxu0 0
    %3008 = vmatpush1.bf16.msra.mxu0 0
    %3009 = vmatprep.subr.bf16.mxu0 0
    %3010 = vmatpush1.bf16.msra.mxu0 0
    %3011 = vmatprep.subr.bf16.mxu0 0
    %3012 = vmatpush1.bf16.msra.mxu0 0
    %3013 = vmatprep.subr.bf16.mxu0 0
    %3014 = vmatpush1.bf16.msra.mxu0 0
    %3015 = vmatprep.subr.bf16.mxu0 0
    %3016 = vmatpush1.bf16.msra.mxu0 0
    %3017 = vmatprep.subr.bf16.mxu0 0
    %3018 = vmatpush1.bf16.msra.mxu0 0
    %3019 = vmatprep.mubr.bf16.mxu0 0
    %3020 = vmatmul.mubr.bf16.gmra.mrb[0].mxu0 %v1960
    %v3021 = vpop.f32.mrb[0].mxu0
    %v3022 = vadd.f32 %v832, %v3021
    %v3023 = vpop.f32.mrb[0].mxu0
    %v3024 = vadd.f32 %v833, %v3023
    %v3025 = vpop.f32.mrb[0].mxu0
    %v3026 = vpop.f32.mrb[0].mxu0
    %3027 = vdwg.mxu0
    %3028 = vmatprep.subr.bf16.mxu0 %v1563
    %3029 = vmatpush1.bf16.msra.mxu0 %v1562
    %3030 = vmatprep.subr.bf16.mxu0 %v1619
    %3031 = vmatpush1.bf16.msra.mxu0 %v1618
    %3032 = vmatprep.subr.bf16.mxu0 %v1675
    %3033 = vmatpush1.bf16.msra.mxu0 %v1674
    %3034 = vmatprep.subr.bf16.mxu0 %v1731
    %3035 = vmatpush1.bf16.msra.mxu0 %v1730
    %3036 = vmatprep.subr.bf16.mxu0 0
    %3037 = vmatpush1.bf16.msra.mxu0 0
    %3038 = vmatprep.subr.bf16.mxu0 0
    %3039 = vmatpush1.bf16.msra.mxu0 0
    %3040 = vmatprep.subr.bf16.mxu0 0
    %3041 = vmatpush1.bf16.msra.mxu0 0
    %3042 = vmatprep.subr.bf16.mxu0 0
    %3043 = vmatpush1.bf16.msra.mxu0 0
    %3044 = vmatprep.subr.bf16.mxu0 0
    %3045 = vmatpush1.bf16.msra.mxu0 0
    %3046 = vmatprep.subr.bf16.mxu0 0
    %3047 = vmatpush1.bf16.msra.mxu0 0
    %3048 = vmatprep.subr.bf16.mxu0 0
    %3049 = vmatpush1.bf16.msra.mxu0 0
    %3050 = vmatprep.subr.bf16.mxu0 0
    %3051 = vmatpush1.bf16.msra.mxu0 0
    %3052 = vmatprep.subr.bf16.mxu0 0
    %3053 = vmatpush1.bf16.msra.mxu0 0
    %3054 = vmatprep.subr.bf16.mxu0 0
    %3055 = vmatpush1.bf16.msra.mxu0 0
    %3056 = vmatprep.subr.bf16.mxu0 0
    %3057 = vmatpush1.bf16.msra.mxu0 0
    %3058 = vmatprep.subr.bf16.mxu0 0
    %3059 = vmatpush1.bf16.msra.mxu0 0
    %3060 = vmatprep.mubr.bf16.mxu0 0
    %3061 = vmatmul.mubr.bf16.gmra.mrb[0].mxu0 %v1960
    %v3062 = vpop.f32.mrb[0].mxu0
    %v3063 = vadd.f32 %v834, %v3062
    %v3064 = vpop.f32.mrb[0].mxu0
    %v3065 = vadd.f32 %v835, %v3064
    %v3066 = vpop.f32.mrb[0].mxu0
    %v3067 = vpop.f32.mrb[0].mxu0
    %3068 = vdwg.mxu0
    %3069 = vmatprep.subr.bf16.mxu0 %v1565
    %3070 = vmatpush1.bf16.msra.mxu0 %v1564
    %3071 = vmatprep.subr.bf16.mxu0 %v1621
    %3072 = vmatpush1.bf16.msra.mxu0 %v1620
    %3073 = vmatprep.subr.bf16.mxu0 %v1677
    %3074 = vmatpush1.bf16.msra.mxu0 %v1676
    %3075 = vmatprep.subr.bf16.mxu0 %v1733
    %3076 = vmatpush1.bf16.msra.mxu0 %v1732
    %3077 = vmatprep.subr.bf16.mxu0 0
    %3078 = vmatpush1.bf16.msra.mxu0 0
    %3079 = vmatprep.subr.bf16.mxu0 0
    %3080 = vmatpush1.bf16.msra.mxu0 0
    %3081 = vmatprep.subr.bf16.mxu0 0
    %3082 = vmatpush1.bf16.msra.mxu0 0
    %3083 = vmatprep.subr.bf16.mxu0 0
    %3084 = vmatpush1.bf16.msra.mxu0 0
    %3085 = vmatprep.subr.bf16.mxu0 0
    %3086 = vmatpush1.bf16.msra.mxu0 0
    %3087 = vmatprep.subr.bf16.mxu0 0
    %3088 = vmatpush1.bf16.msra.mxu0 0
    %3089 = vmatprep.subr.bf16.mxu0 0
    %3090 = vmatpush1.bf16.msra.mxu0 0
    %3091 = vmatprep.subr.bf16.mxu0 0
    %3092 = vmatpush1.bf16.msra.mxu0 0
    %3093 = vmatprep.subr.bf16.mxu0 0
    %3094 = vmatpush1.bf16.msra.mxu0 0
    %3095 = vmatprep.subr.bf16.mxu0 0
    %3096 = vmatpush1.bf16.msra.mxu0 0
    %3097 = vmatprep.subr.bf16.mxu0 0
    %3098 = vmatpush1.bf16.msra.mxu0 0
    %3099 = vmatprep.subr.bf16.mxu0 0
    %3100 = vmatpush1.bf16.msra.mxu0 0
    %3101 = vmatprep.mubr.bf16.mxu0 0
    %3102 = vmatmul.mubr.bf16.gmra.mrb[0].mxu0 %v1960
    %v3103 = vpop.f32.mrb[0].mxu0
    %v3104 = vadd.f32 %v836, %v3103
    %v3105 = vpop.f32.mrb[0].mxu0
    %v3106 = vadd.f32 %v837, %v3105
    %v3107 = vpop.f32.mrb[0].mxu0
    %v3108 = vpop.f32.mrb[0].mxu0
    %3109 = vdwg.mxu0
    %s3110 = scalar_lea.vmem %s9, 1
    %v3111 = vld [vmem:[%s3110] ss:$2 sm:$0xff]
    %s3112 = scalar_lea.vmem %s9, 17
    %v3113 = vld [vmem:[%s3112] ss:$2 sm:$0xff]
    %s3114 = scalar_lea.vmem %s9, 33
    %v3115 = vld [vmem:[%s3114] ss:$2 sm:$0xff]
    %s3116 = scalar_lea.vmem %s9, 49
    %v3117 = vld [vmem:[%s3116] ss:$2 sm:$0xff]
    %s3118 = scalar_lea.vmem %s9, 65
    %v3119 = vld [vmem:[%s3118] ss:$2 sm:$0xff]
    %s3120 = scalar_lea.vmem %s9, 81
    %v3121 = vld [vmem:[%s3120] ss:$2 sm:$0xff]
    %s3122 = scalar_lea.vmem %s9, 97
    %v3123 = vld [vmem:[%s3122] ss:$2 sm:$0xff]
    %v3131 = vlaneseq
    %v3132 = vshrl.u32 %v3131, 7
    %v3133 = vsub.s32 0, %v3132
    %v3134 = vrot.slane %v3111, %v3133
    %v3135 = vlaneseq
    %v3136 = vshrl.u32 %v3135, 7
    %v3137 = vsub.s32 1, %v3136
    %v3138 = vrot.slane %v3111, %v3137
    %v3139 = vlaneseq
    %v3140 = vshrl.u32 %v3139, 7
    %v3141 = vsub.s32 2, %v3140
    %v3142 = vrot.slane %v3111, %v3141
    %v3143 = vlaneseq
    %v3144 = vshrl.u32 %v3143, 7
    %v3145 = vsub.s32 3, %v3144
    %v3146 = vrot.slane %v3111, %v3145
    %v3147 = vlaneseq
    %v3148 = vshrl.u32 %v3147, 7
    %v3149 = vsub.s32 4, %v3148
    %v3150 = vrot.slane %v3111, %v3149
    %v3151 = vlaneseq
    %v3152 = vshrl.u32 %v3151, 7
    %v3153 = vsub.s32 5, %v3152
    %v3154 = vrot.slane %v3111, %v3153
    %v3155 = vlaneseq
    %v3156 = vshrl.u32 %v3155, 7
    %v3157 = vsub.s32 6, %v3156
    %v3158 = vrot.slane %v3111, %v3157
    %v3159 = vlaneseq
    %v3160 = vshrl.u32 %v3159, 7
    %v3161 = vsub.s32 7, %v3160
    %v3162 = vrot.slane %v3111, %v3161
    %v3163 = vlaneseq
    %v3164 = vshrl.u32 %v3163, 7
    %v3165 = vsub.s32 0, %v3164
    %v3166 = vrot.slane %v3113, %v3165
    %v3167 = vlaneseq
    %v3168 = vshrl.u32 %v3167, 7
    %v3169 = vsub.s32 1, %v3168
    %v3170 = vrot.slane %v3113, %v3169
    %v3171 = vlaneseq
    %v3172 = vshrl.u32 %v3171, 7
    %v3173 = vsub.s32 2, %v3172
    %v3174 = vrot.slane %v3113, %v3173
    %v3175 = vlaneseq
    %v3176 = vshrl.u32 %v3175, 7
    %v3177 = vsub.s32 3, %v3176
    %v3178 = vrot.slane %v3113, %v3177
    %v3179 = vlaneseq
    %v3180 = vshrl.u32 %v3179, 7
    %v3181 = vsub.s32 4, %v3180
    %v3182 = vrot.slane %v3113, %v3181
    %v3183 = vlaneseq
    %v3184 = vshrl.u32 %v3183, 7
    %v3185 = vsub.s32 5, %v3184
    %v3186 = vrot.slane %v3113, %v3185
    %v3187 = vlaneseq
    %v3188 = vshrl.u32 %v3187, 7
    %v3189 = vsub.s32 6, %v3188
    %v3190 = vrot.slane %v3113, %v3189
    %v3191 = vlaneseq
    %v3192 = vshrl.u32 %v3191, 7
    %v3193 = vsub.s32 7, %v3192
    %v3194 = vrot.slane %v3113, %v3193
    %v3195 = vlaneseq
    %v3196 = vshrl.u32 %v3195, 7
    %v3197 = vsub.s32 0, %v3196
    %v3198 = vrot.slane %v3115, %v3197
    %v3199 = vlaneseq
    %v3200 = vshrl.u32 %v3199, 7
    %v3201 = vsub.s32 1, %v3200
    %v3202 = vrot.slane %v3115, %v3201
    %v3203 = vlaneseq
    %v3204 = vshrl.u32 %v3203, 7
    %v3205 = vsub.s32 2, %v3204
    %v3206 = vrot.slane %v3115, %v3205
    %v3207 = vlaneseq
    %v3208 = vshrl.u32 %v3207, 7
    %v3209 = vsub.s32 3, %v3208
    %v3210 = vrot.slane %v3115, %v3209
    %v3211 = vlaneseq
    %v3212 = vshrl.u32 %v3211, 7
    %v3213 = vsub.s32 4, %v3212
    %v3214 = vrot.slane %v3115, %v3213
    %v3215 = vlaneseq
    %v3216 = vshrl.u32 %v3215, 7
    %v3217 = vsub.s32 5, %v3216
    %v3218 = vrot.slane %v3115, %v3217
    %v3219 = vlaneseq
    %v3220 = vshrl.u32 %v3219, 7
    %v3221 = vsub.s32 6, %v3220
    %v3222 = vrot.slane %v3115, %v3221
    %v3223 = vlaneseq
    %v3224 = vshrl.u32 %v3223, 7
    %v3225 = vsub.s32 7, %v3224
    %v3226 = vrot.slane %v3115, %v3225
    %v3227 = vlaneseq
    %v3228 = vshrl.u32 %v3227, 7
    %v3229 = vsub.s32 0, %v3228
    %v3230 = vrot.slane %v3117, %v3229
    %v3231 = vlaneseq
    %v3232 = vshrl.u32 %v3231, 7
    %v3233 = vsub.s32 1, %v3232
    %v3234 = vrot.slane %v3117, %v3233
    %v3235 = vlaneseq
    %v3236 = vshrl.u32 %v3235, 7
    %v3237 = vsub.s32 2, %v3236
    %v3238 = vrot.slane %v3117, %v3237
    %v3239 = vlaneseq
    %v3240 = vshrl.u32 %v3239, 7
    %v3241 = vsub.s32 3, %v3240
    %v3242 = vrot.slane %v3117, %v3241
    %v3243 = vlaneseq
    %v3244 = vshrl.u32 %v3243, 7
    %v3245 = vsub.s32 4, %v3244
    %v3246 = vrot.slane %v3117, %v3245
    %v3247 = vlaneseq
    %v3248 = vshrl.u32 %v3247, 7
    %v3249 = vsub.s32 5, %v3248
    %v3250 = vrot.slane %v3117, %v3249
    %v3251 = vlaneseq
    %v3252 = vshrl.u32 %v3251, 7
    %v3253 = vsub.s32 6, %v3252
    %v3254 = vrot.slane %v3117, %v3253
    %v3255 = vlaneseq
    %v3256 = vshrl.u32 %v3255, 7
    %v3257 = vsub.s32 7, %v3256
    %v3258 = vrot.slane %v3117, %v3257
    %v3259 = vlaneseq
    %v3260 = vshrl.u32 %v3259, 7
    %v3261 = vsub.s32 0, %v3260
    %v3262 = vrot.slane %v3119, %v3261
    %v3263 = vlaneseq
    %v3264 = vshrl.u32 %v3263, 7
    %v3265 = vsub.s32 1, %v3264
    %v3266 = vrot.slane %v3119, %v3265
    %v3267 = vlaneseq
    %v3268 = vshrl.u32 %v3267, 7
    %v3269 = vsub.s32 2, %v3268
    %v3270 = vrot.slane %v3119, %v3269
    %v3271 = vlaneseq
    %v3272 = vshrl.u32 %v3271, 7
    %v3273 = vsub.s32 3, %v3272
    %v3274 = vrot.slane %v3119, %v3273
    %v3275 = vlaneseq
    %v3276 = vshrl.u32 %v3275, 7
    %v3277 = vsub.s32 4, %v3276
    %v3278 = vrot.slane %v3119, %v3277
    %v3279 = vlaneseq
    %v3280 = vshrl.u32 %v3279, 7
    %v3281 = vsub.s32 5, %v3280
    %v3282 = vrot.slane %v3119, %v3281
    %v3283 = vlaneseq
    %v3284 = vshrl.u32 %v3283, 7
    %v3285 = vsub.s32 6, %v3284
    %v3286 = vrot.slane %v3119, %v3285
    %v3287 = vlaneseq
    %v3288 = vshrl.u32 %v3287, 7
    %v3289 = vsub.s32 7, %v3288
    %v3290 = vrot.slane %v3119, %v3289
    %v3291 = vlaneseq
    %v3292 = vshrl.u32 %v3291, 7
    %v3293 = vsub.s32 0, %v3292
    %v3294 = vrot.slane %v3121, %v3293
    %v3295 = vlaneseq
    %v3296 = vshrl.u32 %v3295, 7
    %v3297 = vsub.s32 1, %v3296
    %v3298 = vrot.slane %v3121, %v3297
    %v3299 = vlaneseq
    %v3300 = vshrl.u32 %v3299, 7
    %v3301 = vsub.s32 2, %v3300
    %v3302 = vrot.slane %v3121, %v3301
    %v3303 = vlaneseq
    %v3304 = vshrl.u32 %v3303, 7
    %v3305 = vsub.s32 3, %v3304
    %v3306 = vrot.slane %v3121, %v3305
    %v3307 = vlaneseq
    %v3308 = vshrl.u32 %v3307, 7
    %v3309 = vsub.s32 4, %v3308
    %v3310 = vrot.slane %v3121, %v3309
    %v3311 = vlaneseq
    %v3312 = vshrl.u32 %v3311, 7
    %v3313 = vsub.s32 5, %v3312
    %v3314 = vrot.slane %v3121, %v3313
    %v3315 = vlaneseq
    %v3316 = vshrl.u32 %v3315, 7
    %v3317 = vsub.s32 6, %v3316
    %v3318 = vrot.slane %v3121, %v3317
    %v3319 = vlaneseq
    %v3320 = vshrl.u32 %v3319, 7
    %v3321 = vsub.s32 7, %v3320
    %v3322 = vrot.slane %v3121, %v3321
    %v3323 = vlaneseq
    %v3324 = vshrl.u32 %v3323, 7
    %v3325 = vsub.s32 0, %v3324
    %v3326 = vrot.slane %v3123, %v3325
    %v3327 = vlaneseq
    %v3328 = vshrl.u32 %v3327, 7
    %v3329 = vsub.s32 1, %v3328
    %v3330 = vrot.slane %v3123, %v3329
    %v3331 = vlaneseq
    %v3332 = vshrl.u32 %v3331, 7
    %v3333 = vsub.s32 2, %v3332
    %v3334 = vrot.slane %v3123, %v3333
    %v3335 = vlaneseq
    %v3336 = vshrl.u32 %v3335, 7
    %v3337 = vsub.s32 3, %v3336
    %v3338 = vrot.slane %v3123, %v3337
    %v3339 = vlaneseq
    %v3340 = vshrl.u32 %v3339, 7
    %v3341 = vsub.s32 4, %v3340
    %v3342 = vrot.slane %v3123, %v3341
    %v3343 = vlaneseq
    %v3344 = vshrl.u32 %v3343, 7
    %v3345 = vsub.s32 5, %v3344
    %v3346 = vrot.slane %v3123, %v3345
    %v3347 = vlaneseq
    %v3348 = vshrl.u32 %v3347, 7
    %v3349 = vsub.s32 6, %v3348
    %v3350 = vrot.slane %v3123, %v3349
    %v3351 = vlaneseq
    %v3352 = vshrl.u32 %v3351, 7
    %v3353 = vsub.s32 7, %v3352
    %v3354 = vrot.slane %v3123, %v3353
    %v3411 = vmul.f32 %v104, %v3134
    %v3412 = vmul.f32 %v104, %v3138
    %v3413 = vmul.f32 %v104, %v3142
    %v3414 = vmul.f32 %v104, %v3146
    %v3415 = vmul.f32 %v104, %v3150
    %v3416 = vmul.f32 %v104, %v3154
    %v3417 = vmul.f32 %v104, %v3158
    %v3418 = vmul.f32 %v104, %v3162
    %v3419 = vmul.f32 %v104, %v3166
    %v3420 = vmul.f32 %v104, %v3170
    %v3421 = vmul.f32 %v104, %v3174
    %v3422 = vmul.f32 %v104, %v3178
    %v3423 = vmul.f32 %v104, %v3182
    %v3424 = vmul.f32 %v104, %v3186
    %v3425 = vmul.f32 %v104, %v3190
    %v3426 = vmul.f32 %v104, %v3194
    %v3427 = vmul.f32 %v104, %v3198
    %v3428 = vmul.f32 %v104, %v3202
    %v3429 = vmul.f32 %v104, %v3206
    %v3430 = vmul.f32 %v104, %v3210
    %v3431 = vmul.f32 %v104, %v3214
    %v3432 = vmul.f32 %v104, %v3218
    %v3433 = vmul.f32 %v104, %v3222
    %v3434 = vmul.f32 %v104, %v3226
    %v3435 = vmul.f32 %v104, %v3230
    %v3436 = vmul.f32 %v104, %v3234
    %v3437 = vmul.f32 %v104, %v3238
    %v3438 = vmul.f32 %v104, %v3242
    %v3439 = vmul.f32 %v104, %v3246
    %v3440 = vmul.f32 %v104, %v3250
    %v3441 = vmul.f32 %v104, %v3254
    %v3442 = vmul.f32 %v104, %v3258
    %v3443 = vmul.f32 %v104, %v3262
    %v3444 = vmul.f32 %v104, %v3266
    %v3445 = vmul.f32 %v104, %v3270
    %v3446 = vmul.f32 %v104, %v3274
    %v3447 = vmul.f32 %v104, %v3278
    %v3448 = vmul.f32 %v104, %v3282
    %v3449 = vmul.f32 %v104, %v3286
    %v3450 = vmul.f32 %v104, %v3290
    %v3451 = vmul.f32 %v104, %v3294
    %v3452 = vmul.f32 %v104, %v3298
    %v3453 = vmul.f32 %v104, %v3302
    %v3454 = vmul.f32 %v104, %v3306
    %v3455 = vmul.f32 %v104, %v3310
    %v3456 = vmul.f32 %v104, %v3314
    %v3457 = vmul.f32 %v104, %v3318
    %v3458 = vmul.f32 %v104, %v3322
    %v3459 = vmul.f32 %v104, %v3326
    %v3460 = vmul.f32 %v104, %v3330
    %v3461 = vmul.f32 %v104, %v3334
    %v3462 = vmul.f32 %v104, %v3338
    %v3463 = vmul.f32 %v104, %v3342
    %v3464 = vmul.f32 %v104, %v3346
    %v3465 = vmul.f32 %v104, %v3350
    %v3466 = vmul.f32 %v104, %v3354
    %v3467 = vadd.f32 %v1997, %v3411
    %v3468 = vadd.f32 %v1999, %v3412
    %v3469 = vadd.f32 %v2038, %v3413
    %v3470 = vadd.f32 %v2040, %v3414
    %v3471 = vadd.f32 %v2079, %v3415
    %v3472 = vadd.f32 %v2081, %v3416
    %v3473 = vadd.f32 %v2120, %v3417
    %v3474 = vadd.f32 %v2122, %v3418
    %v3475 = vadd.f32 %v2161, %v3419
    %v3476 = vadd.f32 %v2163, %v3420
    %v3477 = vadd.f32 %v2202, %v3421
    %v3478 = vadd.f32 %v2204, %v3422
    %v3479 = vadd.f32 %v2243, %v3423
    %v3480 = vadd.f32 %v2245, %v3424
    %v3481 = vadd.f32 %v2284, %v3425
    %v3482 = vadd.f32 %v2286, %v3426
    %v3483 = vadd.f32 %v2325, %v3427
    %v3484 = vadd.f32 %v2327, %v3428
    %v3485 = vadd.f32 %v2366, %v3429
    %v3486 = vadd.f32 %v2368, %v3430
    %v3487 = vadd.f32 %v2407, %v3431
    %v3488 = vadd.f32 %v2409, %v3432
    %v3489 = vadd.f32 %v2448, %v3433
    %v3490 = vadd.f32 %v2450, %v3434
    %v3491 = vadd.f32 %v2489, %v3435
    %v3492 = vadd.f32 %v2491, %v3436
    %v3493 = vadd.f32 %v2530, %v3437
    %v3494 = vadd.f32 %v2532, %v3438
    %v3495 = vadd.f32 %v2571, %v3439
    %v3496 = vadd.f32 %v2573, %v3440
    %v3497 = vadd.f32 %v2612, %v3441
    %v3498 = vadd.f32 %v2614, %v3442
    %v3499 = vadd.f32 %v2653, %v3443
    %v3500 = vadd.f32 %v2655, %v3444
    %v3501 = vadd.f32 %v2694, %v3445
    %v3502 = vadd.f32 %v2696, %v3446
    %v3503 = vadd.f32 %v2735, %v3447
    %v3504 = vadd.f32 %v2737, %v3448
    %v3505 = vadd.f32 %v2776, %v3449
    %v3506 = vadd.f32 %v2778, %v3450
    %v3507 = vadd.f32 %v2817, %v3451
    %v3508 = vadd.f32 %v2819, %v3452
    %v3509 = vadd.f32 %v2858, %v3453
    %v3510 = vadd.f32 %v2860, %v3454
    %v3511 = vadd.f32 %v2899, %v3455
    %v3512 = vadd.f32 %v2901, %v3456
    %v3513 = vadd.f32 %v2940, %v3457
    %v3514 = vadd.f32 %v2942, %v3458
    %v3515 = vadd.f32 %v2981, %v3459
    %v3516 = vadd.f32 %v2983, %v3460
    %v3517 = vadd.f32 %v3022, %v3461
    %v3518 = vadd.f32 %v3024, %v3462
    %v3519 = vadd.f32 %v3063, %v3463
    %v3520 = vadd.f32 %v3065, %v3464
    %v3521 = vadd.f32 %v3104, %v3465
    %v3522 = vadd.f32 %v3106, %v3466
    %v3523 = vld [vmem:[%s10] sm:$0xff]
    %v3524 = vld [vmem:[%s10 + $0x8] sm:$0xff]
    %v3525 = vld [vmem:[%s10 + $0x10] sm:$0xff]
    %v3526 = vld [vmem:[%s10 + $0x18] sm:$0xff]
    %v3527 = vld [vmem:[%s10 + $0x20] sm:$0xff]
    %v3528 = vld [vmem:[%s10 + $0x28] sm:$0xff]
    %v3529 = vld [vmem:[%s10 + $0x30] sm:$0xff]
    %v3537 = vlaneseq
    %v3538 = vshrl.u32 %v3537, 7
    %v3539 = vsub.s32 0, %v3538
    %v3540 = vrot.slane %v3523, %v3539
    %v3541 = vlaneseq
    %v3542 = vshrl.u32 %v3541, 7
    %v3543 = vsub.s32 1, %v3542
    %v3544 = vrot.slane %v3523, %v3543
    %v3545 = vlaneseq
    %v3546 = vshrl.u32 %v3545, 7
    %v3547 = vsub.s32 2, %v3546
    %v3548 = vrot.slane %v3523, %v3547
    %v3549 = vlaneseq
    %v3550 = vshrl.u32 %v3549, 7
    %v3551 = vsub.s32 3, %v3550
    %v3552 = vrot.slane %v3523, %v3551
    %v3553 = vlaneseq
    %v3554 = vshrl.u32 %v3553, 7
    %v3555 = vsub.s32 4, %v3554
    %v3556 = vrot.slane %v3523, %v3555
    %v3557 = vlaneseq
    %v3558 = vshrl.u32 %v3557, 7
    %v3559 = vsub.s32 5, %v3558
    %v3560 = vrot.slane %v3523, %v3559
    %v3561 = vlaneseq
    %v3562 = vshrl.u32 %v3561, 7
    %v3563 = vsub.s32 6, %v3562
    %v3564 = vrot.slane %v3523, %v3563
    %v3565 = vlaneseq
    %v3566 = vshrl.u32 %v3565, 7
    %v3567 = vsub.s32 7, %v3566
    %v3568 = vrot.slane %v3523, %v3567
    %v3569 = vlaneseq
    %v3570 = vshrl.u32 %v3569, 7
    %v3571 = vsub.s32 0, %v3570
    %v3572 = vrot.slane %v3524, %v3571
    %v3573 = vlaneseq
    %v3574 = vshrl.u32 %v3573, 7
    %v3575 = vsub.s32 1, %v3574
    %v3576 = vrot.slane %v3524, %v3575
    %v3577 = vlaneseq
    %v3578 = vshrl.u32 %v3577, 7
    %v3579 = vsub.s32 2, %v3578
    %v3580 = vrot.slane %v3524, %v3579
    %v3581 = vlaneseq
    %v3582 = vshrl.u32 %v3581, 7
    %v3583 = vsub.s32 3, %v3582
    %v3584 = vrot.slane %v3524, %v3583
    %v3585 = vlaneseq
    %v3586 = vshrl.u32 %v3585, 7
    %v3587 = vsub.s32 4, %v3586
    %v3588 = vrot.slane %v3524, %v3587
    %v3589 = vlaneseq
    %v3590 = vshrl.u32 %v3589, 7
    %v3591 = vsub.s32 5, %v3590
    %v3592 = vrot.slane %v3524, %v3591
    %v3593 = vlaneseq
    %v3594 = vshrl.u32 %v3593, 7
    %v3595 = vsub.s32 6, %v3594
    %v3596 = vrot.slane %v3524, %v3595
    %v3597 = vlaneseq
    %v3598 = vshrl.u32 %v3597, 7
    %v3599 = vsub.s32 7, %v3598
    %v3600 = vrot.slane %v3524, %v3599
    %v3601 = vlaneseq
    %v3602 = vshrl.u32 %v3601, 7
    %v3603 = vsub.s32 0, %v3602
    %v3604 = vrot.slane %v3525, %v3603
    %v3605 = vlaneseq
    %v3606 = vshrl.u32 %v3605, 7
    %v3607 = vsub.s32 1, %v3606
    %v3608 = vrot.slane %v3525, %v3607
    %v3609 = vlaneseq
    %v3610 = vshrl.u32 %v3609, 7
    %v3611 = vsub.s32 2, %v3610
    %v3612 = vrot.slane %v3525, %v3611
    %v3613 = vlaneseq
    %v3614 = vshrl.u32 %v3613, 7
    %v3615 = vsub.s32 3, %v3614
    %v3616 = vrot.slane %v3525, %v3615
    %v3617 = vlaneseq
    %v3618 = vshrl.u32 %v3617, 7
    %v3619 = vsub.s32 4, %v3618
    %v3620 = vrot.slane %v3525, %v3619
    %v3621 = vlaneseq
    %v3622 = vshrl.u32 %v3621, 7
    %v3623 = vsub.s32 5, %v3622
    %v3624 = vrot.slane %v3525, %v3623
    %v3625 = vlaneseq
    %v3626 = vshrl.u32 %v3625, 7
    %v3627 = vsub.s32 6, %v3626
    %v3628 = vrot.slane %v3525, %v3627
    %v3629 = vlaneseq
    %v3630 = vshrl.u32 %v3629, 7
    %v3631 = vsub.s32 7, %v3630
    %v3632 = vrot.slane %v3525, %v3631
    %v3633 = vlaneseq
    %v3634 = vshrl.u32 %v3633, 7
    %v3635 = vsub.s32 0, %v3634
    %v3636 = vrot.slane %v3526, %v3635
    %v3637 = vlaneseq
    %v3638 = vshrl.u32 %v3637, 7
    %v3639 = vsub.s32 1, %v3638
    %v3640 = vrot.slane %v3526, %v3639
    %v3641 = vlaneseq
    %v3642 = vshrl.u32 %v3641, 7
    %v3643 = vsub.s32 2, %v3642
    %v3644 = vrot.slane %v3526, %v3643
    %v3645 = vlaneseq
    %v3646 = vshrl.u32 %v3645, 7
    %v3647 = vsub.s32 3, %v3646
    %v3648 = vrot.slane %v3526, %v3647
    %v3649 = vlaneseq
    %v3650 = vshrl.u32 %v3649, 7
    %v3651 = vsub.s32 4, %v3650
    %v3652 = vrot.slane %v3526, %v3651
    %v3653 = vlaneseq
    %v3654 = vshrl.u32 %v3653, 7
    %v3655 = vsub.s32 5, %v3654
    %v3656 = vrot.slane %v3526, %v3655
    %v3657 = vlaneseq
    %v3658 = vshrl.u32 %v3657, 7
    %v3659 = vsub.s32 6, %v3658
    %v3660 = vrot.slane %v3526, %v3659
    %v3661 = vlaneseq
    %v3662 = vshrl.u32 %v3661, 7
    %v3663 = vsub.s32 7, %v3662
    %v3664 = vrot.slane %v3526, %v3663
    %v3665 = vlaneseq
    %v3666 = vshrl.u32 %v3665, 7
    %v3667 = vsub.s32 0, %v3666
    %v3668 = vrot.slane %v3527, %v3667
    %v3669 = vlaneseq
    %v3670 = vshrl.u32 %v3669, 7
    %v3671 = vsub.s32 1, %v3670
    %v3672 = vrot.slane %v3527, %v3671
    %v3673 = vlaneseq
    %v3674 = vshrl.u32 %v3673, 7
    %v3675 = vsub.s32 2, %v3674
    %v3676 = vrot.slane %v3527, %v3675
    %v3677 = vlaneseq
    %v3678 = vshrl.u32 %v3677, 7
    %v3679 = vsub.s32 3, %v3678
    %v3680 = vrot.slane %v3527, %v3679
    %v3681 = vlaneseq
    %v3682 = vshrl.u32 %v3681, 7
    %v3683 = vsub.s32 4, %v3682
    %v3684 = vrot.slane %v3527, %v3683
    %v3685 = vlaneseq
    %v3686 = vshrl.u32 %v3685, 7
    %v3687 = vsub.s32 5, %v3686
    %v3688 = vrot.slane %v3527, %v3687
    %v3689 = vlaneseq
    %v3690 = vshrl.u32 %v3689, 7
    %v3691 = vsub.s32 6, %v3690
    %v3692 = vrot.slane %v3527, %v3691
    %v3693 = vlaneseq
    %v3694 = vshrl.u32 %v3693, 7
    %v3695 = vsub.s32 7, %v3694
    %v3696 = vrot.slane %v3527, %v3695
    %v3697 = vlaneseq
    %v3698 = vshrl.u32 %v3697, 7
    %v3699 = vsub.s32 0, %v3698
    %v3700 = vrot.slane %v3528, %v3699
    %v3701 = vlaneseq
    %v3702 = vshrl.u32 %v3701, 7
    %v3703 = vsub.s32 1, %v3702
    %v3704 = vrot.slane %v3528, %v3703
    %v3705 = vlaneseq
    %v3706 = vshrl.u32 %v3705, 7
    %v3707 = vsub.s32 2, %v3706
    %v3708 = vrot.slane %v3528, %v3707
    %v3709 = vlaneseq
    %v3710 = vshrl.u32 %v3709, 7
    %v3711 = vsub.s32 3, %v3710
    %v3712 = vrot.slane %v3528, %v3711
    %v3713 = vlaneseq
    %v3714 = vshrl.u32 %v3713, 7
    %v3715 = vsub.s32 4, %v3714
    %v3716 = vrot.slane %v3528, %v3715
    %v3717 = vlaneseq
    %v3718 = vshrl.u32 %v3717, 7
    %v3719 = vsub.s32 5, %v3718
    %v3720 = vrot.slane %v3528, %v3719
    %v3721 = vlaneseq
    %v3722 = vshrl.u32 %v3721, 7
    %v3723 = vsub.s32 6, %v3722
    %v3724 = vrot.slane %v3528, %v3723
    %v3725 = vlaneseq
    %v3726 = vshrl.u32 %v3725, 7
    %v3727 = vsub.s32 7, %v3726
    %v3728 = vrot.slane %v3528, %v3727
    %v3729 = vlaneseq
    %v3730 = vshrl.u32 %v3729, 7
    %v3731 = vsub.s32 0, %v3730
    %v3732 = vrot.slane %v3529, %v3731
    %v3733 = vlaneseq
    %v3734 = vshrl.u32 %v3733, 7
    %v3735 = vsub.s32 1, %v3734
    %v3736 = vrot.slane %v3529, %v3735
    %v3737 = vlaneseq
    %v3738 = vshrl.u32 %v3737, 7
    %v3739 = vsub.s32 2, %v3738
    %v3740 = vrot.slane %v3529, %v3739
    %v3741 = vlaneseq
    %v3742 = vshrl.u32 %v3741, 7
    %v3743 = vsub.s32 3, %v3742
    %v3744 = vrot.slane %v3529, %v3743
    %v3745 = vlaneseq
    %v3746 = vshrl.u32 %v3745, 7
    %v3747 = vsub.s32 4, %v3746
    %v3748 = vrot.slane %v3529, %v3747
    %v3749 = vlaneseq
    %v3750 = vshrl.u32 %v3749, 7
    %v3751 = vsub.s32 5, %v3750
    %v3752 = vrot.slane %v3529, %v3751
    %v3753 = vlaneseq
    %v3754 = vshrl.u32 %v3753, 7
    %v3755 = vsub.s32 6, %v3754
    %v3756 = vrot.slane %v3529, %v3755
    %v3757 = vlaneseq
    %v3758 = vshrl.u32 %v3757, 7
    %v3759 = vsub.s32 7, %v3758
    %v3760 = vrot.slane %v3529, %v3759
    %v3817 = vadd.f32 %v3467, %v3540
    %v3818 = vadd.f32 %v3468, %v3544
    %v3819 = vadd.f32 %v3469, %v3548
    %v3820 = vadd.f32 %v3470, %v3552
    %v3821 = vadd.f32 %v3471, %v3556
    %v3822 = vadd.f32 %v3472, %v3560
    %v3823 = vadd.f32 %v3473, %v3564
    %v3824 = vadd.f32 %v3474, %v3568
    %v3825 = vadd.f32 %v3475, %v3572
    %v3826 = vadd.f32 %v3476, %v3576
    %v3827 = vadd.f32 %v3477, %v3580
    %v3828 = vadd.f32 %v3478, %v3584
    %v3829 = vadd.f32 %v3479, %v3588
    %v3830 = vadd.f32 %v3480, %v3592
    %v3831 = vadd.f32 %v3481, %v3596
    %v3832 = vadd.f32 %v3482, %v3600
    %v3833 = vadd.f32 %v3483, %v3604
    %v3834 = vadd.f32 %v3484, %v3608
    %v3835 = vadd.f32 %v3485, %v3612
    %v3836 = vadd.f32 %v3486, %v3616
    %v3837 = vadd.f32 %v3487, %v3620
    %v3838 = vadd.f32 %v3488, %v3624
    %v3839 = vadd.f32 %v3489, %v3628
    %v3840 = vadd.f32 %v3490, %v3632
    %v3841 = vadd.f32 %v3491, %v3636
    %v3842 = vadd.f32 %v3492, %v3640
    %v3843 = vadd.f32 %v3493, %v3644
    %v3844 = vadd.f32 %v3494, %v3648
    %v3845 = vadd.f32 %v3495, %v3652
    %v3846 = vadd.f32 %v3496, %v3656
    %v3847 = vadd.f32 %v3497, %v3660
    %v3848 = vadd.f32 %v3498, %v3664
    %v3849 = vadd.f32 %v3499, %v3668
    %v3850 = vadd.f32 %v3500, %v3672
    %v3851 = vadd.f32 %v3501, %v3676
    %v3852 = vadd.f32 %v3502, %v3680
    %v3853 = vadd.f32 %v3503, %v3684
    %v3854 = vadd.f32 %v3504, %v3688
    %v3855 = vadd.f32 %v3505, %v3692
    %v3856 = vadd.f32 %v3506, %v3696
    %v3857 = vadd.f32 %v3507, %v3700
    %v3858 = vadd.f32 %v3508, %v3704
    %v3859 = vadd.f32 %v3509, %v3708
    %v3860 = vadd.f32 %v3510, %v3712
    %v3861 = vadd.f32 %v3511, %v3716
    %v3862 = vadd.f32 %v3512, %v3720
    %v3863 = vadd.f32 %v3513, %v3724
    %v3864 = vadd.f32 %v3514, %v3728
    %v3865 = vadd.f32 %v3515, %v3732
    %v3866 = vadd.f32 %v3516, %v3736
    %v3867 = vadd.f32 %v3517, %v3740
    %v3868 = vadd.f32 %v3518, %v3744
    %v3869 = vadd.f32 %v3519, %v3748
    %v3870 = vadd.f32 %v3520, %v3752
    %v3871 = vadd.f32 %v3521, %v3756
    %v3872 = vadd.f32 %v3522, %v3760
    %v3873 = vtanh.pop %v3817
    %v3874 = vtanh.pop %v3818
    %v3875 = vtanh.pop %v3819
    %v3876 = vtanh.pop %v3820
    %v3877 = vtanh.pop %v3821
    %v3878 = vtanh.pop %v3822
    %v3879 = vtanh.pop %v3823
    %v3880 = vtanh.pop %v3824
    %v3881 = vtanh.pop %v3825
    %v3882 = vtanh.pop %v3826
    %v3883 = vtanh.pop %v3827
    %v3884 = vtanh.pop %v3828
    %v3885 = vtanh.pop %v3829
    %v3886 = vtanh.pop %v3830
    %v3887 = vtanh.pop %v3831
    %v3888 = vtanh.pop %v3832
    %v3889 = vtanh.pop %v3833
    %v3890 = vtanh.pop %v3834
    %v3891 = vtanh.pop %v3835
    %v3892 = vtanh.pop %v3836
    %v3893 = vtanh.pop %v3837
    %v3894 = vtanh.pop %v3838
    %v3895 = vtanh.pop %v3839
    %v3896 = vtanh.pop %v3840
    %v3897 = vtanh.pop %v3841
    %v3898 = vtanh.pop %v3842
    %v3899 = vtanh.pop %v3843
    %v3900 = vtanh.pop %v3844
    %v3901 = vtanh.pop %v3845
    %v3902 = vtanh.pop %v3846
    %v3903 = vtanh.pop %v3847
    %v3904 = vtanh.pop %v3848
    %v3905 = vtanh.pop %v3849
    %v3906 = vtanh.pop %v3850
    %v3907 = vtanh.pop %v3851
    %v3908 = vtanh.pop %v3852
    %v3909 = vtanh.pop %v3853
    %v3910 = vtanh.pop %v3854
    %v3911 = vtanh.pop %v3855
    %v3912 = vtanh.pop %v3856
    %v3913 = vtanh.pop %v3857
    %v3914 = vtanh.pop %v3858
    %v3915 = vtanh.pop %v3859
    %v3916 = vtanh.pop %v3860
    %v3917 = vtanh.pop %v3861
    %v3918 = vtanh.pop %v3862
    %v3919 = vtanh.pop %v3863
    %v3920 = vtanh.pop %v3864
    %v3921 = vtanh.pop %v3865
    %v3922 = vtanh.pop %v3866
    %v3923 = vtanh.pop %v3867
    %v3924 = vtanh.pop %v3868
    %v3925 = vtanh.pop %v3869
    %v3926 = vtanh.pop %v3870
    %v3927 = vtanh.pop %v3871
    %v3928 = vtanh.pop %v3872
    %v3929 = vlaneseq
    %v3930 = vand.u32 %v3929, 127
    %v3931 = vld [vmem:[%s11] ss:$8 sm:$0x3]
    %v3933 = vlaneseq
    %v3934 = vshrl.u32 %v3933, 7
    %v3935 = vsub.s32 0, %v3934
    %v3936 = vrot.slane %v3931, %v3935
    %v3937 = vlaneseq
    %v3938 = vshrl.u32 %v3937, 7
    %v3939 = vsub.s32 1, %v3938
    %v3940 = vrot.slane %v3931, %v3939
    %v3943 = vmul.f32 %v3873, %v3936
    %v3944 = vmul.f32 %v3874, %v3940
    %vm3945 = vcmask 1041408
    %v3946 = vsel %vm3945, %v3943, 0.0
    %v3947 = vsel %vm3945, %v3944, 0.0
    %v3948 = vadd.f32 %v3946, %v3947
    %3949 = vadd.xlane.f32.xlu0 %v3948
    %v3950 = vpop.xlane.xlu0 %3949
    %vm3951 = vcmp.eq.s32.totalorder %v3930, 0
    %v3952 = vsel %vm3951, 1, 0
    %vm3953 = vcmp.eq.s32.totalorder %v3952, 1
    %v3954 = vsel %vm3953, %v3950, 0.0
    %v3955 = vadd.f32 %v3954, 0.0
    %s3956 = scalar_lea.vmem %s11, 1
    %v3957 = vld [vmem:[%s3956] ss:$8 sm:$0x3]
    %v3959 = vlaneseq
    %v3960 = vshrl.u32 %v3959, 7
    %v3961 = vsub.s32 0, %v3960
    %v3962 = vrot.slane %v3957, %v3961
    %v3963 = vlaneseq
    %v3964 = vshrl.u32 %v3963, 7
    %v3965 = vsub.s32 1, %v3964
    %v3966 = vrot.slane %v3957, %v3965
    %v3969 = vmul.f32 %v3875, %v3962
    %v3970 = vmul.f32 %v3876, %v3966
    %v3971 = vsel %vm3945, %v3969, 0.0
    %v3972 = vsel %vm3945, %v3970, 0.0
    %v3973 = vadd.f32 %v3971, %v3972
    %3974 = vadd.xlane.f32.xlu0 %v3973
    %v3975 = vpop.xlane.xlu0 %3974
    %vm3976 = vcmp.eq.s32.totalorder %v3930, 1
    %v3977 = vsel %vm3976, 1, 0
    %vm3978 = vcmp.eq.s32.totalorder %v3977, 1
    %v3979 = vsel %vm3978, %v3975, 0.0
    %v3980 = vadd.f32 %v3955, %v3979
    %s3981 = scalar_lea.vmem %s11, 2
    %v3982 = vld [vmem:[%s3981] ss:$8 sm:$0x3]
    %v3984 = vlaneseq
    %v3985 = vshrl.u32 %v3984, 7
    %v3986 = vsub.s32 0, %v3985
    %v3987 = vrot.slane %v3982, %v3986
    %v3988 = vlaneseq
    %v3989 = vshrl.u32 %v3988, 7
    %v3990 = vsub.s32 1, %v3989
    %v3991 = vrot.slane %v3982, %v3990
    %v3994 = vmul.f32 %v3877, %v3987
    %v3995 = vmul.f32 %v3878, %v3991
    %v3996 = vsel %vm3945, %v3994, 0.0
    %v3997 = vsel %vm3945, %v3995, 0.0
    %v3998 = vadd.f32 %v3996, %v3997
    %3999 = vadd.xlane.f32.xlu0 %v3998
    %v4000 = vpop.xlane.xlu0 %3999
    %vm4001 = vcmp.eq.s32.totalorder %v3930, 2
    %v4002 = vsel %vm4001, 1, 0
    %vm4003 = vcmp.eq.s32.totalorder %v4002, 1
    %v4004 = vsel %vm4003, %v4000, 0.0
    %v4005 = vadd.f32 %v3980, %v4004
    %s4006 = scalar_lea.vmem %s11, 3
    %v4007 = vld [vmem:[%s4006] ss:$8 sm:$0x3]
    %v4009 = vlaneseq
    %v4010 = vshrl.u32 %v4009, 7
    %v4011 = vsub.s32 0, %v4010
    %v4012 = vrot.slane %v4007, %v4011
    %v4013 = vlaneseq
    %v4014 = vshrl.u32 %v4013, 7
    %v4015 = vsub.s32 1, %v4014
    %v4016 = vrot.slane %v4007, %v4015
    %v4019 = vmul.f32 %v3879, %v4012
    %v4020 = vmul.f32 %v3880, %v4016
    %v4021 = vsel %vm3945, %v4019, 0.0
    %v4022 = vsel %vm3945, %v4020, 0.0
    %v4023 = vadd.f32 %v4021, %v4022
    %4024 = vadd.xlane.f32.xlu0 %v4023
    %v4025 = vpop.xlane.xlu0 %4024
    %vm4026 = vcmp.eq.s32.totalorder %v3930, 3
    %v4027 = vsel %vm4026, 1, 0
    %vm4028 = vcmp.eq.s32.totalorder %v4027, 1
    %v4029 = vsel %vm4028, %v4025, 0.0
    %v4030 = vadd.f32 %v4005, %v4029
    %s4031 = scalar_lea.vmem %s11, 4
    %v4032 = vld [vmem:[%s4031] ss:$8 sm:$0x3]
    %v4034 = vlaneseq
    %v4035 = vshrl.u32 %v4034, 7
    %v4036 = vsub.s32 0, %v4035
    %v4037 = vrot.slane %v4032, %v4036
    %v4038 = vlaneseq
    %v4039 = vshrl.u32 %v4038, 7
    %v4040 = vsub.s32 1, %v4039
    %v4041 = vrot.slane %v4032, %v4040
    %v4044 = vmul.f32 %v3881, %v4037
    %v4045 = vmul.f32 %v3882, %v4041
    %v4046 = vsel %vm3945, %v4044, 0.0
    %v4047 = vsel %vm3945, %v4045, 0.0
    %v4048 = vadd.f32 %v4046, %v4047
    %4049 = vadd.xlane.f32.xlu0 %v4048
    %v4050 = vpop.xlane.xlu0 %4049
    %vm4051 = vcmp.eq.s32.totalorder %v3930, 4
    %v4052 = vsel %vm4051, 1, 0
    %vm4053 = vcmp.eq.s32.totalorder %v4052, 1
    %v4054 = vsel %vm4053, %v4050, 0.0
    %v4055 = vadd.f32 %v4030, %v4054
    %s4056 = scalar_lea.vmem %s11, 5
    %v4057 = vld [vmem:[%s4056] ss:$8 sm:$0x3]
    %v4059 = vlaneseq
    %v4060 = vshrl.u32 %v4059, 7
    %v4061 = vsub.s32 0, %v4060
    %v4062 = vrot.slane %v4057, %v4061
    %v4063 = vlaneseq
    %v4064 = vshrl.u32 %v4063, 7
    %v4065 = vsub.s32 1, %v4064
    %v4066 = vrot.slane %v4057, %v4065
    %v4069 = vmul.f32 %v3883, %v4062
    %v4070 = vmul.f32 %v3884, %v4066
    %v4071 = vsel %vm3945, %v4069, 0.0
    %v4072 = vsel %vm3945, %v4070, 0.0
    %v4073 = vadd.f32 %v4071, %v4072
    %4074 = vadd.xlane.f32.xlu0 %v4073
    %v4075 = vpop.xlane.xlu0 %4074
    %vm4076 = vcmp.eq.s32.totalorder %v3930, 5
    %v4077 = vsel %vm4076, 1, 0
    %vm4078 = vcmp.eq.s32.totalorder %v4077, 1
    %v4079 = vsel %vm4078, %v4075, 0.0
    %v4080 = vadd.f32 %v4055, %v4079
    %s4081 = scalar_lea.vmem %s11, 6
    %v4082 = vld [vmem:[%s4081] ss:$8 sm:$0x3]
    %v4084 = vlaneseq
    %v4085 = vshrl.u32 %v4084, 7
    %v4086 = vsub.s32 0, %v4085
    %v4087 = vrot.slane %v4082, %v4086
    %v4088 = vlaneseq
    %v4089 = vshrl.u32 %v4088, 7
    %v4090 = vsub.s32 1, %v4089
    %v4091 = vrot.slane %v4082, %v4090
    %v4094 = vmul.f32 %v3885, %v4087
    %v4095 = vmul.f32 %v3886, %v4091
    %v4096 = vsel %vm3945, %v4094, 0.0
    %v4097 = vsel %vm3945, %v4095, 0.0
    %v4098 = vadd.f32 %v4096, %v4097
    %4099 = vadd.xlane.f32.xlu0 %v4098
    %v4100 = vpop.xlane.xlu0 %4099
    %vm4101 = vcmp.eq.s32.totalorder %v3930, 6
    %v4102 = vsel %vm4101, 1, 0
    %vm4103 = vcmp.eq.s32.totalorder %v4102, 1
    %v4104 = vsel %vm4103, %v4100, 0.0
    %v4105 = vadd.f32 %v4080, %v4104
    %s4106 = scalar_lea.vmem %s11, 7
    %v4107 = vld [vmem:[%s4106] ss:$8 sm:$0x3]
    %v4109 = vlaneseq
    %v4110 = vshrl.u32 %v4109, 7
    %v4111 = vsub.s32 0, %v4110
    %v4112 = vrot.slane %v4107, %v4111
    %v4113 = vlaneseq
    %v4114 = vshrl.u32 %v4113, 7
    %v4115 = vsub.s32 1, %v4114
    %v4116 = vrot.slane %v4107, %v4115
    %v4119 = vmul.f32 %v3887, %v4112
    %v4120 = vmul.f32 %v3888, %v4116
    %v4121 = vsel %vm3945, %v4119, 0.0
    %v4122 = vsel %vm3945, %v4120, 0.0
    %v4123 = vadd.f32 %v4121, %v4122
    %4124 = vadd.xlane.f32.xlu0 %v4123
    %v4125 = vpop.xlane.xlu0 %4124
    %vm4126 = vcmp.eq.s32.totalorder %v3930, 7
    %v4127 = vsel %vm4126, 1, 0
    %vm4128 = vcmp.eq.s32.totalorder %v4127, 1
    %v4129 = vsel %vm4128, %v4125, 0.0
    %v4130 = vadd.f32 %v4105, %v4129
    %s4131 = scalar_lea.vmem %s11, 16
    %v4132 = vld [vmem:[%s4131] ss:$8 sm:$0x3]
    %v4134 = vlaneseq
    %v4135 = vshrl.u32 %v4134, 7
    %v4136 = vsub.s32 0, %v4135
    %v4137 = vrot.slane %v4132, %v4136
    %v4138 = vlaneseq
    %v4139 = vshrl.u32 %v4138, 7
    %v4140 = vsub.s32 1, %v4139
    %v4141 = vrot.slane %v4132, %v4140
    %v4144 = vmul.f32 %v3889, %v4137
    %v4145 = vmul.f32 %v3890, %v4141
    %v4146 = vsel %vm3945, %v4144, 0.0
    %v4147 = vsel %vm3945, %v4145, 0.0
    %v4148 = vadd.f32 %v4146, %v4147
    %4149 = vadd.xlane.f32.xlu0 %v4148
    %v4150 = vpop.xlane.xlu0 %4149
    %vm4151 = vcmp.eq.s32.totalorder %v3930, 8
    %v4152 = vsel %vm4151, 1, 0
    %vm4153 = vcmp.eq.s32.totalorder %v4152, 1
    %v4154 = vsel %vm4153, %v4150, 0.0
    %v4155 = vadd.f32 %v4130, %v4154
    %s4156 = scalar_lea.vmem %s11, 17
    %v4157 = vld [vmem:[%s4156] ss:$8 sm:$0x3]
    %v4159 = vlaneseq
    %v4160 = vshrl.u32 %v4159, 7
    %v4161 = vsub.s32 0, %v4160
    %v4162 = vrot.slane %v4157, %v4161
    %v4163 = vlaneseq
    %v4164 = vshrl.u32 %v4163, 7
    %v4165 = vsub.s32 1, %v4164
    %v4166 = vrot.slane %v4157, %v4165
    %v4169 = vmul.f32 %v3891, %v4162
    %v4170 = vmul.f32 %v3892, %v4166
    %v4171 = vsel %vm3945, %v4169, 0.0
    %v4172 = vsel %vm3945, %v4170, 0.0
    %v4173 = vadd.f32 %v4171, %v4172
    %4174 = vadd.xlane.f32.xlu0 %v4173
    %v4175 = vpop.xlane.xlu0 %4174
    %vm4176 = vcmp.eq.s32.totalorder %v3930, 9
    %v4177 = vsel %vm4176, 1, 0
    %vm4178 = vcmp.eq.s32.totalorder %v4177, 1
    %v4179 = vsel %vm4178, %v4175, 0.0
    %v4180 = vadd.f32 %v4155, %v4179
    %s4181 = scalar_lea.vmem %s11, 18
    %v4182 = vld [vmem:[%s4181] ss:$8 sm:$0x3]
    %v4184 = vlaneseq
    %v4185 = vshrl.u32 %v4184, 7
    %v4186 = vsub.s32 0, %v4185
    %v4187 = vrot.slane %v4182, %v4186
    %v4188 = vlaneseq
    %v4189 = vshrl.u32 %v4188, 7
    %v4190 = vsub.s32 1, %v4189
    %v4191 = vrot.slane %v4182, %v4190
    %v4194 = vmul.f32 %v3893, %v4187
    %v4195 = vmul.f32 %v3894, %v4191
    %v4196 = vsel %vm3945, %v4194, 0.0
    %v4197 = vsel %vm3945, %v4195, 0.0
    %v4198 = vadd.f32 %v4196, %v4197
    %4199 = vadd.xlane.f32.xlu0 %v4198
    %v4200 = vpop.xlane.xlu0 %4199
    %vm4201 = vcmp.eq.s32.totalorder %v3930, 10
    %v4202 = vsel %vm4201, 1, 0
    %vm4203 = vcmp.eq.s32.totalorder %v4202, 1
    %v4204 = vsel %vm4203, %v4200, 0.0
    %v4205 = vadd.f32 %v4180, %v4204
    %s4206 = scalar_lea.vmem %s11, 19
    %v4207 = vld [vmem:[%s4206] ss:$8 sm:$0x3]
    %v4209 = vlaneseq
    %v4210 = vshrl.u32 %v4209, 7
    %v4211 = vsub.s32 0, %v4210
    %v4212 = vrot.slane %v4207, %v4211
    %v4213 = vlaneseq
    %v4214 = vshrl.u32 %v4213, 7
    %v4215 = vsub.s32 1, %v4214
    %v4216 = vrot.slane %v4207, %v4215
    %v4219 = vmul.f32 %v3895, %v4212
    %v4220 = vmul.f32 %v3896, %v4216
    %v4221 = vsel %vm3945, %v4219, 0.0
    %v4222 = vsel %vm3945, %v4220, 0.0
    %v4223 = vadd.f32 %v4221, %v4222
    %4224 = vadd.xlane.f32.xlu0 %v4223
    %v4225 = vpop.xlane.xlu0 %4224
    %vm4226 = vcmp.eq.s32.totalorder %v3930, 11
    %v4227 = vsel %vm4226, 1, 0
    %vm4228 = vcmp.eq.s32.totalorder %v4227, 1
    %v4229 = vsel %vm4228, %v4225, 0.0
    %v4230 = vadd.f32 %v4205, %v4229
    %s4231 = scalar_lea.vmem %s11, 20
    %v4232 = vld [vmem:[%s4231] ss:$8 sm:$0x3]
    %v4234 = vlaneseq
    %v4235 = vshrl.u32 %v4234, 7
    %v4236 = vsub.s32 0, %v4235
    %v4237 = vrot.slane %v4232, %v4236
    %v4238 = vlaneseq
    %v4239 = vshrl.u32 %v4238, 7
    %v4240 = vsub.s32 1, %v4239
    %v4241 = vrot.slane %v4232, %v4240
    %v4244 = vmul.f32 %v3897, %v4237
    %v4245 = vmul.f32 %v3898, %v4241
    %v4246 = vsel %vm3945, %v4244, 0.0
    %v4247 = vsel %vm3945, %v4245, 0.0
    %v4248 = vadd.f32 %v4246, %v4247
    %4249 = vadd.xlane.f32.xlu0 %v4248
    %v4250 = vpop.xlane.xlu0 %4249
    %vm4251 = vcmp.eq.s32.totalorder %v3930, 12
    %v4252 = vsel %vm4251, 1, 0
    %vm4253 = vcmp.eq.s32.totalorder %v4252, 1
    %v4254 = vsel %vm4253, %v4250, 0.0
    %v4255 = vadd.f32 %v4230, %v4254
    %s4256 = scalar_lea.vmem %s11, 21
    %v4257 = vld [vmem:[%s4256] ss:$8 sm:$0x3]
    %v4259 = vlaneseq
    %v4260 = vshrl.u32 %v4259, 7
    %v4261 = vsub.s32 0, %v4260
    %v4262 = vrot.slane %v4257, %v4261
    %v4263 = vlaneseq
    %v4264 = vshrl.u32 %v4263, 7
    %v4265 = vsub.s32 1, %v4264
    %v4266 = vrot.slane %v4257, %v4265
    %v4269 = vmul.f32 %v3899, %v4262
    %v4270 = vmul.f32 %v3900, %v4266
    %v4271 = vsel %vm3945, %v4269, 0.0
    %v4272 = vsel %vm3945, %v4270, 0.0
    %v4273 = vadd.f32 %v4271, %v4272
    %4274 = vadd.xlane.f32.xlu0 %v4273
    %v4275 = vpop.xlane.xlu0 %4274
    %vm4276 = vcmp.eq.s32.totalorder %v3930, 13
    %v4277 = vsel %vm4276, 1, 0
    %vm4278 = vcmp.eq.s32.totalorder %v4277, 1
    %v4279 = vsel %vm4278, %v4275, 0.0
    %v4280 = vadd.f32 %v4255, %v4279
    %s4281 = scalar_lea.vmem %s11, 22
    %v4282 = vld [vmem:[%s4281] ss:$8 sm:$0x3]
    %v4284 = vlaneseq
    %v4285 = vshrl.u32 %v4284, 7
    %v4286 = vsub.s32 0, %v4285
    %v4287 = vrot.slane %v4282, %v4286
    %v4288 = vlaneseq
    %v4289 = vshrl.u32 %v4288, 7
    %v4290 = vsub.s32 1, %v4289
    %v4291 = vrot.slane %v4282, %v4290
    %v4294 = vmul.f32 %v3901, %v4287
    %v4295 = vmul.f32 %v3902, %v4291
    %v4296 = vsel %vm3945, %v4294, 0.0
    %v4297 = vsel %vm3945, %v4295, 0.0
    %v4298 = vadd.f32 %v4296, %v4297
    %4299 = vadd.xlane.f32.xlu0 %v4298
    %v4300 = vpop.xlane.xlu0 %4299
    %vm4301 = vcmp.eq.s32.totalorder %v3930, 14
    %v4302 = vsel %vm4301, 1, 0
    %vm4303 = vcmp.eq.s32.totalorder %v4302, 1
    %v4304 = vsel %vm4303, %v4300, 0.0
    %v4305 = vadd.f32 %v4280, %v4304
    %s4306 = scalar_lea.vmem %s11, 23
    %v4307 = vld [vmem:[%s4306] ss:$8 sm:$0x3]
    %v4309 = vlaneseq
    %v4310 = vshrl.u32 %v4309, 7
    %v4311 = vsub.s32 0, %v4310
    %v4312 = vrot.slane %v4307, %v4311
    %v4313 = vlaneseq
    %v4314 = vshrl.u32 %v4313, 7
    %v4315 = vsub.s32 1, %v4314
    %v4316 = vrot.slane %v4307, %v4315
    %v4319 = vmul.f32 %v3903, %v4312
    %v4320 = vmul.f32 %v3904, %v4316
    %v4321 = vsel %vm3945, %v4319, 0.0
    %v4322 = vsel %vm3945, %v4320, 0.0
    %v4323 = vadd.f32 %v4321, %v4322
    %4324 = vadd.xlane.f32.xlu0 %v4323
    %v4325 = vpop.xlane.xlu0 %4324
    %vm4326 = vcmp.eq.s32.totalorder %v3930, 15
    %v4327 = vsel %vm4326, 1, 0
    %vm4328 = vcmp.eq.s32.totalorder %v4327, 1
    %v4329 = vsel %vm4328, %v4325, 0.0
    %v4330 = vadd.f32 %v4305, %v4329
    %s4331 = scalar_lea.vmem %s11, 32
    %v4332 = vld [vmem:[%s4331] ss:$8 sm:$0x3]
    %v4334 = vlaneseq
    %v4335 = vshrl.u32 %v4334, 7
    %v4336 = vsub.s32 0, %v4335
    %v4337 = vrot.slane %v4332, %v4336
    %v4338 = vlaneseq
    %v4339 = vshrl.u32 %v4338, 7
    %v4340 = vsub.s32 1, %v4339
    %v4341 = vrot.slane %v4332, %v4340
    %v4344 = vmul.f32 %v3905, %v4337
    %v4345 = vmul.f32 %v3906, %v4341
    %v4346 = vsel %vm3945, %v4344, 0.0
    %v4347 = vsel %vm3945, %v4345, 0.0
    %v4348 = vadd.f32 %v4346, %v4347
    %4349 = vadd.xlane.f32.xlu0 %v4348
    %v4350 = vpop.xlane.xlu0 %4349
    %vm4351 = vcmp.eq.s32.totalorder %v3930, 16
    %v4352 = vsel %vm4351, 1, 0
    %vm4353 = vcmp.eq.s32.totalorder %v4352, 1
    %v4354 = vsel %vm4353, %v4350, 0.0
    %v4355 = vadd.f32 %v4330, %v4354
    %s4356 = scalar_lea.vmem %s11, 33
    %v4357 = vld [vmem:[%s4356] ss:$8 sm:$0x3]
    %v4359 = vlaneseq
    %v4360 = vshrl.u32 %v4359, 7
    %v4361 = vsub.s32 0, %v4360
    %v4362 = vrot.slane %v4357, %v4361
    %v4363 = vlaneseq
    %v4364 = vshrl.u32 %v4363, 7
    %v4365 = vsub.s32 1, %v4364
    %v4366 = vrot.slane %v4357, %v4365
    %v4369 = vmul.f32 %v3907, %v4362
    %v4370 = vmul.f32 %v3908, %v4366
    %v4371 = vsel %vm3945, %v4369, 0.0
    %v4372 = vsel %vm3945, %v4370, 0.0
    %v4373 = vadd.f32 %v4371, %v4372
    %4374 = vadd.xlane.f32.xlu0 %v4373
    %v4375 = vpop.xlane.xlu0 %4374
    %vm4376 = vcmp.eq.s32.totalorder %v3930, 17
    %v4377 = vsel %vm4376, 1, 0
    %vm4378 = vcmp.eq.s32.totalorder %v4377, 1
    %v4379 = vsel %vm4378, %v4375, 0.0
    %v4380 = vadd.f32 %v4355, %v4379
    %s4381 = scalar_lea.vmem %s11, 34
    %v4382 = vld [vmem:[%s4381] ss:$8 sm:$0x3]
    %v4384 = vlaneseq
    %v4385 = vshrl.u32 %v4384, 7
    %v4386 = vsub.s32 0, %v4385
    %v4387 = vrot.slane %v4382, %v4386
    %v4388 = vlaneseq
    %v4389 = vshrl.u32 %v4388, 7
    %v4390 = vsub.s32 1, %v4389
    %v4391 = vrot.slane %v4382, %v4390
    %v4394 = vmul.f32 %v3909, %v4387
    %v4395 = vmul.f32 %v3910, %v4391
    %v4396 = vsel %vm3945, %v4394, 0.0
    %v4397 = vsel %vm3945, %v4395, 0.0
    %v4398 = vadd.f32 %v4396, %v4397
    %4399 = vadd.xlane.f32.xlu0 %v4398
    %v4400 = vpop.xlane.xlu0 %4399
    %vm4401 = vcmp.eq.s32.totalorder %v3930, 18
    %v4402 = vsel %vm4401, 1, 0
    %vm4403 = vcmp.eq.s32.totalorder %v4402, 1
    %v4404 = vsel %vm4403, %v4400, 0.0
    %v4405 = vadd.f32 %v4380, %v4404
    %s4406 = scalar_lea.vmem %s11, 35
    %v4407 = vld [vmem:[%s4406] ss:$8 sm:$0x3]
    %v4409 = vlaneseq
    %v4410 = vshrl.u32 %v4409, 7
    %v4411 = vsub.s32 0, %v4410
    %v4412 = vrot.slane %v4407, %v4411
    %v4413 = vlaneseq
    %v4414 = vshrl.u32 %v4413, 7
    %v4415 = vsub.s32 1, %v4414
    %v4416 = vrot.slane %v4407, %v4415
    %v4419 = vmul.f32 %v3911, %v4412
    %v4420 = vmul.f32 %v3912, %v4416
    %v4421 = vsel %vm3945, %v4419, 0.0
    %v4422 = vsel %vm3945, %v4420, 0.0
    %v4423 = vadd.f32 %v4421, %v4422
    %4424 = vadd.xlane.f32.xlu0 %v4423
    %v4425 = vpop.xlane.xlu0 %4424
    %vm4426 = vcmp.eq.s32.totalorder %v3930, 19
    %v4427 = vsel %vm4426, 1, 0
    %vm4428 = vcmp.eq.s32.totalorder %v4427, 1
    %v4429 = vsel %vm4428, %v4425, 0.0
    %v4430 = vadd.f32 %v4405, %v4429
    %s4431 = scalar_lea.vmem %s11, 36
    %v4432 = vld [vmem:[%s4431] ss:$8 sm:$0x3]
    %v4434 = vlaneseq
    %v4435 = vshrl.u32 %v4434, 7
    %v4436 = vsub.s32 0, %v4435
    %v4437 = vrot.slane %v4432, %v4436
    %v4438 = vlaneseq
    %v4439 = vshrl.u32 %v4438, 7
    %v4440 = vsub.s32 1, %v4439
    %v4441 = vrot.slane %v4432, %v4440
    %v4444 = vmul.f32 %v3913, %v4437
    %v4445 = vmul.f32 %v3914, %v4441
    %v4446 = vsel %vm3945, %v4444, 0.0
    %v4447 = vsel %vm3945, %v4445, 0.0
    %v4448 = vadd.f32 %v4446, %v4447
    %4449 = vadd.xlane.f32.xlu0 %v4448
    %v4450 = vpop.xlane.xlu0 %4449
    %vm4451 = vcmp.eq.s32.totalorder %v3930, 20
    %v4452 = vsel %vm4451, 1, 0
    %vm4453 = vcmp.eq.s32.totalorder %v4452, 1
    %v4454 = vsel %vm4453, %v4450, 0.0
    %v4455 = vadd.f32 %v4430, %v4454
    %s4456 = scalar_lea.vmem %s11, 37
    %v4457 = vld [vmem:[%s4456] ss:$8 sm:$0x3]
    %v4459 = vlaneseq
    %v4460 = vshrl.u32 %v4459, 7
    %v4461 = vsub.s32 0, %v4460
    %v4462 = vrot.slane %v4457, %v4461
    %v4463 = vlaneseq
    %v4464 = vshrl.u32 %v4463, 7
    %v4465 = vsub.s32 1, %v4464
    %v4466 = vrot.slane %v4457, %v4465
    %v4469 = vmul.f32 %v3915, %v4462
    %v4470 = vmul.f32 %v3916, %v4466
    %v4471 = vsel %vm3945, %v4469, 0.0
    %v4472 = vsel %vm3945, %v4470, 0.0
    %v4473 = vadd.f32 %v4471, %v4472
    %4474 = vadd.xlane.f32.xlu0 %v4473
    %v4475 = vpop.xlane.xlu0 %4474
    %vm4476 = vcmp.eq.s32.totalorder %v3930, 21
    %v4477 = vsel %vm4476, 1, 0
    %vm4478 = vcmp.eq.s32.totalorder %v4477, 1
    %v4479 = vsel %vm4478, %v4475, 0.0
    %v4480 = vadd.f32 %v4455, %v4479
    %s4481 = scalar_lea.vmem %s11, 38
    %v4482 = vld [vmem:[%s4481] ss:$8 sm:$0x3]
    %v4484 = vlaneseq
    %v4485 = vshrl.u32 %v4484, 7
    %v4486 = vsub.s32 0, %v4485
    %v4487 = vrot.slane %v4482, %v4486
    %v4488 = vlaneseq
    %v4489 = vshrl.u32 %v4488, 7
    %v4490 = vsub.s32 1, %v4489
    %v4491 = vrot.slane %v4482, %v4490
    %v4494 = vmul.f32 %v3917, %v4487
    %v4495 = vmul.f32 %v3918, %v4491
    %v4496 = vsel %vm3945, %v4494, 0.0
    %v4497 = vsel %vm3945, %v4495, 0.0
    %v4498 = vadd.f32 %v4496, %v4497
    %4499 = vadd.xlane.f32.xlu0 %v4498
    %v4500 = vpop.xlane.xlu0 %4499
    %vm4501 = vcmp.eq.s32.totalorder %v3930, 22
    %v4502 = vsel %vm4501, 1, 0
    %vm4503 = vcmp.eq.s32.totalorder %v4502, 1
    %v4504 = vsel %vm4503, %v4500, 0.0
    %v4505 = vadd.f32 %v4480, %v4504
    %s4506 = scalar_lea.vmem %s11, 39
    %v4507 = vld [vmem:[%s4506] ss:$8 sm:$0x3]
    %v4509 = vlaneseq
    %v4510 = vshrl.u32 %v4509, 7
    %v4511 = vsub.s32 0, %v4510
    %v4512 = vrot.slane %v4507, %v4511
    %v4513 = vlaneseq
    %v4514 = vshrl.u32 %v4513, 7
    %v4515 = vsub.s32 1, %v4514
    %v4516 = vrot.slane %v4507, %v4515
    %v4519 = vmul.f32 %v3919, %v4512
    %v4520 = vmul.f32 %v3920, %v4516
    %v4521 = vsel %vm3945, %v4519, 0.0
    %v4522 = vsel %vm3945, %v4520, 0.0
    %v4523 = vadd.f32 %v4521, %v4522
    %4524 = vadd.xlane.f32.xlu0 %v4523
    %v4525 = vpop.xlane.xlu0 %4524
    %vm4526 = vcmp.eq.s32.totalorder %v3930, 23
    %v4527 = vsel %vm4526, 1, 0
    %vm4528 = vcmp.eq.s32.totalorder %v4527, 1
    %v4529 = vsel %vm4528, %v4525, 0.0
    %v4530 = vadd.f32 %v4505, %v4529
    %s4531 = scalar_lea.vmem %s11, 48
    %v4532 = vld [vmem:[%s4531] ss:$8 sm:$0x3]
    %v4534 = vlaneseq
    %v4535 = vshrl.u32 %v4534, 7
    %v4536 = vsub.s32 0, %v4535
    %v4537 = vrot.slane %v4532, %v4536
    %v4538 = vlaneseq
    %v4539 = vshrl.u32 %v4538, 7
    %v4540 = vsub.s32 1, %v4539
    %v4541 = vrot.slane %v4532, %v4540
    %v4544 = vmul.f32 %v3921, %v4537
    %v4545 = vmul.f32 %v3922, %v4541
    %v4546 = vsel %vm3945, %v4544, 0.0
    %v4547 = vsel %vm3945, %v4545, 0.0
    %v4548 = vadd.f32 %v4546, %v4547
    %4549 = vadd.xlane.f32.xlu0 %v4548
    %v4550 = vpop.xlane.xlu0 %4549
    %vm4551 = vcmp.eq.s32.totalorder %v3930, 24
    %v4552 = vsel %vm4551, 1, 0
    %vm4553 = vcmp.eq.s32.totalorder %v4552, 1
    %v4554 = vsel %vm4553, %v4550, 0.0
    %v4555 = vadd.f32 %v4530, %v4554
    %s4556 = scalar_lea.vmem %s11, 49
    %v4557 = vld [vmem:[%s4556] ss:$8 sm:$0x3]
    %v4559 = vlaneseq
    %v4560 = vshrl.u32 %v4559, 7
    %v4561 = vsub.s32 0, %v4560
    %v4562 = vrot.slane %v4557, %v4561
    %v4563 = vlaneseq
    %v4564 = vshrl.u32 %v4563, 7
    %v4565 = vsub.s32 1, %v4564
    %v4566 = vrot.slane %v4557, %v4565
    %v4569 = vmul.f32 %v3923, %v4562
    %v4570 = vmul.f32 %v3924, %v4566
    %v4571 = vsel %vm3945, %v4569, 0.0
    %v4572 = vsel %vm3945, %v4570, 0.0
    %v4573 = vadd.f32 %v4571, %v4572
    %4574 = vadd.xlane.f32.xlu0 %v4573
    %v4575 = vpop.xlane.xlu0 %4574
    %vm4576 = vcmp.eq.s32.totalorder %v3930, 25
    %v4577 = vsel %vm4576, 1, 0
    %vm4578 = vcmp.eq.s32.totalorder %v4577, 1
    %v4579 = vsel %vm4578, %v4575, 0.0
    %v4580 = vadd.f32 %v4555, %v4579
    %s4581 = scalar_lea.vmem %s11, 50
    %v4582 = vld [vmem:[%s4581] ss:$8 sm:$0x3]
    %v4584 = vlaneseq
    %v4585 = vshrl.u32 %v4584, 7
    %v4586 = vsub.s32 0, %v4585
    %v4587 = vrot.slane %v4582, %v4586
    %v4588 = vlaneseq
    %v4589 = vshrl.u32 %v4588, 7
    %v4590 = vsub.s32 1, %v4589
    %v4591 = vrot.slane %v4582, %v4590
    %v4594 = vmul.f32 %v3925, %v4587
    %v4595 = vmul.f32 %v3926, %v4591
    %v4596 = vsel %vm3945, %v4594, 0.0
    %v4597 = vsel %vm3945, %v4595, 0.0
    %v4598 = vadd.f32 %v4596, %v4597
    %4599 = vadd.xlane.f32.xlu0 %v4598
    %v4600 = vpop.xlane.xlu0 %4599
    %vm4601 = vcmp.eq.s32.totalorder %v3930, 26
    %v4602 = vsel %vm4601, 1, 0
    %vm4603 = vcmp.eq.s32.totalorder %v4602, 1
    %v4604 = vsel %vm4603, %v4600, 0.0
    %v4605 = vadd.f32 %v4580, %v4604
    %s4606 = scalar_lea.vmem %s11, 51
    %v4607 = vld [vmem:[%s4606] ss:$8 sm:$0x3]
    %v4609 = vlaneseq
    %v4610 = vshrl.u32 %v4609, 7
    %v4611 = vsub.s32 0, %v4610
    %v4612 = vrot.slane %v4607, %v4611
    %v4613 = vlaneseq
    %v4614 = vshrl.u32 %v4613, 7
    %v4615 = vsub.s32 1, %v4614
    %v4616 = vrot.slane %v4607, %v4615
    %v4619 = vmul.f32 %v3927, %v4612
    %v4620 = vmul.f32 %v3928, %v4616
    %v4621 = vsel %vm3945, %v4619, 0.0
    %v4622 = vsel %vm3945, %v4620, 0.0
    %v4623 = vadd.f32 %v4621, %v4622
    %4624 = vadd.xlane.f32.xlu0 %v4623
    %v4625 = vpop.xlane.xlu0 %4624
    %vm4626 = vcmp.eq.s32.totalorder %v3930, 27
    %v4627 = vsel %vm4626, 1, 0
    %vm4628 = vcmp.eq.s32.totalorder %v4627, 1
    %v4629 = vsel %vm4628, %v4625, 0.0
    %v4630 = vadd.f32 %v4605, %v4629
    %v4631 = vld [vmem:[%s12] sm:$0x1]
    %v4633 = vlaneseq
    %v4634 = vshrl.u32 %v4633, 7
    %v4635 = vsub.s32 0, %v4634
    %v4636 = vrot.slane %v4631, %v4635
    %v4638 = vadd.f32 %v4630, %v4636
    %v4639 = vand.u32 2147483647, %v4638
    %vm4640 = vcmp.lt.f32.partialorder %v4639, inf
    %v4641 = vsel %vm4640, 1.0, nan
    %v4642 = vmul.f32 %v257, %v4641
    %v4643 = vld [vmem:[%s13] sm:$0xf]
    %v4644 = vld [vmem:[%s13 + $0x4] sm:$0xf]
    %v4645 = vld [vmem:[%s13 + $0x8] sm:$0xf]
    %v4646 = vld [vmem:[%s13 + $0xc] sm:$0xf]
    %v4647 = vld [vmem:[%s13 + $0x10] sm:$0xf]
    %v4648 = vld [vmem:[%s13 + $0x14] sm:$0xf]
    %v4649 = vld [vmem:[%s13 + $0x18] sm:$0xf]
    %v4650 = vld [vmem:[%s13 + $0x1c] sm:$0xf]
    %v4659 = vunpack.c.l.b16 %v4643
    %v4660 = vunpack.c.l.b16 %v4644
    %v4661 = vunpack.c.l.b16 %v4645
    %v4662 = vunpack.c.l.b16 %v4646
    %v4663 = vunpack.c.l.b16 %v4647
    %v4664 = vunpack.c.l.b16 %v4648
    %v4665 = vunpack.c.l.b16 %v4649
    %v4666 = vunpack.c.l.b16 %v4650
    %v4667 = vpack.c.b16 %v4660, %v4659
    %v4668 = vpack.c.b16 %v4662, %v4661
    %v4669 = vpack.c.b16 %v4664, %v4663
    %v4670 = vpack.c.b16 %v4666, %v4665
    %4675 = vmatprep.subr.bf16.mxu0 0
    %4676 = vmatpush1.bf16.msra.mxu0 %v4667
    %4677 = vmatprep.subr.bf16.mxu0 0
    %4678 = vmatpush1.bf16.msra.mxu0 %v4668
    %4679 = vmatprep.subr.bf16.mxu0 0
    %4680 = vmatpush1.bf16.msra.mxu0 %v4669
    %4681 = vmatprep.subr.bf16.mxu0 0
    %4682 = vmatpush1.bf16.msra.mxu0 %v4670
    %4683 = vmatprep.subr.bf16.mxu0 0
    %4684 = vmatpush1.bf16.msra.mxu0 0
    %4685 = vmatprep.subr.bf16.mxu0 0
    %4686 = vmatpush1.bf16.msra.mxu0 0
    %4687 = vmatprep.subr.bf16.mxu0 0
    %4688 = vmatpush1.bf16.msra.mxu0 0
    %4689 = vmatprep.subr.bf16.mxu0 0
    %4690 = vmatpush1.bf16.msra.mxu0 0
    %4691 = vmatprep.subr.bf16.mxu0 0
    %4692 = vmatpush1.bf16.msra.mxu0 0
    %4693 = vmatprep.subr.bf16.mxu0 0
    %4694 = vmatpush1.bf16.msra.mxu0 0
    %4695 = vmatprep.subr.bf16.mxu0 0
    %4696 = vmatpush1.bf16.msra.mxu0 0
    %4697 = vmatprep.subr.bf16.mxu0 0
    %4698 = vmatpush1.bf16.msra.mxu0 0
    %4699 = vmatprep.subr.bf16.mxu0 0
    %4700 = vmatpush1.bf16.msra.mxu0 0
    %4701 = vmatprep.subr.bf16.mxu0 0
    %4702 = vmatpush1.bf16.msra.mxu0 0
    %4703 = vmatprep.subr.bf16.mxu0 0
    %4704 = vmatpush1.bf16.msra.mxu0 0
    %4705 = vmatprep.subr.bf16.mxu0 0
    %4706 = vmatpush1.bf16.msra.mxu0 0
    %4707 = vmatprep.mubr.bf16.mxu0 0
    %4708 = vmatmul.mubr.bf16.gmra.mrb[0].mxu0 %v1960
    %v4709 = vpop.f32.mrb[0].mxu0
    %v4710 = vadd.f32 0.0, %v4709
    %v4711 = vpop.f32.mrb[0].mxu0
    %v4712 = vpop.f32.mrb[0].mxu0
    %v4713 = vpop.f32.mrb[0].mxu0
    %4714 = vdwg.mxu0
    %v4715 = vmul.f32 %v4642, %v4710
    %v4716 = vld [vmem:[%s14] sm:$0x1]
    %v4718 = vlaneseq
    %v4719 = vshrl.u32 %v4718, 7
    %v4720 = vsub.s32 0, %v4719
    %v4721 = vrot.slane %v4716, %v4720
    %v4723 = vadd.f32 %v4715, %v4721
    %v4724 = vxor.u32 %v4723, 2147483648
    %v4725 = vmul.f32 %v4724, 1.442695
    %v4726 = vpow.pop %v4725
    %v4727 = vadd.f32 %v4726, 1.0
    %v4728 = vrcp.pop %v4727
    %v4729 = vmul.f32 1.0, %v4728
    %v4730 = vld [vmem:[%s15] sm:$0xff]
    %v4731 = vld [vmem:[%s15 + $0x8] sm:$0xff]
    %v4732 = vld [vmem:[%s15 + $0x10] sm:$0xff]
    %v4733 = vld [vmem:[%s15 + $0x18] sm:$0xf]
    %v4734 = vld [vmem:[%s16] sm:$0x1]
    %v4736 = vlaneseq
    %v4737 = vshrl.u32 %v4736, 7
    %v4738 = vsub.s32 0, %v4737
    %v4739 = vrot.slane %v4734, %v4738
    %vm4741 = vcmask 228352
    %v4743 = vsel %vm4741, %v4729, 0
    %vm4745 = vcmask 1043456
    %v4747 = vsel %vm4745, %v4733, 0
    %4749 = vmatprep.subr.mxu0 0.0
    %4750 = vmatpush1.msra.mxu0 %v4730
    %4751 = vmatprep.subr.mxu0 0.0
    %4752 = vmatpush1.msra.mxu0 %v4731
    %4753 = vmatprep.subr.mxu0 0.0
    %4754 = vmatpush1.msra.mxu0 %v4732
    %4755 = vmatprep.subr.mxu0 0.0
    %4756 = vmatpush1.msra.mxu0 %v4747
    %4757 = vmatprep.subr.mxu0 0.0
    %4758 = vmatpush1.msra.mxu0 0.0
    %4759 = vmatprep.subr.mxu0 0.0
    %4760 = vmatpush1.msra.mxu0 0.0
    %4761 = vmatprep.subr.mxu0 0.0
    %4762 = vmatpush1.msra.mxu0 0.0
    %4763 = vmatprep.subr.mxu0 0.0
    %4764 = vmatpush1.msra.mxu0 0.0
    %4765 = vmatprep.subr.mxu0 0.0
    %4766 = vmatpush1.msra.mxu0 0.0
    %4767 = vmatprep.subr.mxu0 0.0
    %4768 = vmatpush1.msra.mxu0 0.0
    %4769 = vmatprep.subr.mxu0 0.0
    %4770 = vmatpush1.msra.mxu0 0.0
    %4771 = vmatprep.subr.mxu0 0.0
    %4772 = vmatpush1.msra.mxu0 0.0
    %4773 = vmatprep.subr.mxu0 0.0
    %4774 = vmatpush1.msra.mxu0 0.0
    %4775 = vmatprep.subr.mxu0 0.0
    %4776 = vmatpush1.msra.mxu0 0.0
    %4777 = vmatprep.subr.mxu0 0.0
    %4778 = vmatpush1.msra.mxu0 0.0
    %4779 = vmatprep.subr.mxu0 0.0
    %4780 = vmatpush1.msra.mxu0 0.0
    %4781 = vmatprep.subr.mxu0 0.0
    %4782 = vmatpush1.msra.mxu0 0.0
    %4783 = vmatprep.subr.mxu0 0.0
    %4784 = vmatpush1.msra.mxu0 0.0
    %4785 = vmatprep.subr.mxu0 0.0
    %4786 = vmatpush1.msra.mxu0 0.0
    %4787 = vmatprep.subr.mxu0 0.0
    %4788 = vmatpush1.msra.mxu0 0.0
    %4789 = vmatprep.subr.mxu0 0.0
    %4790 = vmatpush1.msra.mxu0 0.0
    %4791 = vmatprep.subr.mxu0 0.0
    %4792 = vmatpush1.msra.mxu0 0.0
    %4793 = vmatprep.subr.mxu0 0.0
    %4794 = vmatpush1.msra.mxu0 0.0
    %4795 = vmatprep.subr.mxu0 0.0
    %4796 = vmatpush1.msra.mxu0 0.0
    %4797 = vmatprep.subr.mxu0 0.0
    %4798 = vmatpush1.msra.mxu0 0.0
    %4799 = vmatprep.subr.mxu0 0.0
    %4800 = vmatpush1.msra.mxu0 0.0
    %4801 = vmatprep.subr.mxu0 0.0
    %4802 = vmatpush1.msra.mxu0 0.0
    %4803 = vmatprep.subr.mxu0 0.0
    %4804 = vmatpush1.msra.mxu0 0.0
    %4805 = vmatprep.subr.mxu0 0.0
    %4806 = vmatpush1.msra.mxu0 0.0
    %4807 = vmatprep.subr.mxu0 0.0
    %4808 = vmatpush1.msra.mxu0 0.0
    %4809 = vmatprep.subr.mxu0 0.0
    %4810 = vmatpush1.msra.mxu0 0.0
    %4811 = vmatprep.subr.mxu0 0.0
    %4812 = vmatpush1.msra.mxu0 0.0
    %4813 = vmatprep.mubr.f32.mxu0 0.0
    %4814 = vmatmul.mubr.f32.gmra.mrb[0].mxu0 %v4743
    %v4815 = vpop.f32.mrb[0].mxu0
    %v4816 = vadd.f32 %v4739, %v4815
    %v4817 = vpop.f32.mrb[0].mxu0
    %4818 = vdwg.mxu0
    %v4819 = vld [vmem:[%s17] sm:$0xff]
    %v4820 = vld [vmem:[%s17 + $0x8] sm:$0xff]
    %v4821 = vld [vmem:[%s17 + $0x10] sm:$0xff]
    %v4822 = vld [vmem:[%s17 + $0x18] sm:$0xf]
    %v4823 = vld [vmem:[%s18] sm:$0x1]
    %v4825 = vlaneseq
    %v4826 = vshrl.u32 %v4825, 7
    %v4827 = vsub.s32 0, %v4826
    %v4828 = vrot.slane %v4823, %v4827
    %v4831 = vsel %vm4741, %v4816, 0
    %v4834 = vsel %vm4745, %v4822, 0
    %4836 = vmatprep.subr.mxu0 0.0
    %4837 = vmatpush1.msra.mxu0 %v4819
    %4838 = vmatprep.subr.mxu0 0.0
    %4839 = vmatpush1.msra.mxu0 %v4820
    %4840 = vmatprep.subr.mxu0 0.0
    %4841 = vmatpush1.msra.mxu0 %v4821
    %4842 = vmatprep.subr.mxu0 0.0
    %4843 = vmatpush1.msra.mxu0 %v4834
    %4844 = vmatprep.subr.mxu0 0.0
    %4845 = vmatpush1.msra.mxu0 0.0
    %4846 = vmatprep.subr.mxu0 0.0
    %4847 = vmatpush1.msra.mxu0 0.0
    %4848 = vmatprep.subr.mxu0 0.0
    %4849 = vmatpush1.msra.mxu0 0.0
    %4850 = vmatprep.subr.mxu0 0.0
    %4851 = vmatpush1.msra.mxu0 0.0
    %4852 = vmatprep.subr.mxu0 0.0
    %4853 = vmatpush1.msra.mxu0 0.0
    %4854 = vmatprep.subr.mxu0 0.0
    %4855 = vmatpush1.msra.mxu0 0.0
    %4856 = vmatprep.subr.mxu0 0.0
    %4857 = vmatpush1.msra.mxu0 0.0
    %4858 = vmatprep.subr.mxu0 0.0
    %4859 = vmatpush1.msra.mxu0 0.0
    %4860 = vmatprep.subr.mxu0 0.0
    %4861 = vmatpush1.msra.mxu0 0.0
    %4862 = vmatprep.subr.mxu0 0.0
    %4863 = vmatpush1.msra.mxu0 0.0
    %4864 = vmatprep.subr.mxu0 0.0
    %4865 = vmatpush1.msra.mxu0 0.0
    %4866 = vmatprep.subr.mxu0 0.0
    %4867 = vmatpush1.msra.mxu0 0.0
    %4868 = vmatprep.subr.mxu0 0.0
    %4869 = vmatpush1.msra.mxu0 0.0
    %4870 = vmatprep.subr.mxu0 0.0
    %4871 = vmatpush1.msra.mxu0 0.0
    %4872 = vmatprep.subr.mxu0 0.0
    %4873 = vmatpush1.msra.mxu0 0.0
    %4874 = vmatprep.subr.mxu0 0.0
    %4875 = vmatpush1.msra.mxu0 0.0
    %4876 = vmatprep.subr.mxu0 0.0
    %4877 = vmatpush1.msra.mxu0 0.0
    %4878 = vmatprep.subr.mxu0 0.0
    %4879 = vmatpush1.msra.mxu0 0.0
    %4880 = vmatprep.subr.mxu0 0.0
    %4881 = vmatpush1.msra.mxu0 0.0
    %4882 = vmatprep.subr.mxu0 0.0
    %4883 = vmatpush1.msra.mxu0 0.0
    %4884 = vmatprep.subr.mxu0 0.0
    %4885 = vmatpush1.msra.mxu0 0.0
    %4886 = vmatprep.subr.mxu0 0.0
    %4887 = vmatpush1.msra.mxu0 0.0
    %4888 = vmatprep.subr.mxu0 0.0
    %4889 = vmatpush1.msra.mxu0 0.0
    %4890 = vmatprep.subr.mxu0 0.0
    %4891 = vmatpush1.msra.mxu0 0.0
    %4892 = vmatprep.subr.mxu0 0.0
    %4893 = vmatpush1.msra.mxu0 0.0
    %4894 = vmatprep.subr.mxu0 0.0
    %4895 = vmatpush1.msra.mxu0 0.0
    %4896 = vmatprep.subr.mxu0 0.0
    %4897 = vmatpush1.msra.mxu0 0.0
    %4898 = vmatprep.subr.mxu0 0.0
    %4899 = vmatpush1.msra.mxu0 0.0
    %4900 = vmatprep.mubr.f32.mxu0 0.0
    %4901 = vmatmul.mubr.f32.gmra.mrb[0].mxu0 %v4831
    %v4902 = vpop.f32.mrb[0].mxu0
    %v4903 = vadd.f32 %v4828, %v4902
    %v4904 = vpop.f32.mrb[0].mxu0
    %4905 = vdwg.mxu0
    %v4906 = vld [vmem:[%s2] sm:$0x3]
    %4908 = vset.pattern.permute.xlu0 0
    %4909 = vperm.xlu0 %4908, %v4906
    %v4910 = vpop.permute.xlu0 %4909
    %v4912 = vadd.f32 %v4903, %v4910
    %v4913 = vld [vmem:[%s3] sm:$0x3]
    %4915 = vset.pattern.permute.xlu0 0
    %4916 = vperm.xlu0 %4915, %v4913
    %v4917 = vpop.permute.xlu0 %4916
    %v4919 = vadd.f32 %v4912, %v4917
    %4921 = vrot.lane.b32.xlu0 %v4641, 28
    %v4922 = vpop.permute.xlu0 %4921
    %v4924 = vsel %vm4741, %v4919, %v4922
    %vm4925 = vcmask 457728
    %v4926 = vsel %vm4925, %v4924, 0.0
    %4927 = vst [vmem:[#allocation5] sm:$0x3] %v4926
    // Predicated region
    $region82: #{tpu_custom_call.1} parent=1 // pred_check
      _
    $region83: #{tpu_custom_call.1} parent=1 // pred_check_branch
      %4929 = sbr.rel (0) target = $region85
    $region84: #{tpu_custom_call.1} parent=1 // pred_region
      %s4931 = ssub.s32 32, 32
      %4932 = vsyncadd [#allocation4], %s4931
      %s4934 = sshll.u32 [#allocation5], 4
      %s4935 = int_to_ptr.vmem [resolvable:$true] %s4934
      %4937 = dma.vmem_to_hbm [thread:$0]  %s4935, 32, %s19, [#allocation4]
    $region85: #{tpu_custom_call.1} parent=1 // pred_fallthru
      _
    // Predicated region
    $region86: #{tpu_custom_call.1} parent=1 // pred_check
      _
    $region87: #{tpu_custom_call.1} parent=1 // pred_check_branch
      %4939 = sbr.rel (0) target = $region89
    $region88: #{tpu_custom_call.1} parent=1 // pred_region
      %4940 = dma.done [#allocation4], 32
    $region89: #{tpu_custom_call.1} parent=1 // pred_fallthru
      _
    %4941 = vsyncpa [#allocation3], 1
    %4942 = vsyncpa [#allocation4], 1

</llo_original>
